<compile_context>
chip_gen: v7x
topology: tpu7x:2x2x1
jax: 0.10.0
libtpu: 0.0.40
codegen_flags: <defaults>
</compile_context>

<pallas_src>
import jax
import jax.numpy as jnp
from jax import lax
from jax.experimental import pallas as pl
from jax.experimental.pallas import tpu as pltpu

_BN_EPS = 1e-5
_LEAD = 8          # zero rows above the first image (top halo, sublane aligned)


def _fold_bn(gamma, beta, mean, var):
    scale = gamma / jnp.sqrt(var + _BN_EPS)
    bias = beta - mean * scale
    return scale, bias


def _toeplitz_conv_weights(w_hwio, width):
    """(3,3,C,C) HWIO conv weights -> (3, W*C, W*C) block-tridiagonal matrices.

    B[ky, w_in*C + ci, w_out*C + co] = w_hwio[ky, w_in - w_out + 1, ci, co]
    when |w_in - w_out| <= 1, else 0.  A stride-1 SAME 3x3 conv on a lane-dense
    (rows, W*C) activation then becomes   out = sum_ky xpad[ky:ky+M, :] @ B[ky].
    """
    c = w_hwio.shape[2]
    w_in = jnp.arange(width)[:, None]
    w_out = jnp.arange(width)[None, :]
    kx = w_in - w_out + 1                                   # (W, W)
    valid = (kx >= 0) & (kx <= 2)
    blocks = w_hwio[:, jnp.clip(kx, 0, 2)]                  # (3, W, W, C, C)
    blocks = jnp.where(valid[None, :, :, None, None], blocks, 0.0)
    # (ky, w_in, w_out, ci, co) -> (ky, w_in, ci, w_out, co) -> (3, W*C, W*C)
    return jnp.transpose(blocks, (0, 1, 3, 2, 4)).reshape(3, width * c, width * c)


def prepare_basic_block(params, width):
    """Fold BN into the conv weights ONCE (hoisted out of the per-call path)."""
    c = params["w1"].shape[2]
    wc = width * c
    s1, t1 = _fold_bn(*params["bn1"])
    s2, t2 = _fold_bn(*params["bn2"])
    s1 = jnp.tile(s1, width)                                 # s[co] at col w*C+co
    s2 = jnp.tile(s2, width)
    # BN scale folded into Toeplitz columns, then stream the weights as bf16
    # (halves the dominant HBM transfer; single-pass bf16 MXU on v6e/v7x).
    b1 = (_toeplitz_conv_weights(params["w1"], width)
          * s1[None, None, :]).astype(jnp.bfloat16)
    b2 = (_toeplitz_conv_weights(params["w2"], width)
          * s2[None, None, :]).astype(jnp.bfloat16)
    t1 = jnp.tile(t1, width).reshape(1, wc).astype(jnp.float32)
    t2 = jnp.tile(t2, width).reshape(1, wc).astype(jnp.float32)
    return {"b1": b1, "b2": b2, "t1": t1, "t2": t2}


def _make_kernel(nb, H, WC, pitch, m_rows):
    def kernel(x_ref, b1_ref, b2_ref, t1_ref, t2_ref, out_ref, slab_ref):
        # Zero the slab so all halo / separator rows are zero (cheap memset;
        # must be unconditional: scratch is per-core, grid may be core-sharded).
        slab_ref[...] = jnp.zeros_like(slab_ref)
        for n in range(nb):                       # aligned (multiple-of-8) stores
            slab_ref[pl.ds(_LEAD + n * pitch, H), :] = x_ref[n]

        def conv3x3(b_ref):
            acc = jnp.zeros((m_rows, WC), jnp.float32)
            for ky in range(3):                   # 3 MXU matmuls, K = W*C
                # ky-shifted windows are plain VMEM ref loads (load unit has
                # slack) instead of concatenate + value-slice relayouts.
                win = slab_ref[pl.ds(_LEAD - 1 + ky, m_rows), :]
                acc = acc + jnp.dot(win.astype(jnp.bfloat16), b_ref[ky],
                                    preferred_element_type=jnp.float32)
            return acc

        # conv1 (+ folded bn1 scale) -> bias -> relu     (stays in VMEM/regs)
        mid = jnp.maximum(conv3x3(b1_ref) + t1_ref[...], 0.0)
        # write valid rows of mid back into the slab; halo rows stay zero
        for n in range(nb):
            slab_ref[pl.ds(_LEAD + n * pitch, H), :] = mid[n * pitch:n * pitch + H]

        # conv2 (+ folded bn2 scale) -> bias -> +residual -> relu
        acc2 = conv3x3(b2_ref)
        for n in range(nb):
            res = acc2[n * pitch:n * pitch + H] + t2_ref[...] + x_ref[n]
            out_ref[n] = jnp.maximum(res, 0.0).astype(out_ref.dtype)

    return kernel


def basic_block_apply(x_nchw, folded, *, images_per_step=8):
    N, C, H, W = x_nchw.shape
    WC = W * C
    # NCHW -> NHWC -> lane-dense (N, H, W*C); the reshape is contiguous (free).
    x = jnp.transpose(x_nchw, (0, 2, 3, 1)).reshape(N, H, WC)

    nb = min(N, images_per_step)                  # images folded into one matmul M
    pad = (-N) % nb
    if pad:
        x = jnp.concatenate([x, jnp.zeros((pad, H, WC), x.dtype)], axis=0)
    n_total = x.shape[0]

    pitch = -(-(H + 2) // 8) * 8                  # per-image row pitch (8-aligned)
    m_rows = -(-((nb - 1) * pitch + H) // 8) * 8  # matmul M (covers all images)
    slab_rows = _LEAD + nb * pitch + 8            # zero halos + images + tail pad

    # VMEM budget from buffer arithmetic (weights counted double-buffered for
    # safety even though Buffered(1) is requested) + headroom for compiler scratch.
    vmem_limit = int(2 * 2 * 3 * WC * WC * 2          # B1+B2 bf16, x2 buffers
                     + 2 * 2 * nb * H * WC * 4        # in/out blocks, double-buffered
                     + 2 * 2 * WC * 4                 # bn bias vectors
                     + slab_rows * WC * 4             # slab scratch
                     + 6 * 1024 * 1024)               # spill / scheduling headroom

    out = pl.pallas_call(
        _make_kernel(nb, H, WC, pitch, m_rows),
        out_shape=jax.ShapeDtypeStruct((n_total, H, WC), x.dtype),
        grid=(n_total // nb,),
        in_specs=[
            pl.BlockSpec((nb, H, WC), lambda g: (g, 0, 0)),
            # constant index_map -> single-buffer the big weight blocks
            pl.BlockSpec((3, WC, WC), lambda g: (0, 0, 0),
                         pipeline_mode=pl.Buffered(1)),
            pl.BlockSpec((3, WC, WC), lambda g: (0, 0, 0),
                         pipeline_mode=pl.Buffered(1)),
            pl.BlockSpec((1, WC), lambda g: (0, 0)),
            pl.BlockSpec((1, WC), lambda g: (0, 0)),
        ],
        out_specs=pl.BlockSpec((nb, H, WC), lambda g: (g, 0, 0)),
        scratch_shapes=[pltpu.VMEM((slab_rows, WC), jnp.float32)],
        compiler_params=pltpu.CompilerParams(
            dimension_semantics=("parallel",),     # batch groups across TCs at larger N
            vmem_limit_bytes=vmem_limit),
    )(x, folded["b1"], folded["b2"], folded["t1"], folded["t2"])

    out = out[:N]
    return jnp.transpose(out.reshape(N, H, W, C), (0, 3, 1, 2))  # NHWC -> NCHW


def basic_block_forward(x_nchw, params):
    """Pallas implementation of BasicBlock.forward (NCHW in / NCHW out)."""
    folded = prepare_basic_block(params, x_nchw.shape[3])
    return basic_block_apply(x_nchw, folded)


# ---------------- pure-JAX reference (for correctness check) ----------------
def _ref_conv3x3(x_nhwc, w_hwio):
    return lax.conv_general_dilated(
        x_nhwc, w_hwio, window_strides=(1, 1), padding="SAME",
        dimension_numbers=("NHWC", "HWIO", "NHWC"))


def _ref_basic_block(x_nchw, p):
    def bn(x, g, b, m, v):
        return (x - m) / jnp.sqrt(v + _BN_EPS) * g + b
    x = jnp.transpose(x_nchw, (0, 2, 3, 1))
    out = jnp.maximum(bn(_ref_conv3x3(x, p["w1"]), *p["bn1"]), 0.0)
    out = bn(_ref_conv3x3(out, p["w2"]), *p["bn2"]) + x
    out = jnp.maximum(out, 0.0)
    return jnp.transpose(out, (0, 3, 1, 2))


if __name__ == "__main__":
    planes, N, H, W = 32, 2, 16, 16
    key = jax.random.PRNGKey(0)
    k = jax.random.split(key, 11)

    params = {
        # conv weights synthesized directly in HWIO (PyTorch stores OIHW).
        "w1": jax.random.normal(k[0], (3, 3, planes, planes), jnp.float32) * 0.05,
        "w2": jax.random.normal(k[1], (3, 3, planes, planes), jnp.float32) * 0.05,
        "bn1": (1.0 + 0.1 * jax.random.normal(k[2], (planes,), jnp.float32),   # gamma
                0.1 * jax.random.normal(k[3], (planes,), jnp.float32),         # beta
                0.1 * jax.random.normal(k[4], (planes,), jnp.float32),         # running_mean
                1.0 + 0.5 * jax.random.uniform(k[5], (planes,), jnp.float32)), # running_var
        "bn2": (1.0 + 0.1 * jax.random.normal(k[6], (planes,), jnp.float32),
                0.1 * jax.random.normal(k[7], (planes,), jnp.float32),
                0.1 * jax.random.normal(k[8], (planes,), jnp.float32),
                1.0 + 0.5 * jax.random.uniform(k[9], (planes,), jnp.float32)),
    }
    x = jax.random.normal(k[10], (N, planes, H, W), jnp.float32)

    out = jax.block_until_ready(basic_block_forward(x, params))
    ref = jax.block_until_ready(_ref_basic_block(x, params))

    assert out.shape == x.shape and out.dtype == x.dtype
    # bf16 weight/activation streaming through the MXU (f32 accumulate) -> ~1e-2
    # scale rounding vs. the f32 reference, hence the loosened tolerance.
    assert bool(jnp.allclose(out, ref, rtol=2e-2, atol=2e-2)), "mismatch vs reference"
    print("KERNEL_OK")
</pallas_src>

<mosaic_0001>
module attributes {stable_mosaic.version = 11 : i64} {
  func.func @kernel(%arg0: i32, %arg1: memref<2x16x512xf32, #tpu.memory_space<vmem>>, %arg2: memref<3x512x512xbf16, #tpu.memory_space<vmem>>, %arg3: memref<3x512x512xbf16, #tpu.memory_space<vmem>>, %arg4: memref<1x512xf32, #tpu.memory_space<vmem>>, %arg5: memref<1x512xf32, #tpu.memory_space<vmem>>, %arg6: memref<2x16x512xf32, #tpu.memory_space<vmem>>, %arg7: memref<64x512xf32, #tpu.memory_space<vmem>>) attributes {dimension_semantics = [#tpu.dimension_semantics<parallel>], iteration_bounds = array<i64: 1>, scalar_prefetch = 0 : i64, scratch_operands = 1 : i64, tpu.core_type = #tpu.core_type<tc>, window_params = [{transform_indices = @transform_0, window_bounds = array<i64: 2, 16, 512>}, {pipeline_mode = #tpu.pipeline_mode<synchronous>, transform_indices = @transform_1, window_bounds = array<i64: 3, 512, 512>}, {pipeline_mode = #tpu.pipeline_mode<synchronous>, transform_indices = @transform_2, window_bounds = array<i64: 3, 512, 512>}, {pipeline_mode = #tpu.pipeline_mode<synchronous>, transform_indices = @transform_3, window_bounds = array<i64: 1, 512>}, {pipeline_mode = #tpu.pipeline_mode<synchronous>, transform_indices = @transform_4, window_bounds = array<i64: 1, 512>}, {transform_indices = @transform_5, window_bounds = array<i64: 2, 16, 512>}]} {
    %cst = arith.constant 0.000000e+00 : f32
    %0 = vector.broadcast %cst : f32 to vector<64x512xf32>
    %c0 = arith.constant 0 : index
    %c0_0 = arith.constant 0 : index
    %1 = vector.load %arg7[%c0, %c0_0] : memref<64x512xf32, #tpu.memory_space<vmem>>, vector<64x512xf32>
    tpu.vector_store %arg7[%c0, %c0_0], %0 {strides = array<i32>} : memref<64x512xf32, #tpu.memory_space<vmem>>, vector<64x512xf32>,
    %c0_1 = arith.constant 0 : index
    %c0_2 = arith.constant 0 : index
    %c0_3 = arith.constant 0 : index
    %2 = vector.load %arg1[%c0_1, %c0_2, %c0_3] : memref<2x16x512xf32, #tpu.memory_space<vmem>>, vector<1x16x512xf32>
    %3 = vector.shape_cast %2 : vector<1x16x512xf32> to vector<16x512xf32>
    %c8 = arith.constant 8 : index
    %c0_4 = arith.constant 0 : index
    %4 = vector.load %arg7[%c8, %c0_4] : memref<64x512xf32, #tpu.memory_space<vmem>>, vector<16x512xf32>
    tpu.vector_store %arg7[%c8, %c0_4], %3 {strides = array<i32>} : memref<64x512xf32, #tpu.memory_space<vmem>>, vector<16x512xf32>,
    %c1 = arith.constant 1 : index
    %c0_5 = arith.constant 0 : index
    %c0_6 = arith.constant 0 : index
    %5 = vector.load %arg1[%c1, %c0_5, %c0_6] : memref<2x16x512xf32, #tpu.memory_space<vmem>>, vector<1x16x512xf32>
    %6 = vector.shape_cast %5 : vector<1x16x512xf32> to vector<16x512xf32>
    %c32 = arith.constant 32 : index
    %c0_7 = arith.constant 0 : index
    %7 = vector.load %arg7[%c32, %c0_7] : memref<64x512xf32, #tpu.memory_space<vmem>>, vector<16x512xf32>
    tpu.vector_store %arg7[%c32, %c0_7], %6 {strides = array<i32>} : memref<64x512xf32, #tpu.memory_space<vmem>>, vector<16x512xf32>,
    %cst_8 = arith.constant 0.000000e+00 : f32
    %8 = vector.broadcast %cst_8 : f32 to vector<40x512xf32>
    %c7 = arith.constant 7 : index
    %c0_9 = arith.constant 0 : index
    %9 = vector.load %arg7[%c7, %c0_9] : memref<64x512xf32, #tpu.memory_space<vmem>>, vector<40x512xf32>
    %10 = arith.truncf %9 : vector<40x512xf32> to vector<40x512xbf16>
    %c0_10 = arith.constant 0 : index
    %c0_11 = arith.constant 0 : index
    %c0_12 = arith.constant 0 : index
    %11 = vector.load %arg2[%c0_10, %c0_11, %c0_12] : memref<3x512x512xbf16, #tpu.memory_space<vmem>>, vector<1x512x512xbf16>
    %12 = vector.shape_cast %11 : vector<1x512x512xbf16> to vector<512x512xbf16>
    %cst_13 = arith.constant dense<0.000000e+00> : vector<40x512xf32>
    %13 = tpu.matmul %10, %12, %cst_13 {dimension_numbers = #tpu.dot_dimension_numbers<[1], [0], [0], [1], [0, 0, 1, 1], [], []>} : vector<40x512xbf16>, vector<512x512xbf16>, vector<40x512xf32> -> vector<40x512xf32>
    %14 = arith.addf %8, %13 : vector<40x512xf32>
    %c8_14 = arith.constant 8 : index
    %c0_15 = arith.constant 0 : index
    %15 = vector.load %arg7[%c8_14, %c0_15] : memref<64x512xf32, #tpu.memory_space<vmem>>, vector<40x512xf32>
    %16 = arith.truncf %15 : vector<40x512xf32> to vector<40x512xbf16>
    %c1_16 = arith.constant 1 : index
    %c0_17 = arith.constant 0 : index
    %c0_18 = arith.constant 0 : index
    %17 = vector.load %arg2[%c1_16, %c0_17, %c0_18] : memref<3x512x512xbf16, #tpu.memory_space<vmem>>, vector<1x512x512xbf16>
    %18 = vector.shape_cast %17 : vector<1x512x512xbf16> to vector<512x512xbf16>
    %cst_19 = arith.constant dense<0.000000e+00> : vector<40x512xf32>
    %19 = tpu.matmul %16, %18, %cst_19 {dimension_numbers = #tpu.dot_dimension_numbers<[1], [0], [0], [1], [0, 0, 1, 1], [], []>} : vector<40x512xbf16>, vector<512x512xbf16>, vector<40x512xf32> -> vector<40x512xf32>
    %20 = arith.addf %14, %19 : vector<40x512xf32>
    %c9 = arith.constant 9 : index
    %c0_20 = arith.constant 0 : index
    %21 = vector.load %arg7[%c9, %c0_20] : memref<64x512xf32, #tpu.memory_space<vmem>>, vector<40x512xf32>
    %22 = arith.truncf %21 : vector<40x512xf32> to vector<40x512xbf16>
    %c2 = arith.constant 2 : index
    %c0_21 = arith.constant 0 : index
    %c0_22 = arith.constant 0 : index
    %23 = vector.load %arg2[%c2, %c0_21, %c0_22] : memref<3x512x512xbf16, #tpu.memory_space<vmem>>, vector<1x512x512xbf16>
    %24 = vector.shape_cast %23 : vector<1x512x512xbf16> to vector<512x512xbf16>
    %cst_23 = arith.constant dense<0.000000e+00> : vector<40x512xf32>
    %25 = tpu.matmul %22, %24, %cst_23 {dimension_numbers = #tpu.dot_dimension_numbers<[1], [0], [0], [1], [0, 0, 1, 1], [], []>} : vector<40x512xbf16>, vector<512x512xbf16>, vector<40x512xf32> -> vector<40x512xf32>
    %26 = arith.addf %20, %25 : vector<40x512xf32>
    %c0_24 = arith.constant 0 : index
    %c0_25 = arith.constant 0 : index
    %27 = vector.load %arg4[%c0_24, %c0_25] : memref<1x512xf32, #tpu.memory_space<vmem>>, vector<1x512xf32>
    %28 = vector.broadcast %27 : vector<1x512xf32> to vector<40x512xf32>
    %29 = arith.addf %26, %28 : vector<40x512xf32>
    %cst_26 = arith.constant 0.000000e+00 : f32
    %30 = vector.broadcast %cst_26 : f32 to vector<40x512xf32>
    %31 = arith.maximumf %29, %30 : vector<40x512xf32>
    %32 = vector.extract_strided_slice %31 {offsets = [0, 0], sizes = [16, 512], strides = [1, 1]} : vector<40x512xf32> to vector<16x512xf32>
    %c8_27 = arith.constant 8 : index
    %c0_28 = arith.constant 0 : index
    %33 = vector.load %arg7[%c8_27, %c0_28] : memref<64x512xf32, #tpu.memory_space<vmem>>, vector<16x512xf32>
    tpu.vector_store %arg7[%c8_27, %c0_28], %32 {strides = array<i32>} : memref<64x512xf32, #tpu.memory_space<vmem>>, vector<16x512xf32>,
    %34 = vector.extract_strided_slice %31 {offsets = [24, 0], sizes = [16, 512], strides = [1, 1]} : vector<40x512xf32> to vector<16x512xf32>
    %c32_29 = arith.constant 32 : index
    %c0_30 = arith.constant 0 : index
    %35 = vector.load %arg7[%c32_29, %c0_30] : memref<64x512xf32, #tpu.memory_space<vmem>>, vector<16x512xf32>
    tpu.vector_store %arg7[%c32_29, %c0_30], %34 {strides = array<i32>} : memref<64x512xf32, #tpu.memory_space<vmem>>, vector<16x512xf32>,
    %cst_31 = arith.constant 0.000000e+00 : f32
    %36 = vector.broadcast %cst_31 : f32 to vector<40x512xf32>
    %c7_32 = arith.constant 7 : index
    %c0_33 = arith.constant 0 : index
    %37 = vector.load %arg7[%c7_32, %c0_33] : memref<64x512xf32, #tpu.memory_space<vmem>>, vector<40x512xf32>
    %38 = arith.truncf %37 : vector<40x512xf32> to vector<40x512xbf16>
    %c0_34 = arith.constant 0 : index
    %c0_35 = arith.constant 0 : index
    %c0_36 = arith.constant 0 : index
    %39 = vector.load %arg3[%c0_34, %c0_35, %c0_36] : memref<3x512x512xbf16, #tpu.memory_space<vmem>>, vector<1x512x512xbf16>
    %40 = vector.shape_cast %39 : vector<1x512x512xbf16> to vector<512x512xbf16>
    %cst_37 = arith.constant dense<0.000000e+00> : vector<40x512xf32>
    %41 = tpu.matmul %38, %40, %cst_37 {dimension_numbers = #tpu.dot_dimension_numbers<[1], [0], [0], [1], [0, 0, 1, 1], [], []>} : vector<40x512xbf16>, vector<512x512xbf16>, vector<40x512xf32> -> vector<40x512xf32>
    %42 = arith.addf %36, %41 : vector<40x512xf32>
    %c8_38 = arith.constant 8 : index
    %c0_39 = arith.constant 0 : index
    %43 = vector.load %arg7[%c8_38, %c0_39] : memref<64x512xf32, #tpu.memory_space<vmem>>, vector<40x512xf32>
    %44 = arith.truncf %43 : vector<40x512xf32> to vector<40x512xbf16>
    %c1_40 = arith.constant 1 : index
    %c0_41 = arith.constant 0 : index
    %c0_42 = arith.constant 0 : index
    %45 = vector.load %arg3[%c1_40, %c0_41, %c0_42] : memref<3x512x512xbf16, #tpu.memory_space<vmem>>, vector<1x512x512xbf16>
    %46 = vector.shape_cast %45 : vector<1x512x512xbf16> to vector<512x512xbf16>
    %cst_43 = arith.constant dense<0.000000e+00> : vector<40x512xf32>
    %47 = tpu.matmul %44, %46, %cst_43 {dimension_numbers = #tpu.dot_dimension_numbers<[1], [0], [0], [1], [0, 0, 1, 1], [], []>} : vector<40x512xbf16>, vector<512x512xbf16>, vector<40x512xf32> -> vector<40x512xf32>
    %48 = arith.addf %42, %47 : vector<40x512xf32>
    %c9_44 = arith.constant 9 : index
    %c0_45 = arith.constant 0 : index
    %49 = vector.load %arg7[%c9_44, %c0_45] : memref<64x512xf32, #tpu.memory_space<vmem>>, vector<40x512xf32>
    %50 = arith.truncf %49 : vector<40x512xf32> to vector<40x512xbf16>
    %c2_46 = arith.constant 2 : index
    %c0_47 = arith.constant 0 : index
    %c0_48 = arith.constant 0 : index
    %51 = vector.load %arg3[%c2_46, %c0_47, %c0_48] : memref<3x512x512xbf16, #tpu.memory_space<vmem>>, vector<1x512x512xbf16>
    %52 = vector.shape_cast %51 : vector<1x512x512xbf16> to vector<512x512xbf16>
    %cst_49 = arith.constant dense<0.000000e+00> : vector<40x512xf32>
    %53 = tpu.matmul %50, %52, %cst_49 {dimension_numbers = #tpu.dot_dimension_numbers<[1], [0], [0], [1], [0, 0, 1, 1], [], []>} : vector<40x512xbf16>, vector<512x512xbf16>, vector<40x512xf32> -> vector<40x512xf32>
    %54 = arith.addf %48, %53 : vector<40x512xf32>
    %55 = vector.extract_strided_slice %54 {offsets = [0, 0], sizes = [16, 512], strides = [1, 1]} : vector<40x512xf32> to vector<16x512xf32>
    %c0_50 = arith.constant 0 : index
    %c0_51 = arith.constant 0 : index
    %56 = vector.load %arg5[%c0_50, %c0_51] : memref<1x512xf32, #tpu.memory_space<vmem>>, vector<1x512xf32>
    %57 = vector.broadcast %56 : vector<1x512xf32> to vector<16x512xf32>
    %58 = arith.addf %55, %57 : vector<16x512xf32>
    %c0_52 = arith.constant 0 : index
    %c0_53 = arith.constant 0 : index
    %c0_54 = arith.constant 0 : index
    %59 = vector.load %arg1[%c0_52, %c0_53, %c0_54] : memref<2x16x512xf32, #tpu.memory_space<vmem>>, vector<1x16x512xf32>
    %60 = vector.shape_cast %59 : vector<1x16x512xf32> to vector<16x512xf32>
    %61 = arith.addf %58, %60 : vector<16x512xf32>
    %cst_55 = arith.constant 0.000000e+00 : f32
    %62 = vector.broadcast %cst_55 : f32 to vector<16x512xf32>
    %63 = arith.maximumf %61, %62 : vector<16x512xf32>
    %c0_56 = arith.constant 0 : index
    %c0_57 = arith.constant 0 : index
    %c0_58 = arith.constant 0 : index
    %64 = vector.load %arg6[%c0_56, %c0_57, %c0_58] : memref<2x16x512xf32, #tpu.memory_space<vmem>>, vector<1x16x512xf32>
    %65 = vector.shape_cast %64 : vector<1x16x512xf32> to vector<16x512xf32>
    %66 = vector.shape_cast %63 : vector<16x512xf32> to vector<1x16x512xf32>
    tpu.vector_store %arg6[%c0_56, %c0_57, %c0_58], %66 {strides = array<i32>} : memref<2x16x512xf32, #tpu.memory_space<vmem>>, vector<1x16x512xf32>,
    %67 = vector.extract_strided_slice %54 {offsets = [24, 0], sizes = [16, 512], strides = [1, 1]} : vector<40x512xf32> to vector<16x512xf32>
    %c0_59 = arith.constant 0 : index
    %c0_60 = arith.constant 0 : index
    %68 = vector.load %arg5[%c0_59, %c0_60] : memref<1x512xf32, #tpu.memory_space<vmem>>, vector<1x512xf32>
    %69 = vector.broadcast %68 : vector<1x512xf32> to vector<16x512xf32>
    %70 = arith.addf %67, %69 : vector<16x512xf32>
    %c1_61 = arith.constant 1 : index
    %c0_62 = arith.constant 0 : index
    %c0_63 = arith.constant 0 : index
    %71 = vector.load %arg1[%c1_61, %c0_62, %c0_63] : memref<2x16x512xf32, #tpu.memory_space<vmem>>, vector<1x16x512xf32>
    %72 = vector.shape_cast %71 : vector<1x16x512xf32> to vector<16x512xf32>
    %73 = arith.addf %70, %72 : vector<16x512xf32>
    %cst_64 = arith.constant 0.000000e+00 : f32
    %74 = vector.broadcast %cst_64 : f32 to vector<16x512xf32>
    %75 = arith.maximumf %73, %74 : vector<16x512xf32>
    %c1_65 = arith.constant 1 : index
    %c0_66 = arith.constant 0 : index
    %c0_67 = arith.constant 0 : index
    %76 = vector.load %arg6[%c1_65, %c0_66, %c0_67] : memref<2x16x512xf32, #tpu.memory_space<vmem>>, vector<1x16x512xf32>
    %77 = vector.shape_cast %76 : vector<1x16x512xf32> to vector<16x512xf32>
    %78 = vector.shape_cast %75 : vector<16x512xf32> to vector<1x16x512xf32>
    tpu.vector_store %arg6[%c1_65, %c0_66, %c0_67], %78 {strides = array<i32>} : memref<2x16x512xf32, #tpu.memory_space<vmem>>, vector<1x16x512xf32>,
    return
  }
  func.func @transform_0(%arg0: i32) -> (i32, i32, i32) {
    %c0_i32 = arith.constant 0 : i32
    %c0_i32_0 = arith.constant 0 : i32
    %c0_i32_1 = arith.constant 0 : i32
    return %arg0, %c0_i32, %c0_i32_0 : i32, i32, i32
  }
  func.func @transform_1(%arg0: i32) -> (i32, i32, i32) {
    %c0_i32 = arith.constant 0 : i32
    %c0_i32_0 = arith.constant 0 : i32
    %c0_i32_1 = arith.constant 0 : i32
    %c0_i32_2 = arith.constant 0 : i32
    return %c0_i32, %c0_i32_0, %c0_i32_1 : i32, i32, i32
  }
  func.func @transform_2(%arg0: i32) -> (i32, i32, i32) {
    %c0_i32 = arith.constant 0 : i32
    %c0_i32_0 = arith.constant 0 : i32
    %c0_i32_1 = arith.constant 0 : i32
    %c0_i32_2 = arith.constant 0 : i32
    return %c0_i32, %c0_i32_0, %c0_i32_1 : i32, i32, i32
  }
  func.func @transform_3(%arg0: i32) -> (i32, i32) {
    %c0_i32 = arith.constant 0 : i32
    %c0_i32_0 = arith.constant 0 : i32
    %c0_i32_1 = arith.constant 0 : i32
    return %c0_i32, %c0_i32_0 : i32, i32
  }
  func.func @transform_4(%arg0: i32) -> (i32, i32) {
    %c0_i32 = arith.constant 0 : i32
    %c0_i32_0 = arith.constant 0 : i32
    %c0_i32_1 = arith.constant 0 : i32
    return %c0_i32, %c0_i32_0 : i32, i32
  }
  func.func @transform_5(%arg0: i32) -> (i32, i32, i32) {
    %c0_i32 = arith.constant 0 : i32
    %c0_i32_0 = arith.constant 0 : i32
    %c0_i32_1 = arith.constant 0 : i32
    return %arg0, %c0_i32, %c0_i32_0 : i32, i32, i32
  }
}

</mosaic_0001>

<llo_original>
// kernel: tpu_custom_call.1
$region0: #{tpu_custom_call.1}
  #allocation0 [shape = 'u32[]', space=smem, size = 0x4, offset = 0x4, fixed_abs, tag = 'smem constant byte address 0x4 - core index']
  #allocation1 [shape = 'u32[144,128]{1,0:T(1,128)}', space=vmem, size = 0x12000, scoped, tag = 'internal scratch']
  #allocation2 [shape = 'f32[64,512]{1,0:T(8,128)}', space=vmem, size = 0x20000, scoped, tag = 'scratch operand']
  %s0 = inlined_call_operand.hbm [shape: f32[2,16,512], index: 0, kind: input, shape index: {}]
  %s1 = inlined_call_operand.hbm [shape: bf16[3,512,512], index: 1, kind: input, shape index: {}]
  %s2 = inlined_call_operand.hbm [shape: bf16[3,512,512], index: 2, kind: input, shape index: {}]
  %s3 = inlined_call_operand.hbm [shape: f32[1,512], index: 3, kind: input, shape index: {}]
  %s4 = inlined_call_operand.hbm [shape: f32[1,512], index: 4, kind: input, shape index: {}]
  %s5 = inlined_call_operand.hbm [shape: f32[2,16,512], index: 5, kind: output, shape index: {}]
  %s6 = sld [smem:[#allocation0]]
  $region50: #{tpu_custom_call.1} parent=0
    _
  %s8 = ssub.s32 1, %s6
  %s9 = scalar_select 0, %s8, %s6
  $region1: #{tpu_custom_call.1} parent=0
    #allocation3 [shape = 'u8[65536]{0}', space=vmem, size = 0x10000, scoped, tag = 'input window, operand 0, single buffered']
    #allocation4 [shape = 's32[1]{0}', space=sflag, size = 0x4, scoped, tag = 'scoped memory for tpu_custom_call.1']
    #allocation5 [shape = 's32[1]{0}', space=sflag, size = 0x4, scoped, tag = 'scoped memory for tpu_custom_call.1']
    #allocation6 [shape = 'u8[1572864]{0}', space=vmem, size = 0x180000, scoped, tag = 'input window, operand 1, single buffered']
    #allocation7 [shape = 's32[1]{0}', space=sflag, size = 0x4, scoped, tag = 'scoped memory for tpu_custom_call.1']
    #allocation8 [shape = 'u8[1572864]{0}', space=vmem, size = 0x180000, scoped, tag = 'input window, operand 2, single buffered']
    #allocation9 [shape = 'u8[2048]{0}', space=vmem, size = 0x800, scoped, tag = 'input window, operand 3, single buffered']
    #allocation10 [shape = 's32[1]{0}', space=sflag, size = 0x4, scoped, tag = 'scoped memory for tpu_custom_call.1']
    #allocation11 [shape = 'u8[2048]{0}', space=vmem, size = 0x800, scoped, tag = 'input window, operand 4, single buffered']
    #allocation12 [shape = 'u8[65536]{0}', space=vmem, size = 0x10000, scoped, tag = 'output window, operand 0, single buffered']
    %10 = vsyncpa [#allocation4], 0
    %11 = vsyncpa [#allocation7], 0
    %12 = vsyncpa [#allocation10], 0
    %13 = vsyncpa [#allocation5], 0
    // Predicated region
    $region2: #{tpu_custom_call.1} parent=1 // pred_check
      _
    $region3: #{tpu_custom_call.1} parent=1 // pred_check_branch
      %15 = sbr.rel (0) target = $region5
    $region4: #{tpu_custom_call.1} parent=1 // pred_region
      %s17 = ssub.s32 2048, 2048
      %18 = vsyncadd [#allocation4], %s17
      %s19 = sshll.u32 [#allocation3], 4
      %s20 = int_to_ptr.vmem [resolvable:$true] %s19
      %25 = dma.hbm_to_vmem [thread:$0]  %s0, 2048, %s20, [#allocation4], 512, 512, 32
    $region5: #{tpu_custom_call.1} parent=1 // pred_fallthru
      _
    // Predicated region
    $region6: #{tpu_custom_call.1} parent=1 // pred_check
      _
    $region7: #{tpu_custom_call.1} parent=1 // pred_check_branch
      %27 = sbr.rel (0) target = $region9
    $region8: #{tpu_custom_call.1} parent=1 // pred_region
      %s29 = ssub.s32 49152, 49152
      %30 = vsyncadd [#allocation7], %s29
      %s31 = sshll.u32 [#allocation6], 4
      %s32 = int_to_ptr.vmem [resolvable:$true] %s31
      %37 = dma.hbm_to_vmem [thread:$0]  %s1, 49152, %s32, [#allocation7], 256, 256, 16
    $region9: #{tpu_custom_call.1} parent=1 // pred_fallthru
      _
    // Predicated region
    $region10: #{tpu_custom_call.1} parent=1 // pred_check
      _
    $region11: #{tpu_custom_call.1} parent=1 // pred_check_branch
      %39 = sbr.rel (0) target = $region13
    $region12: #{tpu_custom_call.1} parent=1 // pred_region
      %s41 = ssub.s32 49152, 49152
      %42 = vsyncadd [#allocation7], %s41
      %s43 = sshll.u32 [#allocation8], 4
      %s44 = int_to_ptr.vmem [resolvable:$true] %s43
      %49 = dma.hbm_to_vmem [thread:$0]  %s2, 49152, %s44, [#allocation7], 256, 256, 16
    $region13: #{tpu_custom_call.1} parent=1 // pred_fallthru
      _
    // Predicated region
    $region14: #{tpu_custom_call.1} parent=1 // pred_check
      _
    $region15: #{tpu_custom_call.1} parent=1 // pred_check_branch
      %51 = sbr.rel (0) target = $region17
    $region16: #{tpu_custom_call.1} parent=1 // pred_region
      %s53 = ssub.s32 64, 64
      %54 = vsyncadd [#allocation10], %s53
      %s56 = sshll.u32 [#allocation9], 4
      %s57 = int_to_ptr.vmem [resolvable:$true] %s56
      %59 = dma.hbm_to_vmem [thread:$0]  %s3, 64, %s57, [#allocation10]
    $region17: #{tpu_custom_call.1} parent=1 // pred_fallthru
      _
    // Predicated region
    $region18: #{tpu_custom_call.1} parent=1 // pred_check
      _
    $region19: #{tpu_custom_call.1} parent=1 // pred_check_branch
      %61 = sbr.rel (0) target = $region21
    $region20: #{tpu_custom_call.1} parent=1 // pred_region
      %s63 = ssub.s32 64, 64
      %64 = vsyncadd [#allocation10], %s63
      %s66 = sshll.u32 [#allocation11], 4
      %s67 = int_to_ptr.vmem [resolvable:$true] %s66
      %69 = dma.hbm_to_vmem [thread:$0]  %s4, 64, %s67, [#allocation10]
    $region21: #{tpu_custom_call.1} parent=1 // pred_fallthru
      _
    // Predicated region
    $region22: #{tpu_custom_call.1} parent=1 // pred_check
      _
    $region23: #{tpu_custom_call.1} parent=1 // pred_check_branch
      %71 = sbr.rel (0) target = $region25
    $region24: #{tpu_custom_call.1} parent=1 // pred_region
      %72 = dma.done [#allocation4], 2048
    $region25: #{tpu_custom_call.1} parent=1 // pred_fallthru
      _
    // Predicated region
    $region26: #{tpu_custom_call.1} parent=1 // pred_check
      _
    $region27: #{tpu_custom_call.1} parent=1 // pred_check_branch
      %74 = sbr.rel (0) target = $region29
    $region28: #{tpu_custom_call.1} parent=1 // pred_region
      %75 = dma.done [#allocation7], 49152
    $region29: #{tpu_custom_call.1} parent=1 // pred_fallthru
      _
    // Predicated region
    $region30: #{tpu_custom_call.1} parent=1 // pred_check
      _
    $region31: #{tpu_custom_call.1} parent=1 // pred_check_branch
      %77 = sbr.rel (0) target = $region33
    $region32: #{tpu_custom_call.1} parent=1 // pred_region
      %78 = dma.done [#allocation7], 49152
    $region33: #{tpu_custom_call.1} parent=1 // pred_fallthru
      _
    // Predicated region
    $region34: #{tpu_custom_call.1} parent=1 // pred_check
      _
    $region35: #{tpu_custom_call.1} parent=1 // pred_check_branch
      %80 = sbr.rel (0) target = $region37
    $region36: #{tpu_custom_call.1} parent=1 // pred_region
      %81 = dma.done [#allocation10], 64
    $region37: #{tpu_custom_call.1} parent=1 // pred_fallthru
      _
    // Predicated region
    $region38: #{tpu_custom_call.1} parent=1 // pred_check
      _
    $region39: #{tpu_custom_call.1} parent=1 // pred_check_branch
      %83 = sbr.rel (0) target = $region41
    $region40: #{tpu_custom_call.1} parent=1 // pred_region
      %84 = dma.done [#allocation10], 64
    $region41: #{tpu_custom_call.1} parent=1 // pred_fallthru
      _
    %85 = vst [vmem:[#allocation2] sm:$0xff] 0.0
    %86 = vst [vmem:[#allocation2 + $0x8] sm:$0xff] 0.0
    %87 = vst [vmem:[#allocation2 + $0x10] sm:$0xff] 0.0
    %88 = vst [vmem:[#allocation2 + $0x18] sm:$0xff] 0.0
    %89 = vst [vmem:[#allocation2 + $0x20] sm:$0xff] 0.0
    %90 = vst [vmem:[#allocation2 + $0x28] sm:$0xff] 0.0
    %91 = vst [vmem:[#allocation2 + $0x30] sm:$0xff] 0.0
    %92 = vst [vmem:[#allocation2 + $0x38] sm:$0xff] 0.0
    %93 = vst [vmem:[#allocation2 + $0x40] sm:$0xff] 0.0
    %94 = vst [vmem:[#allocation2 + $0x48] sm:$0xff] 0.0
    %95 = vst [vmem:[#allocation2 + $0x50] sm:$0xff] 0.0
    %96 = vst [vmem:[#allocation2 + $0x58] sm:$0xff] 0.0
    %97 = vst [vmem:[#allocation2 + $0x60] sm:$0xff] 0.0
    %98 = vst [vmem:[#allocation2 + $0x68] sm:$0xff] 0.0
    %99 = vst [vmem:[#allocation2 + $0x70] sm:$0xff] 0.0
    %100 = vst [vmem:[#allocation2 + $0x78] sm:$0xff] 0.0
    %101 = vst [vmem:[#allocation2 + $0x80] sm:$0xff] 0.0
    %102 = vst [vmem:[#allocation2 + $0x88] sm:$0xff] 0.0
    %103 = vst [vmem:[#allocation2 + $0x90] sm:$0xff] 0.0
    %104 = vst [vmem:[#allocation2 + $0x98] sm:$0xff] 0.0
    %105 = vst [vmem:[#allocation2 + $0xa0] sm:$0xff] 0.0
    %106 = vst [vmem:[#allocation2 + $0xa8] sm:$0xff] 0.0
    %107 = vst [vmem:[#allocation2 + $0xb0] sm:$0xff] 0.0
    %108 = vst [vmem:[#allocation2 + $0xb8] sm:$0xff] 0.0
    %109 = vst [vmem:[#allocation2 + $0xc0] sm:$0xff] 0.0
    %110 = vst [vmem:[#allocation2 + $0xc8] sm:$0xff] 0.0
    %111 = vst [vmem:[#allocation2 + $0xd0] sm:$0xff] 0.0
    %112 = vst [vmem:[#allocation2 + $0xd8] sm:$0xff] 0.0
    %113 = vst [vmem:[#allocation2 + $0xe0] sm:$0xff] 0.0
    %114 = vst [vmem:[#allocation2 + $0xe8] sm:$0xff] 0.0
    %115 = vst [vmem:[#allocation2 + $0xf0] sm:$0xff] 0.0
    %116 = vst [vmem:[#allocation2 + $0xf8] sm:$0xff] 0.0
    %v117 = vld [vmem:[#allocation3] sm:$0xff]
    %v118 = vld [vmem:[#allocation3 + $0x8] sm:$0xff]
    %v119 = vld [vmem:[#allocation3 + $0x10] sm:$0xff]
    %v120 = vld [vmem:[#allocation3 + $0x18] sm:$0xff]
    %v121 = vld [vmem:[#allocation3 + $0x20] sm:$0xff]
    %v122 = vld [vmem:[#allocation3 + $0x28] sm:$0xff]
    %v123 = vld [vmem:[#allocation3 + $0x30] sm:$0xff]
    %v124 = vld [vmem:[#allocation3 + $0x38] sm:$0xff]
    %125 = vst [vmem:[#allocation2 + $0x20] sm:$0xff] %v117
    %126 = vst [vmem:[#allocation2 + $0x28] sm:$0xff] %v118
    %127 = vst [vmem:[#allocation2 + $0x30] sm:$0xff] %v119
    %128 = vst [vmem:[#allocation2 + $0x38] sm:$0xff] %v120
    %129 = vst [vmem:[#allocation2 + $0x40] sm:$0xff] %v121
    %130 = vst [vmem:[#allocation2 + $0x48] sm:$0xff] %v122
    %131 = vst [vmem:[#allocation2 + $0x50] sm:$0xff] %v123
    %132 = vst [vmem:[#allocation2 + $0x58] sm:$0xff] %v124
    %s133 = scalar_lea.vmem [#allocation3], 64
    %v134 = vld [vmem:[%s133] sm:$0xff]
    %v135 = vld [vmem:[%s133 + $0x8] sm:$0xff]
    %v136 = vld [vmem:[%s133 + $0x10] sm:$0xff]
    %v137 = vld [vmem:[%s133 + $0x18] sm:$0xff]
    %v138 = vld [vmem:[%s133 + $0x20] sm:$0xff]
    %v139 = vld [vmem:[%s133 + $0x28] sm:$0xff]
    %v140 = vld [vmem:[%s133 + $0x30] sm:$0xff]
    %v141 = vld [vmem:[%s133 + $0x38] sm:$0xff]
    %142 = vst [vmem:[#allocation2 + $0x80] sm:$0xff] %v134
    %143 = vst [vmem:[#allocation2 + $0x88] sm:$0xff] %v135
    %144 = vst [vmem:[#allocation2 + $0x90] sm:$0xff] %v136
    %145 = vst [vmem:[#allocation2 + $0x98] sm:$0xff] %v137
    %146 = vst [vmem:[#allocation2 + $0xa0] sm:$0xff] %v138
    %147 = vst [vmem:[#allocation2 + $0xa8] sm:$0xff] %v139
    %148 = vst [vmem:[#allocation2 + $0xb0] sm:$0xff] %v140
    %149 = vst [vmem:[#allocation2 + $0xb8] sm:$0xff] %v141
    %v150 = vld [vmem:[#allocation2] sm:$0x80]
    %v151 = vld [vmem:[#allocation2 + $0x8] sm:$0x80]
    %v152 = vld [vmem:[#allocation2 + $0x10] sm:$0x80]
    %v153 = vld [vmem:[#allocation2 + $0x18] sm:$0x80]
    %v154 = vld [vmem:[#allocation2 + $0x20] sm:$0xff]
    %v155 = vld [vmem:[#allocation2 + $0x28] sm:$0xff]
    %v156 = vld [vmem:[#allocation2 + $0x30] sm:$0xff]
    %v157 = vld [vmem:[#allocation2 + $0x38] sm:$0xff]
    %v158 = vld [vmem:[#allocation2 + $0x40] sm:$0xff]
    %v159 = vld [vmem:[#allocation2 + $0x48] sm:$0xff]
    %v160 = vld [vmem:[#allocation2 + $0x50] sm:$0xff]
    %v161 = vld [vmem:[#allocation2 + $0x58] sm:$0xff]
    %v162 = vld [vmem:[#allocation2 + $0x60] sm:$0xff]
    %v163 = vld [vmem:[#allocation2 + $0x68] sm:$0xff]
    %v164 = vld [vmem:[#allocation2 + $0x70] sm:$0xff]
    %v165 = vld [vmem:[#allocation2 + $0x78] sm:$0xff]
    %v166 = vld [vmem:[#allocation2 + $0x80] sm:$0xff]
    %v167 = vld [vmem:[#allocation2 + $0x88] sm:$0xff]
    %v168 = vld [vmem:[#allocation2 + $0x90] sm:$0xff]
    %v169 = vld [vmem:[#allocation2 + $0x98] sm:$0xff]
    %v170 = vld [vmem:[#allocation2 + $0xa0] sm:$0x7f]
    %v171 = vld [vmem:[#allocation2 + $0xa8] sm:$0x7f]
    %v172 = vld [vmem:[#allocation2 + $0xb0] sm:$0x7f]
    %v173 = vld [vmem:[#allocation2 + $0xb8] sm:$0x7f]
    %v174 = vpack.c.bf16 %v154, %v150
    %v175 = vpack.c.bf16 %v155, %v151
    %v176 = vpack.c.bf16 %v156, %v152
    %v177 = vpack.c.bf16 %v157, %v153
    %v178 = vpack.c.bf16 %v162, %v158
    %v179 = vpack.c.bf16 %v163, %v159
    %v180 = vpack.c.bf16 %v164, %v160
    %v181 = vpack.c.bf16 %v165, %v161
    %v182 = vpack.c.bf16 %v170, %v166
    %v183 = vpack.c.bf16 %v171, %v167
    %v184 = vpack.c.bf16 %v172, %v168
    %v185 = vpack.c.bf16 %v173, %v169
    %v186 = vld [vmem:[#allocation6] sm:$0xff]
    %v187 = vld [vmem:[#allocation6 + $0x8] sm:$0xff]
    %v188 = vld [vmem:[#allocation6 + $0x10] sm:$0xff]
    %v189 = vld [vmem:[#allocation6 + $0x18] sm:$0xff]
    %v190 = vld [vmem:[#allocation6 + $0x20] sm:$0xff]
    %v191 = vld [vmem:[#allocation6 + $0x28] sm:$0xff]
    %v192 = vld [vmem:[#allocation6 + $0x30] sm:$0xff]
    %v193 = vld [vmem:[#allocation6 + $0x38] sm:$0xff]
    %v194 = vld [vmem:[#allocation6 + $0x40] sm:$0xff]
    %v195 = vld [vmem:[#allocation6 + $0x48] sm:$0xff]
    %v196 = vld [vmem:[#allocation6 + $0x50] sm:$0xff]
    %v197 = vld [vmem:[#allocation6 + $0x58] sm:$0xff]
    %v198 = vld [vmem:[#allocation6 + $0x60] sm:$0xff]
    %v199 = vld [vmem:[#allocation6 + $0x68] sm:$0xff]
    %v200 = vld [vmem:[#allocation6 + $0x70] sm:$0xff]
    %v201 = vld [vmem:[#allocation6 + $0x78] sm:$0xff]
    %v202 = vld [vmem:[#allocation6 + $0x80] sm:$0xff]
    %v203 = vld [vmem:[#allocation6 + $0x88] sm:$0xff]
    %v204 = vld [vmem:[#allocation6 + $0x90] sm:$0xff]
    %v205 = vld [vmem:[#allocation6 + $0x98] sm:$0xff]
    %v206 = vld [vmem:[#allocation6 + $0xa0] sm:$0xff]
    %v207 = vld [vmem:[#allocation6 + $0xa8] sm:$0xff]
    %v208 = vld [vmem:[#allocation6 + $0xb0] sm:$0xff]
    %v209 = vld [vmem:[#allocation6 + $0xb8] sm:$0xff]
    %v210 = vld [vmem:[#allocation6 + $0xc0] sm:$0xff]
    %v211 = vld [vmem:[#allocation6 + $0xc8] sm:$0xff]
    %v212 = vld [vmem:[#allocation6 + $0xd0] sm:$0xff]
    %v213 = vld [vmem:[#allocation6 + $0xd8] sm:$0xff]
    %v214 = vld [vmem:[#allocation6 + $0xe0] sm:$0xff]
    %v215 = vld [vmem:[#allocation6 + $0xe8] sm:$0xff]
    %v216 = vld [vmem:[#allocation6 + $0xf0] sm:$0xff]
    %v217 = vld [vmem:[#allocation6 + $0xf8] sm:$0xff]
    %v218 = vld [vmem:[#allocation6 + $0x100] sm:$0xff]
    %v219 = vld [vmem:[#allocation6 + $0x108] sm:$0xff]
    %v220 = vld [vmem:[#allocation6 + $0x110] sm:$0xff]
    %v221 = vld [vmem:[#allocation6 + $0x118] sm:$0xff]
    %v222 = vld [vmem:[#allocation6 + $0x120] sm:$0xff]
    %v223 = vld [vmem:[#allocation6 + $0x128] sm:$0xff]
    %v224 = vld [vmem:[#allocation6 + $0x130] sm:$0xff]
    %v225 = vld [vmem:[#allocation6 + $0x138] sm:$0xff]
    %v226 = vld [vmem:[#allocation6 + $0x140] sm:$0xff]
    %v227 = vld [vmem:[#allocation6 + $0x148] sm:$0xff]
    %v228 = vld [vmem:[#allocation6 + $0x150] sm:$0xff]
    %v229 = vld [vmem:[#allocation6 + $0x158] sm:$0xff]
    %v230 = vld [vmem:[#allocation6 + $0x160] sm:$0xff]
    %v231 = vld [vmem:[#allocation6 + $0x168] sm:$0xff]
    %v232 = vld [vmem:[#allocation6 + $0x170] sm:$0xff]
    %v233 = vld [vmem:[#allocation6 + $0x178] sm:$0xff]
    %v234 = vld [vmem:[#allocation6 + $0x180] sm:$0xff]
    %v235 = vld [vmem:[#allocation6 + $0x188] sm:$0xff]
    %v236 = vld [vmem:[#allocation6 + $0x190] sm:$0xff]
    %v237 = vld [vmem:[#allocation6 + $0x198] sm:$0xff]
    %v238 = vld [vmem:[#allocation6 + $0x1a0] sm:$0xff]
    %v239 = vld [vmem:[#allocation6 + $0x1a8] sm:$0xff]
    %v240 = vld [vmem:[#allocation6 + $0x1b0] sm:$0xff]
    %v241 = vld [vmem:[#allocation6 + $0x1b8] sm:$0xff]
    %v242 = vld [vmem:[#allocation6 + $0x1c0] sm:$0xff]
    %v243 = vld [vmem:[#allocation6 + $0x1c8] sm:$0xff]
    %v244 = vld [vmem:[#allocation6 + $0x1d0] sm:$0xff]
    %v245 = vld [vmem:[#allocation6 + $0x1d8] sm:$0xff]
    %v246 = vld [vmem:[#allocation6 + $0x1e0] sm:$0xff]
    %v247 = vld [vmem:[#allocation6 + $0x1e8] sm:$0xff]
    %v248 = vld [vmem:[#allocation6 + $0x1f0] sm:$0xff]
    %v249 = vld [vmem:[#allocation6 + $0x1f8] sm:$0xff]
    %v250 = vld [vmem:[#allocation6 + $0x200] sm:$0xff]
    %v251 = vld [vmem:[#allocation6 + $0x208] sm:$0xff]
    %v252 = vld [vmem:[#allocation6 + $0x210] sm:$0xff]
    %v253 = vld [vmem:[#allocation6 + $0x218] sm:$0xff]
    %v254 = vld [vmem:[#allocation6 + $0x220] sm:$0xff]
    %v255 = vld [vmem:[#allocation6 + $0x228] sm:$0xff]
    %v256 = vld [vmem:[#allocation6 + $0x230] sm:$0xff]
    %v257 = vld [vmem:[#allocation6 + $0x238] sm:$0xff]
    %v258 = vld [vmem:[#allocation6 + $0x240] sm:$0xff]
    %v259 = vld [vmem:[#allocation6 + $0x248] sm:$0xff]
    %v260 = vld [vmem:[#allocation6 + $0x250] sm:$0xff]
    %v261 = vld [vmem:[#allocation6 + $0x258] sm:$0xff]
    %v262 = vld [vmem:[#allocation6 + $0x260] sm:$0xff]
    %v263 = vld [vmem:[#allocation6 + $0x268] sm:$0xff]
    %v264 = vld [vmem:[#allocation6 + $0x270] sm:$0xff]
    %v265 = vld [vmem:[#allocation6 + $0x278] sm:$0xff]
    %v266 = vld [vmem:[#allocation6 + $0x280] sm:$0xff]
    %v267 = vld [vmem:[#allocation6 + $0x288] sm:$0xff]
    %v268 = vld [vmem:[#allocation6 + $0x290] sm:$0xff]
    %v269 = vld [vmem:[#allocation6 + $0x298] sm:$0xff]
    %v270 = vld [vmem:[#allocation6 + $0x2a0] sm:$0xff]
    %v271 = vld [vmem:[#allocation6 + $0x2a8] sm:$0xff]
    %v272 = vld [vmem:[#allocation6 + $0x2b0] sm:$0xff]
    %v273 = vld [vmem:[#allocation6 + $0x2b8] sm:$0xff]
    %v274 = vld [vmem:[#allocation6 + $0x2c0] sm:$0xff]
    %v275 = vld [vmem:[#allocation6 + $0x2c8] sm:$0xff]
    %v276 = vld [vmem:[#allocation6 + $0x2d0] sm:$0xff]
    %v277 = vld [vmem:[#allocation6 + $0x2d8] sm:$0xff]
    %v278 = vld [vmem:[#allocation6 + $0x2e0] sm:$0xff]
    %v279 = vld [vmem:[#allocation6 + $0x2e8] sm:$0xff]
    %v280 = vld [vmem:[#allocation6 + $0x2f0] sm:$0xff]
    %v281 = vld [vmem:[#allocation6 + $0x2f8] sm:$0xff]
    %v282 = vld [vmem:[#allocation6 + $0x300] sm:$0xff]
    %v283 = vld [vmem:[#allocation6 + $0x308] sm:$0xff]
    %v284 = vld [vmem:[#allocation6 + $0x310] sm:$0xff]
    %v285 = vld [vmem:[#allocation6 + $0x318] sm:$0xff]
    %v286 = vld [vmem:[#allocation6 + $0x320] sm:$0xff]
    %v287 = vld [vmem:[#allocation6 + $0x328] sm:$0xff]
    %v288 = vld [vmem:[#allocation6 + $0x330] sm:$0xff]
    %v289 = vld [vmem:[#allocation6 + $0x338] sm:$0xff]
    %v290 = vld [vmem:[#allocation6 + $0x340] sm:$0xff]
    %v291 = vld [vmem:[#allocation6 + $0x348] sm:$0xff]
    %v292 = vld [vmem:[#allocation6 + $0x350] sm:$0xff]
    %v293 = vld [vmem:[#allocation6 + $0x358] sm:$0xff]
    %v294 = vld [vmem:[#allocation6 + $0x360] sm:$0xff]
    %v295 = vld [vmem:[#allocation6 + $0x368] sm:$0xff]
    %v296 = vld [vmem:[#allocation6 + $0x370] sm:$0xff]
    %v297 = vld [vmem:[#allocation6 + $0x378] sm:$0xff]
    %v298 = vld [vmem:[#allocation6 + $0x380] sm:$0xff]
    %v299 = vld [vmem:[#allocation6 + $0x388] sm:$0xff]
    %v300 = vld [vmem:[#allocation6 + $0x390] sm:$0xff]
    %v301 = vld [vmem:[#allocation6 + $0x398] sm:$0xff]
    %v302 = vld [vmem:[#allocation6 + $0x3a0] sm:$0xff]
    %v303 = vld [vmem:[#allocation6 + $0x3a8] sm:$0xff]
    %v304 = vld [vmem:[#allocation6 + $0x3b0] sm:$0xff]
    %v305 = vld [vmem:[#allocation6 + $0x3b8] sm:$0xff]
    %v306 = vld [vmem:[#allocation6 + $0x3c0] sm:$0xff]
    %v307 = vld [vmem:[#allocation6 + $0x3c8] sm:$0xff]
    %v308 = vld [vmem:[#allocation6 + $0x3d0] sm:$0xff]
    %v309 = vld [vmem:[#allocation6 + $0x3d8] sm:$0xff]
    %v310 = vld [vmem:[#allocation6 + $0x3e0] sm:$0xff]
    %v311 = vld [vmem:[#allocation6 + $0x3e8] sm:$0xff]
    %v312 = vld [vmem:[#allocation6 + $0x3f0] sm:$0xff]
    %v313 = vld [vmem:[#allocation6 + $0x3f8] sm:$0xff]
    %v314 = vld [vmem:[#allocation2 + $0xa0] sm:$0xff]
    %v315 = vld [vmem:[#allocation2 + $0xa8] sm:$0xff]
    %v316 = vld [vmem:[#allocation2 + $0xb0] sm:$0xff]
    %v317 = vld [vmem:[#allocation2 + $0xb8] sm:$0xff]
    %v318 = vpack.c.bf16 %v158, %v154
    %v319 = vpack.c.bf16 %v159, %v155
    %v320 = vpack.c.bf16 %v160, %v156
    %v321 = vpack.c.bf16 %v161, %v157
    %v322 = vpack.c.bf16 %v166, %v162
    %v323 = vpack.c.bf16 %v167, %v163
    %v324 = vpack.c.bf16 %v168, %v164
    %v325 = vpack.c.bf16 %v169, %v165
    %v326 = vpack.c.bf16 %v314, %v314
    %v327 = vpack.c.bf16 %v315, %v315
    %v328 = vpack.c.bf16 %v316, %v316
    %v329 = vpack.c.bf16 %v317, %v317
    %s330 = scalar_lea.vmem [#allocation6], 1024
    %v331 = vld [vmem:[%s330] sm:$0xff]
    %v332 = vld [vmem:[%s330 + $0x8] sm:$0xff]
    %v333 = vld [vmem:[%s330 + $0x10] sm:$0xff]
    %v334 = vld [vmem:[%s330 + $0x18] sm:$0xff]
    %v335 = vld [vmem:[%s330 + $0x20] sm:$0xff]
    %v336 = vld [vmem:[%s330 + $0x28] sm:$0xff]
    %v337 = vld [vmem:[%s330 + $0x30] sm:$0xff]
    %v338 = vld [vmem:[%s330 + $0x38] sm:$0xff]
    %v339 = vld [vmem:[%s330 + $0x40] sm:$0xff]
    %v340 = vld [vmem:[%s330 + $0x48] sm:$0xff]
    %v341 = vld [vmem:[%s330 + $0x50] sm:$0xff]
    %v342 = vld [vmem:[%s330 + $0x58] sm:$0xff]
    %v343 = vld [vmem:[%s330 + $0x60] sm:$0xff]
    %v344 = vld [vmem:[%s330 + $0x68] sm:$0xff]
    %v345 = vld [vmem:[%s330 + $0x70] sm:$0xff]
    %v346 = vld [vmem:[%s330 + $0x78] sm:$0xff]
    %v347 = vld [vmem:[%s330 + $0x80] sm:$0xff]
    %v348 = vld [vmem:[%s330 + $0x88] sm:$0xff]
    %v349 = vld [vmem:[%s330 + $0x90] sm:$0xff]
    %v350 = vld [vmem:[%s330 + $0x98] sm:$0xff]
    %v351 = vld [vmem:[%s330 + $0xa0] sm:$0xff]
    %v352 = vld [vmem:[%s330 + $0xa8] sm:$0xff]
    %v353 = vld [vmem:[%s330 + $0xb0] sm:$0xff]
    %v354 = vld [vmem:[%s330 + $0xb8] sm:$0xff]
    %v355 = vld [vmem:[%s330 + $0xc0] sm:$0xff]
    %v356 = vld [vmem:[%s330 + $0xc8] sm:$0xff]
    %v357 = vld [vmem:[%s330 + $0xd0] sm:$0xff]
    %v358 = vld [vmem:[%s330 + $0xd8] sm:$0xff]
    %v359 = vld [vmem:[%s330 + $0xe0] sm:$0xff]
    %v360 = vld [vmem:[%s330 + $0xe8] sm:$0xff]
    %v361 = vld [vmem:[%s330 + $0xf0] sm:$0xff]
    %v362 = vld [vmem:[%s330 + $0xf8] sm:$0xff]
    %v363 = vld [vmem:[%s330 + $0x100] sm:$0xff]
    %v364 = vld [vmem:[%s330 + $0x108] sm:$0xff]
    %v365 = vld [vmem:[%s330 + $0x110] sm:$0xff]
    %v366 = vld [vmem:[%s330 + $0x118] sm:$0xff]
    %v367 = vld [vmem:[%s330 + $0x120] sm:$0xff]
    %v368 = vld [vmem:[%s330 + $0x128] sm:$0xff]
    %v369 = vld [vmem:[%s330 + $0x130] sm:$0xff]
    %v370 = vld [vmem:[%s330 + $0x138] sm:$0xff]
    %v371 = vld [vmem:[%s330 + $0x140] sm:$0xff]
    %v372 = vld [vmem:[%s330 + $0x148] sm:$0xff]
    %v373 = vld [vmem:[%s330 + $0x150] sm:$0xff]
    %v374 = vld [vmem:[%s330 + $0x158] sm:$0xff]
    %v375 = vld [vmem:[%s330 + $0x160] sm:$0xff]
    %v376 = vld [vmem:[%s330 + $0x168] sm:$0xff]
    %v377 = vld [vmem:[%s330 + $0x170] sm:$0xff]
    %v378 = vld [vmem:[%s330 + $0x178] sm:$0xff]
    %v379 = vld [vmem:[%s330 + $0x180] sm:$0xff]
    %v380 = vld [vmem:[%s330 + $0x188] sm:$0xff]
    %v381 = vld [vmem:[%s330 + $0x190] sm:$0xff]
    %v382 = vld [vmem:[%s330 + $0x198] sm:$0xff]
    %v383 = vld [vmem:[%s330 + $0x1a0] sm:$0xff]
    %v384 = vld [vmem:[%s330 + $0x1a8] sm:$0xff]
    %v385 = vld [vmem:[%s330 + $0x1b0] sm:$0xff]
    %v386 = vld [vmem:[%s330 + $0x1b8] sm:$0xff]
    %v387 = vld [vmem:[%s330 + $0x1c0] sm:$0xff]
    %v388 = vld [vmem:[%s330 + $0x1c8] sm:$0xff]
    %v389 = vld [vmem:[%s330 + $0x1d0] sm:$0xff]
    %v390 = vld [vmem:[%s330 + $0x1d8] sm:$0xff]
    %v391 = vld [vmem:[%s330 + $0x1e0] sm:$0xff]
    %v392 = vld [vmem:[%s330 + $0x1e8] sm:$0xff]
    %v393 = vld [vmem:[%s330 + $0x1f0] sm:$0xff]
    %v394 = vld [vmem:[%s330 + $0x1f8] sm:$0xff]
    %v395 = vld [vmem:[%s330 + $0x200] sm:$0xff]
    %v396 = vld [vmem:[%s330 + $0x208] sm:$0xff]
    %v397 = vld [vmem:[%s330 + $0x210] sm:$0xff]
    %v398 = vld [vmem:[%s330 + $0x218] sm:$0xff]
    %v399 = vld [vmem:[%s330 + $0x220] sm:$0xff]
    %v400 = vld [vmem:[%s330 + $0x228] sm:$0xff]
    %v401 = vld [vmem:[%s330 + $0x230] sm:$0xff]
    %v402 = vld [vmem:[%s330 + $0x238] sm:$0xff]
    %v403 = vld [vmem:[%s330 + $0x240] sm:$0xff]
    %v404 = vld [vmem:[%s330 + $0x248] sm:$0xff]
    %v405 = vld [vmem:[%s330 + $0x250] sm:$0xff]
    %v406 = vld [vmem:[%s330 + $0x258] sm:$0xff]
    %v407 = vld [vmem:[%s330 + $0x260] sm:$0xff]
    %v408 = vld [vmem:[%s330 + $0x268] sm:$0xff]
    %v409 = vld [vmem:[%s330 + $0x270] sm:$0xff]
    %v410 = vld [vmem:[%s330 + $0x278] sm:$0xff]
    %v411 = vld [vmem:[%s330 + $0x280] sm:$0xff]
    %v412 = vld [vmem:[%s330 + $0x288] sm:$0xff]
    %v413 = vld [vmem:[%s330 + $0x290] sm:$0xff]
    %v414 = vld [vmem:[%s330 + $0x298] sm:$0xff]
    %v415 = vld [vmem:[%s330 + $0x2a0] sm:$0xff]
    %v416 = vld [vmem:[%s330 + $0x2a8] sm:$0xff]
    %v417 = vld [vmem:[%s330 + $0x2b0] sm:$0xff]
    %v418 = vld [vmem:[%s330 + $0x2b8] sm:$0xff]
    %v419 = vld [vmem:[%s330 + $0x2c0] sm:$0xff]
    %v420 = vld [vmem:[%s330 + $0x2c8] sm:$0xff]
    %v421 = vld [vmem:[%s330 + $0x2d0] sm:$0xff]
    %v422 = vld [vmem:[%s330 + $0x2d8] sm:$0xff]
    %v423 = vld [vmem:[%s330 + $0x2e0] sm:$0xff]
    %v424 = vld [vmem:[%s330 + $0x2e8] sm:$0xff]
    %v425 = vld [vmem:[%s330 + $0x2f0] sm:$0xff]
    %v426 = vld [vmem:[%s330 + $0x2f8] sm:$0xff]
    %v427 = vld [vmem:[%s330 + $0x300] sm:$0xff]
    %v428 = vld [vmem:[%s330 + $0x308] sm:$0xff]
    %v429 = vld [vmem:[%s330 + $0x310] sm:$0xff]
    %v430 = vld [vmem:[%s330 + $0x318] sm:$0xff]
    %v431 = vld [vmem:[%s330 + $0x320] sm:$0xff]
    %v432 = vld [vmem:[%s330 + $0x328] sm:$0xff]
    %v433 = vld [vmem:[%s330 + $0x330] sm:$0xff]
    %v434 = vld [vmem:[%s330 + $0x338] sm:$0xff]
    %v435 = vld [vmem:[%s330 + $0x340] sm:$0xff]
    %v436 = vld [vmem:[%s330 + $0x348] sm:$0xff]
    %v437 = vld [vmem:[%s330 + $0x350] sm:$0xff]
    %v438 = vld [vmem:[%s330 + $0x358] sm:$0xff]
    %v439 = vld [vmem:[%s330 + $0x360] sm:$0xff]
    %v440 = vld [vmem:[%s330 + $0x368] sm:$0xff]
    %v441 = vld [vmem:[%s330 + $0x370] sm:$0xff]
    %v442 = vld [vmem:[%s330 + $0x378] sm:$0xff]
    %v443 = vld [vmem:[%s330 + $0x380] sm:$0xff]
    %v444 = vld [vmem:[%s330 + $0x388] sm:$0xff]
    %v445 = vld [vmem:[%s330 + $0x390] sm:$0xff]
    %v446 = vld [vmem:[%s330 + $0x398] sm:$0xff]
    %v447 = vld [vmem:[%s330 + $0x3a0] sm:$0xff]
    %v448 = vld [vmem:[%s330 + $0x3a8] sm:$0xff]
    %v449 = vld [vmem:[%s330 + $0x3b0] sm:$0xff]
    %v450 = vld [vmem:[%s330 + $0x3b8] sm:$0xff]
    %v451 = vld [vmem:[%s330 + $0x3c0] sm:$0xff]
    %v452 = vld [vmem:[%s330 + $0x3c8] sm:$0xff]
    %v453 = vld [vmem:[%s330 + $0x3d0] sm:$0xff]
    %v454 = vld [vmem:[%s330 + $0x3d8] sm:$0xff]
    %v455 = vld [vmem:[%s330 + $0x3e0] sm:$0xff]
    %v456 = vld [vmem:[%s330 + $0x3e8] sm:$0xff]
    %v457 = vld [vmem:[%s330 + $0x3f0] sm:$0xff]
    %v458 = vld [vmem:[%s330 + $0x3f8] sm:$0xff]
    %v587 = vunpack.c.l.b16 %v331
    %v588 = vunpack.c.h.b16 %v331
    %v589 = vunpack.c.l.b16 %v332
    %v590 = vunpack.c.h.b16 %v332
    %v591 = vunpack.c.l.b16 %v333
    %v592 = vunpack.c.h.b16 %v333
    %v593 = vunpack.c.l.b16 %v334
    %v594 = vunpack.c.h.b16 %v334
    %v595 = vunpack.c.l.b16 %v335
    %v596 = vunpack.c.h.b16 %v335
    %v597 = vunpack.c.l.b16 %v336
    %v598 = vunpack.c.h.b16 %v336
    %v599 = vunpack.c.l.b16 %v337
    %v600 = vunpack.c.h.b16 %v337
    %v601 = vunpack.c.l.b16 %v338
    %v602 = vunpack.c.h.b16 %v338
    %v603 = vunpack.c.l.b16 %v339
    %v604 = vunpack.c.h.b16 %v339
    %v605 = vunpack.c.l.b16 %v340
    %v606 = vunpack.c.h.b16 %v340
    %v607 = vunpack.c.l.b16 %v341
    %v608 = vunpack.c.h.b16 %v341
    %v609 = vunpack.c.l.b16 %v342
    %v610 = vunpack.c.h.b16 %v342
    %v611 = vunpack.c.l.b16 %v343
    %v612 = vunpack.c.h.b16 %v343
    %v613 = vunpack.c.l.b16 %v344
    %v614 = vunpack.c.h.b16 %v344
    %v615 = vunpack.c.l.b16 %v345
    %v616 = vunpack.c.h.b16 %v345
    %v617 = vunpack.c.l.b16 %v346
    %v618 = vunpack.c.h.b16 %v346
    %v619 = vunpack.c.l.b16 %v347
    %v620 = vunpack.c.h.b16 %v347
    %v621 = vunpack.c.l.b16 %v348
    %v622 = vunpack.c.h.b16 %v348
    %v623 = vunpack.c.l.b16 %v349
    %v624 = vunpack.c.h.b16 %v349
    %v625 = vunpack.c.l.b16 %v350
    %v626 = vunpack.c.h.b16 %v350
    %v627 = vunpack.c.l.b16 %v351
    %v628 = vunpack.c.h.b16 %v351
    %v629 = vunpack.c.l.b16 %v352
    %v630 = vunpack.c.h.b16 %v352
    %v631 = vunpack.c.l.b16 %v353
    %v632 = vunpack.c.h.b16 %v353
    %v633 = vunpack.c.l.b16 %v354
    %v634 = vunpack.c.h.b16 %v354
    %v635 = vunpack.c.l.b16 %v355
    %v636 = vunpack.c.h.b16 %v355
    %v637 = vunpack.c.l.b16 %v356
    %v638 = vunpack.c.h.b16 %v356
    %v639 = vunpack.c.l.b16 %v357
    %v640 = vunpack.c.h.b16 %v357
    %v641 = vunpack.c.l.b16 %v358
    %v642 = vunpack.c.h.b16 %v358
    %v643 = vunpack.c.l.b16 %v359
    %v644 = vunpack.c.h.b16 %v359
    %v645 = vunpack.c.l.b16 %v360
    %v646 = vunpack.c.h.b16 %v360
    %v647 = vunpack.c.l.b16 %v361
    %v648 = vunpack.c.h.b16 %v361
    %v649 = vunpack.c.l.b16 %v362
    %v650 = vunpack.c.h.b16 %v362
    %v651 = vunpack.c.l.b16 %v363
    %v652 = vunpack.c.h.b16 %v363
    %v653 = vunpack.c.l.b16 %v364
    %v654 = vunpack.c.h.b16 %v364
    %v655 = vunpack.c.l.b16 %v365
    %v656 = vunpack.c.h.b16 %v365
    %v657 = vunpack.c.l.b16 %v366
    %v658 = vunpack.c.h.b16 %v366
    %v659 = vunpack.c.l.b16 %v367
    %v660 = vunpack.c.h.b16 %v367
    %v661 = vunpack.c.l.b16 %v368
    %v662 = vunpack.c.h.b16 %v368
    %v663 = vunpack.c.l.b16 %v369
    %v664 = vunpack.c.h.b16 %v369
    %v665 = vunpack.c.l.b16 %v370
    %v666 = vunpack.c.h.b16 %v370
    %v667 = vunpack.c.l.b16 %v371
    %v668 = vunpack.c.h.b16 %v371
    %v669 = vunpack.c.l.b16 %v372
    %v670 = vunpack.c.h.b16 %v372
    %v671 = vunpack.c.l.b16 %v373
    %v672 = vunpack.c.h.b16 %v373
    %v673 = vunpack.c.l.b16 %v374
    %v674 = vunpack.c.h.b16 %v374
    %v675 = vunpack.c.l.b16 %v375
    %v676 = vunpack.c.h.b16 %v375
    %v677 = vunpack.c.l.b16 %v376
    %v678 = vunpack.c.h.b16 %v376
    %v679 = vunpack.c.l.b16 %v377
    %v680 = vunpack.c.h.b16 %v377
    %v681 = vunpack.c.l.b16 %v378
    %v682 = vunpack.c.h.b16 %v378
    %v683 = vunpack.c.l.b16 %v379
    %v684 = vunpack.c.h.b16 %v379
    %v685 = vunpack.c.l.b16 %v380
    %v686 = vunpack.c.h.b16 %v380
    %v687 = vunpack.c.l.b16 %v381
    %v688 = vunpack.c.h.b16 %v381
    %v689 = vunpack.c.l.b16 %v382
    %v690 = vunpack.c.h.b16 %v382
    %v691 = vunpack.c.l.b16 %v383
    %v692 = vunpack.c.h.b16 %v383
    %v693 = vunpack.c.l.b16 %v384
    %v694 = vunpack.c.h.b16 %v384
    %v695 = vunpack.c.l.b16 %v385
    %v696 = vunpack.c.h.b16 %v385
    %v697 = vunpack.c.l.b16 %v386
    %v698 = vunpack.c.h.b16 %v386
    %v699 = vunpack.c.l.b16 %v387
    %v700 = vunpack.c.h.b16 %v387
    %v701 = vunpack.c.l.b16 %v388
    %v702 = vunpack.c.h.b16 %v388
    %v703 = vunpack.c.l.b16 %v389
    %v704 = vunpack.c.h.b16 %v389
    %v705 = vunpack.c.l.b16 %v390
    %v706 = vunpack.c.h.b16 %v390
    %v707 = vunpack.c.l.b16 %v391
    %v708 = vunpack.c.h.b16 %v391
    %v709 = vunpack.c.l.b16 %v392
    %v710 = vunpack.c.h.b16 %v392
    %v711 = vunpack.c.l.b16 %v393
    %v712 = vunpack.c.h.b16 %v393
    %v713 = vunpack.c.l.b16 %v394
    %v714 = vunpack.c.h.b16 %v394
    %v715 = vunpack.c.l.b16 %v395
    %v716 = vunpack.c.h.b16 %v395
    %v717 = vunpack.c.l.b16 %v396
    %v718 = vunpack.c.h.b16 %v396
    %v719 = vunpack.c.l.b16 %v397
    %v720 = vunpack.c.h.b16 %v397
    %v721 = vunpack.c.l.b16 %v398
    %v722 = vunpack.c.h.b16 %v398
    %v723 = vunpack.c.l.b16 %v399
    %v724 = vunpack.c.h.b16 %v399
    %v725 = vunpack.c.l.b16 %v400
    %v726 = vunpack.c.h.b16 %v400
    %v727 = vunpack.c.l.b16 %v401
    %v728 = vunpack.c.h.b16 %v401
    %v729 = vunpack.c.l.b16 %v402
    %v730 = vunpack.c.h.b16 %v402
    %v731 = vunpack.c.l.b16 %v403
    %v732 = vunpack.c.h.b16 %v403
    %v733 = vunpack.c.l.b16 %v404
    %v734 = vunpack.c.h.b16 %v404
    %v735 = vunpack.c.l.b16 %v405
    %v736 = vunpack.c.h.b16 %v405
    %v737 = vunpack.c.l.b16 %v406
    %v738 = vunpack.c.h.b16 %v406
    %v739 = vunpack.c.l.b16 %v407
    %v740 = vunpack.c.h.b16 %v407
    %v741 = vunpack.c.l.b16 %v408
    %v742 = vunpack.c.h.b16 %v408
    %v743 = vunpack.c.l.b16 %v409
    %v744 = vunpack.c.h.b16 %v409
    %v745 = vunpack.c.l.b16 %v410
    %v746 = vunpack.c.h.b16 %v410
    %v747 = vunpack.c.l.b16 %v411
    %v748 = vunpack.c.h.b16 %v411
    %v749 = vunpack.c.l.b16 %v412
    %v750 = vunpack.c.h.b16 %v412
    %v751 = vunpack.c.l.b16 %v413
    %v752 = vunpack.c.h.b16 %v413
    %v753 = vunpack.c.l.b16 %v414
    %v754 = vunpack.c.h.b16 %v414
    %v755 = vunpack.c.l.b16 %v415
    %v756 = vunpack.c.h.b16 %v415
    %v757 = vunpack.c.l.b16 %v416
    %v758 = vunpack.c.h.b16 %v416
    %v759 = vunpack.c.l.b16 %v417
    %v760 = vunpack.c.h.b16 %v417
    %v761 = vunpack.c.l.b16 %v418
    %v762 = vunpack.c.h.b16 %v418
    %v763 = vunpack.c.l.b16 %v419
    %v764 = vunpack.c.h.b16 %v419
    %v765 = vunpack.c.l.b16 %v420
    %v766 = vunpack.c.h.b16 %v420
    %v767 = vunpack.c.l.b16 %v421
    %v768 = vunpack.c.h.b16 %v421
    %v769 = vunpack.c.l.b16 %v422
    %v770 = vunpack.c.h.b16 %v422
    %v771 = vunpack.c.l.b16 %v423
    %v772 = vunpack.c.h.b16 %v423
    %v773 = vunpack.c.l.b16 %v424
    %v774 = vunpack.c.h.b16 %v424
    %v775 = vunpack.c.l.b16 %v425
    %v776 = vunpack.c.h.b16 %v425
    %v777 = vunpack.c.l.b16 %v426
    %v778 = vunpack.c.h.b16 %v426
    %v779 = vunpack.c.l.b16 %v427
    %v780 = vunpack.c.h.b16 %v427
    %v781 = vunpack.c.l.b16 %v428
    %v782 = vunpack.c.h.b16 %v428
    %v783 = vunpack.c.l.b16 %v429
    %v784 = vunpack.c.h.b16 %v429
    %v785 = vunpack.c.l.b16 %v430
    %v786 = vunpack.c.h.b16 %v430
    %v787 = vunpack.c.l.b16 %v431
    %v788 = vunpack.c.h.b16 %v431
    %v789 = vunpack.c.l.b16 %v432
    %v790 = vunpack.c.h.b16 %v432
    %v791 = vunpack.c.l.b16 %v433
    %v792 = vunpack.c.h.b16 %v433
    %v793 = vunpack.c.l.b16 %v434
    %v794 = vunpack.c.h.b16 %v434
    %v795 = vunpack.c.l.b16 %v435
    %v796 = vunpack.c.h.b16 %v435
    %v797 = vunpack.c.l.b16 %v436
    %v798 = vunpack.c.h.b16 %v436
    %v799 = vunpack.c.l.b16 %v437
    %v800 = vunpack.c.h.b16 %v437
    %v801 = vunpack.c.l.b16 %v438
    %v802 = vunpack.c.h.b16 %v438
    %v803 = vunpack.c.l.b16 %v439
    %v804 = vunpack.c.h.b16 %v439
    %v805 = vunpack.c.l.b16 %v440
    %v806 = vunpack.c.h.b16 %v440
    %v807 = vunpack.c.l.b16 %v441
    %v808 = vunpack.c.h.b16 %v441
    %v809 = vunpack.c.l.b16 %v442
    %v810 = vunpack.c.h.b16 %v442
    %v811 = vunpack.c.l.b16 %v443
    %v812 = vunpack.c.h.b16 %v443
    %v813 = vunpack.c.l.b16 %v444
    %v814 = vunpack.c.h.b16 %v444
    %v815 = vunpack.c.l.b16 %v445
    %v816 = vunpack.c.h.b16 %v445
    %v817 = vunpack.c.l.b16 %v446
    %v818 = vunpack.c.h.b16 %v446
    %v819 = vunpack.c.l.b16 %v447
    %v820 = vunpack.c.h.b16 %v447
    %v821 = vunpack.c.l.b16 %v448
    %v822 = vunpack.c.h.b16 %v448
    %v823 = vunpack.c.l.b16 %v449
    %v824 = vunpack.c.h.b16 %v449
    %v825 = vunpack.c.l.b16 %v450
    %v826 = vunpack.c.h.b16 %v450
    %v827 = vunpack.c.l.b16 %v451
    %v828 = vunpack.c.h.b16 %v451
    %v829 = vunpack.c.l.b16 %v452
    %v830 = vunpack.c.h.b16 %v452
    %v831 = vunpack.c.l.b16 %v453
    %v832 = vunpack.c.h.b16 %v453
    %v833 = vunpack.c.l.b16 %v454
    %v834 = vunpack.c.h.b16 %v454
    %v835 = vunpack.c.l.b16 %v455
    %v836 = vunpack.c.h.b16 %v455
    %v837 = vunpack.c.l.b16 %v456
    %v838 = vunpack.c.h.b16 %v456
    %v839 = vunpack.c.l.b16 %v457
    %v840 = vunpack.c.h.b16 %v457
    %v841 = vunpack.c.l.b16 %v458
    %v842 = vunpack.c.h.b16 %v458
    %v843 = vpack.c.b16 %v591, %v587
    %v844 = vpack.c.b16 %v592, %v588
    %v845 = vpack.c.b16 %v593, %v589
    %v846 = vpack.c.b16 %v594, %v590
    %v847 = vpack.c.b16 %v599, %v595
    %v848 = vpack.c.b16 %v600, %v596
    %v849 = vpack.c.b16 %v601, %v597
    %v850 = vpack.c.b16 %v602, %v598
    %v851 = vpack.c.b16 %v607, %v603
    %v852 = vpack.c.b16 %v608, %v604
    %v853 = vpack.c.b16 %v609, %v605
    %v854 = vpack.c.b16 %v610, %v606
    %v855 = vpack.c.b16 %v615, %v611
    %v856 = vpack.c.b16 %v616, %v612
    %v857 = vpack.c.b16 %v617, %v613
    %v858 = vpack.c.b16 %v618, %v614
    %v859 = vpack.c.b16 %v623, %v619
    %v860 = vpack.c.b16 %v624, %v620
    %v861 = vpack.c.b16 %v625, %v621
    %v862 = vpack.c.b16 %v626, %v622
    %v863 = vpack.c.b16 %v631, %v627
    %v864 = vpack.c.b16 %v632, %v628
    %v865 = vpack.c.b16 %v633, %v629
    %v866 = vpack.c.b16 %v634, %v630
    %v867 = vpack.c.b16 %v639, %v635
    %v868 = vpack.c.b16 %v640, %v636
    %v869 = vpack.c.b16 %v641, %v637
    %v870 = vpack.c.b16 %v642, %v638
    %v871 = vpack.c.b16 %v647, %v643
    %v872 = vpack.c.b16 %v648, %v644
    %v873 = vpack.c.b16 %v649, %v645
    %v874 = vpack.c.b16 %v650, %v646
    %v875 = vpack.c.b16 %v655, %v651
    %v876 = vpack.c.b16 %v656, %v652
    %v877 = vpack.c.b16 %v657, %v653
    %v878 = vpack.c.b16 %v658, %v654
    %v879 = vpack.c.b16 %v663, %v659
    %v880 = vpack.c.b16 %v664, %v660
    %v881 = vpack.c.b16 %v665, %v661
    %v882 = vpack.c.b16 %v666, %v662
    %v883 = vpack.c.b16 %v671, %v667
    %v884 = vpack.c.b16 %v672, %v668
    %v885 = vpack.c.b16 %v673, %v669
    %v886 = vpack.c.b16 %v674, %v670
    %v887 = vpack.c.b16 %v679, %v675
    %v888 = vpack.c.b16 %v680, %v676
    %v889 = vpack.c.b16 %v681, %v677
    %v890 = vpack.c.b16 %v682, %v678
    %v891 = vpack.c.b16 %v687, %v683
    %v892 = vpack.c.b16 %v688, %v684
    %v893 = vpack.c.b16 %v689, %v685
    %v894 = vpack.c.b16 %v690, %v686
    %v895 = vpack.c.b16 %v695, %v691
    %v896 = vpack.c.b16 %v696, %v692
    %v897 = vpack.c.b16 %v697, %v693
    %v898 = vpack.c.b16 %v698, %v694
    %v899 = vpack.c.b16 %v703, %v699
    %v900 = vpack.c.b16 %v704, %v700
    %v901 = vpack.c.b16 %v705, %v701
    %v902 = vpack.c.b16 %v706, %v702
    %v903 = vpack.c.b16 %v711, %v707
    %v904 = vpack.c.b16 %v712, %v708
    %v905 = vpack.c.b16 %v713, %v709
    %v906 = vpack.c.b16 %v714, %v710
    %v907 = vpack.c.b16 %v719, %v715
    %v908 = vpack.c.b16 %v720, %v716
    %v909 = vpack.c.b16 %v721, %v717
    %v910 = vpack.c.b16 %v722, %v718
    %v911 = vpack.c.b16 %v727, %v723
    %v912 = vpack.c.b16 %v728, %v724
    %v913 = vpack.c.b16 %v729, %v725
    %v914 = vpack.c.b16 %v730, %v726
    %v915 = vpack.c.b16 %v735, %v731
    %v916 = vpack.c.b16 %v736, %v732
    %v917 = vpack.c.b16 %v737, %v733
    %v918 = vpack.c.b16 %v738, %v734
    %v919 = vpack.c.b16 %v743, %v739
    %v920 = vpack.c.b16 %v744, %v740
    %v921 = vpack.c.b16 %v745, %v741
    %v922 = vpack.c.b16 %v746, %v742
    %v923 = vpack.c.b16 %v751, %v747
    %v924 = vpack.c.b16 %v752, %v748
    %v925 = vpack.c.b16 %v753, %v749
    %v926 = vpack.c.b16 %v754, %v750
    %v927 = vpack.c.b16 %v759, %v755
    %v928 = vpack.c.b16 %v760, %v756
    %v929 = vpack.c.b16 %v761, %v757
    %v930 = vpack.c.b16 %v762, %v758
    %v931 = vpack.c.b16 %v767, %v763
    %v932 = vpack.c.b16 %v768, %v764
    %v933 = vpack.c.b16 %v769, %v765
    %v934 = vpack.c.b16 %v770, %v766
    %v935 = vpack.c.b16 %v775, %v771
    %v936 = vpack.c.b16 %v776, %v772
    %v937 = vpack.c.b16 %v777, %v773
    %v938 = vpack.c.b16 %v778, %v774
    %v939 = vpack.c.b16 %v783, %v779
    %v940 = vpack.c.b16 %v784, %v780
    %v941 = vpack.c.b16 %v785, %v781
    %v942 = vpack.c.b16 %v786, %v782
    %v943 = vpack.c.b16 %v791, %v787
    %v944 = vpack.c.b16 %v792, %v788
    %v945 = vpack.c.b16 %v793, %v789
    %v946 = vpack.c.b16 %v794, %v790
    %v947 = vpack.c.b16 %v799, %v795
    %v948 = vpack.c.b16 %v800, %v796
    %v949 = vpack.c.b16 %v801, %v797
    %v950 = vpack.c.b16 %v802, %v798
    %v951 = vpack.c.b16 %v807, %v803
    %v952 = vpack.c.b16 %v808, %v804
    %v953 = vpack.c.b16 %v809, %v805
    %v954 = vpack.c.b16 %v810, %v806
    %v955 = vpack.c.b16 %v815, %v811
    %v956 = vpack.c.b16 %v816, %v812
    %v957 = vpack.c.b16 %v817, %v813
    %v958 = vpack.c.b16 %v818, %v814
    %v959 = vpack.c.b16 %v823, %v819
    %v960 = vpack.c.b16 %v824, %v820
    %v961 = vpack.c.b16 %v825, %v821
    %v962 = vpack.c.b16 %v826, %v822
    %v963 = vpack.c.b16 %v831, %v827
    %v964 = vpack.c.b16 %v832, %v828
    %v965 = vpack.c.b16 %v833, %v829
    %v966 = vpack.c.b16 %v834, %v830
    %v967 = vpack.c.b16 %v839, %v835
    %v968 = vpack.c.b16 %v840, %v836
    %v969 = vpack.c.b16 %v841, %v837
    %v970 = vpack.c.b16 %v842, %v838
    %1099 = vmatprep.subr.bf16.mxu0 %v844
    %1100 = vmatpush1.bf16.msra.mxu0 %v843
    %1101 = vmatprep.subr.bf16.mxu0 %v848
    %1102 = vmatpush1.bf16.msra.mxu0 %v847
    %1103 = vmatprep.subr.bf16.mxu0 %v852
    %1104 = vmatpush1.bf16.msra.mxu0 %v851
    %1105 = vmatprep.subr.bf16.mxu0 %v856
    %1106 = vmatpush1.bf16.msra.mxu0 %v855
    %1107 = vmatprep.subr.bf16.mxu0 %v860
    %1108 = vmatpush1.bf16.msra.mxu0 %v859
    %1109 = vmatprep.subr.bf16.mxu0 %v864
    %1110 = vmatpush1.bf16.msra.mxu0 %v863
    %1111 = vmatprep.subr.bf16.mxu0 %v868
    %1112 = vmatpush1.bf16.msra.mxu0 %v867
    %1113 = vmatprep.subr.bf16.mxu0 %v872
    %1114 = vmatpush1.bf16.msra.mxu0 %v871
    %1115 = vmatprep.subr.bf16.mxu0 %v876
    %1116 = vmatpush1.bf16.msra.mxu0 %v875
    %1117 = vmatprep.subr.bf16.mxu0 %v880
    %1118 = vmatpush1.bf16.msra.mxu0 %v879
    %1119 = vmatprep.subr.bf16.mxu0 %v884
    %1120 = vmatpush1.bf16.msra.mxu0 %v883
    %1121 = vmatprep.subr.bf16.mxu0 %v888
    %1122 = vmatpush1.bf16.msra.mxu0 %v887
    %1123 = vmatprep.subr.bf16.mxu0 %v892
    %1124 = vmatpush1.bf16.msra.mxu0 %v891
    %1125 = vmatprep.subr.bf16.mxu0 %v896
    %1126 = vmatpush1.bf16.msra.mxu0 %v895
    %1127 = vmatprep.subr.bf16.mxu0 %v900
    %1128 = vmatpush1.bf16.msra.mxu0 %v899
    %1129 = vmatprep.subr.bf16.mxu0 %v904
    %1130 = vmatpush1.bf16.msra.mxu0 %v903
    %1131 = vmatprep.mubr.bf16.mxu0 %v319
    %1132 = vmatmul.mubr.bf16.gmra.mrb[0].mxu0 %v318
    %v1133 = vpop.f32.mrb[0].mxu0
    %v1134 = vadd.f32 0.0, %v1133
    %v1135 = vpop.f32.mrb[0].mxu0
    %v1136 = vadd.f32 0.0, %v1135
    %v1137 = vpop.f32.mrb[0].mxu0
    %v1138 = vadd.f32 0.0, %v1137
    %v1139 = vpop.f32.mrb[0].mxu0
    %v1140 = vadd.f32 0.0, %v1139
    %1141 = vmatprep.mubr.bf16.mxu0 %v323
    %1142 = vmatmul.mubr.bf16.gmra.mrb[0].mxu0 %v322
    %v1143 = vpop.f32.mrb[0].mxu0
    %v1144 = vpop.f32.mrb[0].mxu0
    %v1145 = vpop.f32.mrb[0].mxu0
    %v1146 = vadd.f32 0.0, %v1145
    %v1147 = vpop.f32.mrb[0].mxu0
    %v1148 = vadd.f32 0.0, %v1147
    %1149 = vmatprep.mubr.bf16.mxu0 %v327
    %1150 = vmatmul.mubr.bf16.gmra.mrb[0].mxu0 %v326
    %v1151 = vpop.f32.mrb[0].mxu0
    %v1152 = vadd.f32 0.0, %v1151
    %v1153 = vpop.f32.mrb[0].mxu0
    %v1154 = vadd.f32 0.0, %v1153
    %v1155 = vpop.f32.mrb[0].mxu0
    %v1156 = vpop.f32.mrb[0].mxu0
    %1157 = vdwg.mxu0
    %1158 = vmatprep.subr.bf16.mxu0 %v908
    %1159 = vmatpush1.bf16.msra.mxu0 %v907
    %1160 = vmatprep.subr.bf16.mxu0 %v912
    %1161 = vmatpush1.bf16.msra.mxu0 %v911
    %1162 = vmatprep.subr.bf16.mxu0 %v916
    %1163 = vmatpush1.bf16.msra.mxu0 %v915
    %1164 = vmatprep.subr.bf16.mxu0 %v920
    %1165 = vmatpush1.bf16.msra.mxu0 %v919
    %1166 = vmatprep.subr.bf16.mxu0 %v924
    %1167 = vmatpush1.bf16.msra.mxu0 %v923
    %1168 = vmatprep.subr.bf16.mxu0 %v928
    %1169 = vmatpush1.bf16.msra.mxu0 %v927
    %1170 = vmatprep.subr.bf16.mxu0 %v932
    %1171 = vmatpush1.bf16.msra.mxu0 %v931
    %1172 = vmatprep.subr.bf16.mxu0 %v936
    %1173 = vmatpush1.bf16.msra.mxu0 %v935
    %1174 = vmatprep.subr.bf16.mxu0 %v940
    %1175 = vmatpush1.bf16.msra.mxu0 %v939
    %1176 = vmatprep.subr.bf16.mxu0 %v944
    %1177 = vmatpush1.bf16.msra.mxu0 %v943
    %1178 = vmatprep.subr.bf16.mxu0 %v948
    %1179 = vmatpush1.bf16.msra.mxu0 %v947
    %1180 = vmatprep.subr.bf16.mxu0 %v952
    %1181 = vmatpush1.bf16.msra.mxu0 %v951
    %1182 = vmatprep.subr.bf16.mxu0 %v956
    %1183 = vmatpush1.bf16.msra.mxu0 %v955
    %1184 = vmatprep.subr.bf16.mxu0 %v960
    %1185 = vmatpush1.bf16.msra.mxu0 %v959
    %1186 = vmatprep.subr.bf16.mxu0 %v964
    %1187 = vmatpush1.bf16.msra.mxu0 %v963
    %1188 = vmatprep.subr.bf16.mxu0 %v968
    %1189 = vmatpush1.bf16.msra.mxu0 %v967
    %1190 = vmatprep.mubr.bf16.mxu0 %v321
    %1191 = vmatmul.mubr.bf16.gmra.mrb[0].mxu0 %v320
    %v1192 = vpop.f32.mrb[0].mxu0
    %v1193 = vadd.f32 %v1134, %v1192
    %v1194 = vpop.f32.mrb[0].mxu0
    %v1195 = vadd.f32 %v1136, %v1194
    %v1196 = vpop.f32.mrb[0].mxu0
    %v1197 = vadd.f32 %v1138, %v1196
    %v1198 = vpop.f32.mrb[0].mxu0
    %v1199 = vadd.f32 %v1140, %v1198
    %1200 = vmatprep.mubr.bf16.mxu0 %v325
    %1201 = vmatmul.mubr.bf16.gmra.mrb[0].mxu0 %v324
    %v1202 = vpop.f32.mrb[0].mxu0
    %v1203 = vpop.f32.mrb[0].mxu0
    %v1204 = vpop.f32.mrb[0].mxu0
    %v1205 = vadd.f32 %v1146, %v1204
    %v1206 = vpop.f32.mrb[0].mxu0
    %v1207 = vadd.f32 %v1148, %v1206
    %1208 = vmatprep.mubr.bf16.mxu0 %v329
    %1209 = vmatmul.mubr.bf16.gmra.mrb[0].mxu0 %v328
    %v1210 = vpop.f32.mrb[0].mxu0
    %v1211 = vadd.f32 %v1152, %v1210
    %v1212 = vpop.f32.mrb[0].mxu0
    %v1213 = vadd.f32 %v1154, %v1212
    %v1214 = vpop.f32.mrb[0].mxu0
    %v1215 = vpop.f32.mrb[0].mxu0
    %1216 = vdwg.mxu0
    %1217 = vmatprep.subr.bf16.mxu0 %v846
    %1218 = vmatpush1.bf16.msra.mxu0 %v845
    %1219 = vmatprep.subr.bf16.mxu0 %v850
    %1220 = vmatpush1.bf16.msra.mxu0 %v849
    %1221 = vmatprep.subr.bf16.mxu0 %v854
    %1222 = vmatpush1.bf16.msra.mxu0 %v853
    %1223 = vmatprep.subr.bf16.mxu0 %v858
    %1224 = vmatpush1.bf16.msra.mxu0 %v857
    %1225 = vmatprep.subr.bf16.mxu0 %v862
    %1226 = vmatpush1.bf16.msra.mxu0 %v861
    %1227 = vmatprep.subr.bf16.mxu0 %v866
    %1228 = vmatpush1.bf16.msra.mxu0 %v865
    %1229 = vmatprep.subr.bf16.mxu0 %v870
    %1230 = vmatpush1.bf16.msra.mxu0 %v869
    %1231 = vmatprep.subr.bf16.mxu0 %v874
    %1232 = vmatpush1.bf16.msra.mxu0 %v873
    %1233 = vmatprep.subr.bf16.mxu0 %v878
    %1234 = vmatpush1.bf16.msra.mxu0 %v877
    %1235 = vmatprep.subr.bf16.mxu0 %v882
    %1236 = vmatpush1.bf16.msra.mxu0 %v881
    %1237 = vmatprep.subr.bf16.mxu0 %v886
    %1238 = vmatpush1.bf16.msra.mxu0 %v885
    %1239 = vmatprep.subr.bf16.mxu0 %v890
    %1240 = vmatpush1.bf16.msra.mxu0 %v889
    %1241 = vmatprep.subr.bf16.mxu0 %v894
    %1242 = vmatpush1.bf16.msra.mxu0 %v893
    %1243 = vmatprep.subr.bf16.mxu0 %v898
    %1244 = vmatpush1.bf16.msra.mxu0 %v897
    %1245 = vmatprep.subr.bf16.mxu0 %v902
    %1246 = vmatpush1.bf16.msra.mxu0 %v901
    %1247 = vmatprep.subr.bf16.mxu0 %v906
    %1248 = vmatpush1.bf16.msra.mxu0 %v905
    %1249 = vmatprep.mubr.bf16.mxu0 %v319
    %1250 = vmatmul.mubr.bf16.gmra.mrb[0].mxu0 %v318
    %v1251 = vpop.f32.mrb[0].mxu0
    %v1252 = vadd.f32 0.0, %v1251
    %v1253 = vpop.f32.mrb[0].mxu0
    %v1254 = vadd.f32 0.0, %v1253
    %v1255 = vpop.f32.mrb[0].mxu0
    %v1256 = vadd.f32 0.0, %v1255
    %v1257 = vpop.f32.mrb[0].mxu0
    %v1258 = vadd.f32 0.0, %v1257
    %1259 = vmatprep.mubr.bf16.mxu0 %v323
    %1260 = vmatmul.mubr.bf16.gmra.mrb[0].mxu0 %v322
    %v1261 = vpop.f32.mrb[0].mxu0
    %v1262 = vpop.f32.mrb[0].mxu0
    %v1263 = vpop.f32.mrb[0].mxu0
    %v1264 = vadd.f32 0.0, %v1263
    %v1265 = vpop.f32.mrb[0].mxu0
    %v1266 = vadd.f32 0.0, %v1265
    %1267 = vmatprep.mubr.bf16.mxu0 %v327
    %1268 = vmatmul.mubr.bf16.gmra.mrb[0].mxu0 %v326
    %v1269 = vpop.f32.mrb[0].mxu0
    %v1270 = vadd.f32 0.0, %v1269
    %v1271 = vpop.f32.mrb[0].mxu0
    %v1272 = vadd.f32 0.0, %v1271
    %v1273 = vpop.f32.mrb[0].mxu0
    %v1274 = vpop.f32.mrb[0].mxu0
    %1275 = vdwg.mxu0
    %1276 = vmatprep.subr.bf16.mxu0 %v910
    %1277 = vmatpush1.bf16.msra.mxu0 %v909
    %1278 = vmatprep.subr.bf16.mxu0 %v914
    %1279 = vmatpush1.bf16.msra.mxu0 %v913
    %1280 = vmatprep.subr.bf16.mxu0 %v918
    %1281 = vmatpush1.bf16.msra.mxu0 %v917
    %1282 = vmatprep.subr.bf16.mxu0 %v922
    %1283 = vmatpush1.bf16.msra.mxu0 %v921
    %1284 = vmatprep.subr.bf16.mxu0 %v926
    %1285 = vmatpush1.bf16.msra.mxu0 %v925
    %1286 = vmatprep.subr.bf16.mxu0 %v930
    %1287 = vmatpush1.bf16.msra.mxu0 %v929
    %1288 = vmatprep.subr.bf16.mxu0 %v934
    %1289 = vmatpush1.bf16.msra.mxu0 %v933
    %1290 = vmatprep.subr.bf16.mxu0 %v938
    %1291 = vmatpush1.bf16.msra.mxu0 %v937
    %1292 = vmatprep.subr.bf16.mxu0 %v942
    %1293 = vmatpush1.bf16.msra.mxu0 %v941
    %1294 = vmatprep.subr.bf16.mxu0 %v946
    %1295 = vmatpush1.bf16.msra.mxu0 %v945
    %1296 = vmatprep.subr.bf16.mxu0 %v950
    %1297 = vmatpush1.bf16.msra.mxu0 %v949
    %1298 = vmatprep.subr.bf16.mxu0 %v954
    %1299 = vmatpush1.bf16.msra.mxu0 %v953
    %1300 = vmatprep.subr.bf16.mxu0 %v958
    %1301 = vmatpush1.bf16.msra.mxu0 %v957
    %1302 = vmatprep.subr.bf16.mxu0 %v962
    %1303 = vmatpush1.bf16.msra.mxu0 %v961
    %1304 = vmatprep.subr.bf16.mxu0 %v966
    %1305 = vmatpush1.bf16.msra.mxu0 %v965
    %1306 = vmatprep.subr.bf16.mxu0 %v970
    %1307 = vmatpush1.bf16.msra.mxu0 %v969
    %1308 = vmatprep.mubr.bf16.mxu0 %v321
    %1309 = vmatmul.mubr.bf16.gmra.mrb[0].mxu0 %v320
    %v1310 = vpop.f32.mrb[0].mxu0
    %v1311 = vadd.f32 %v1252, %v1310
    %v1312 = vpop.f32.mrb[0].mxu0
    %v1313 = vadd.f32 %v1254, %v1312
    %v1314 = vpop.f32.mrb[0].mxu0
    %v1315 = vadd.f32 %v1256, %v1314
    %v1316 = vpop.f32.mrb[0].mxu0
    %v1317 = vadd.f32 %v1258, %v1316
    %1318 = vmatprep.mubr.bf16.mxu0 %v325
    %1319 = vmatmul.mubr.bf16.gmra.mrb[0].mxu0 %v324
    %v1320 = vpop.f32.mrb[0].mxu0
    %v1321 = vpop.f32.mrb[0].mxu0
    %v1322 = vpop.f32.mrb[0].mxu0
    %v1323 = vadd.f32 %v1264, %v1322
    %v1324 = vpop.f32.mrb[0].mxu0
    %v1325 = vadd.f32 %v1266, %v1324
    %1326 = vmatprep.mubr.bf16.mxu0 %v329
    %1327 = vmatmul.mubr.bf16.gmra.mrb[0].mxu0 %v328
    %v1328 = vpop.f32.mrb[0].mxu0
    %v1329 = vadd.f32 %v1270, %v1328
    %v1330 = vpop.f32.mrb[0].mxu0
    %v1331 = vadd.f32 %v1272, %v1330
    %v1332 = vpop.f32.mrb[0].mxu0
    %v1333 = vpop.f32.mrb[0].mxu0
    %1334 = vdwg.mxu0
    %vm1335 = vsmask.f32 4352
    %v1337 = vshrl.u32 %v174, 16
    %v1339 = vrot.slane %v1337, 3
    %v1340 = vshll.u32 %v174, 16
    %v1342 = vrot.slane %v1340, 4
    %v1343 = vor.u32 %v1339, %v1342
    %v1345 = vshrl.u32 %v178, 16
    %v1347 = vrot.slane %v1345, 3
    %v1348 = vshll.u32 %v178, 16
    %v1350 = vrot.slane %v1348, 4
    %v1351 = vor.u32 %v1347, %v1350
    %v1352 = vsel %vm1335, %v1343, %v1351
    %v1354 = vshrl.u32 %v175, 16
    %v1356 = vrot.slane %v1354, 3
    %v1357 = vshll.u32 %v175, 16
    %v1359 = vrot.slane %v1357, 4
    %v1360 = vor.u32 %v1356, %v1359
    %v1362 = vshrl.u32 %v179, 16
    %v1364 = vrot.slane %v1362, 3
    %v1365 = vshll.u32 %v179, 16
    %v1367 = vrot.slane %v1365, 4
    %v1368 = vor.u32 %v1364, %v1367
    %v1369 = vsel %vm1335, %v1360, %v1368
    %v1371 = vshrl.u32 %v176, 16
    %v1373 = vrot.slane %v1371, 3
    %v1374 = vshll.u32 %v176, 16
    %v1376 = vrot.slane %v1374, 4
    %v1377 = vor.u32 %v1373, %v1376
    %v1379 = vshrl.u32 %v180, 16
    %v1381 = vrot.slane %v1379, 3
    %v1382 = vshll.u32 %v180, 16
    %v1384 = vrot.slane %v1382, 4
    %v1385 = vor.u32 %v1381, %v1384
    %v1386 = vsel %vm1335, %v1377, %v1385
    %v1388 = vshrl.u32 %v177, 16
    %v1390 = vrot.slane %v1388, 3
    %v1391 = vshll.u32 %v177, 16
    %v1393 = vrot.slane %v1391, 4
    %v1394 = vor.u32 %v1390, %v1393
    %v1396 = vshrl.u32 %v181, 16
    %v1398 = vrot.slane %v1396, 3
    %v1399 = vshll.u32 %v181, 16
    %v1401 = vrot.slane %v1399, 4
    %v1402 = vor.u32 %v1398, %v1401
    %v1403 = vsel %vm1335, %v1394, %v1402
    %v1405 = vshrl.u32 %v182, 16
    %v1407 = vrot.slane %v1405, 3
    %v1408 = vshll.u32 %v182, 16
    %v1410 = vrot.slane %v1408, 4
    %v1411 = vor.u32 %v1407, %v1410
    %v1412 = vsel %vm1335, %v1351, %v1411
    %v1414 = vshrl.u32 %v183, 16
    %v1416 = vrot.slane %v1414, 3
    %v1417 = vshll.u32 %v183, 16
    %v1419 = vrot.slane %v1417, 4
    %v1420 = vor.u32 %v1416, %v1419
    %v1421 = vsel %vm1335, %v1368, %v1420
    %v1423 = vshrl.u32 %v184, 16
    %v1425 = vrot.slane %v1423, 3
    %v1426 = vshll.u32 %v184, 16
    %v1428 = vrot.slane %v1426, 4
    %v1429 = vor.u32 %v1425, %v1428
    %v1430 = vsel %vm1335, %v1385, %v1429
    %v1432 = vshrl.u32 %v185, 16
    %v1434 = vrot.slane %v1432, 3
    %v1435 = vshll.u32 %v185, 16
    %v1437 = vrot.slane %v1435, 4
    %v1438 = vor.u32 %v1434, %v1437
    %v1439 = vsel %vm1335, %v1402, %v1438
    %v1580 = vunpack.c.l.b16 %v186
    %v1581 = vunpack.c.h.b16 %v186
    %v1582 = vunpack.c.l.b16 %v187
    %v1583 = vunpack.c.h.b16 %v187
    %v1584 = vunpack.c.l.b16 %v188
    %v1585 = vunpack.c.h.b16 %v188
    %v1586 = vunpack.c.l.b16 %v189
    %v1587 = vunpack.c.h.b16 %v189
    %v1588 = vunpack.c.l.b16 %v190
    %v1589 = vunpack.c.h.b16 %v190
    %v1590 = vunpack.c.l.b16 %v191
    %v1591 = vunpack.c.h.b16 %v191
    %v1592 = vunpack.c.l.b16 %v192
    %v1593 = vunpack.c.h.b16 %v192
    %v1594 = vunpack.c.l.b16 %v193
    %v1595 = vunpack.c.h.b16 %v193
    %v1596 = vunpack.c.l.b16 %v194
    %v1597 = vunpack.c.h.b16 %v194
    %v1598 = vunpack.c.l.b16 %v195
    %v1599 = vunpack.c.h.b16 %v195
    %v1600 = vunpack.c.l.b16 %v196
    %v1601 = vunpack.c.h.b16 %v196
    %v1602 = vunpack.c.l.b16 %v197
    %v1603 = vunpack.c.h.b16 %v197
    %v1604 = vunpack.c.l.b16 %v198
    %v1605 = vunpack.c.h.b16 %v198
    %v1606 = vunpack.c.l.b16 %v199
    %v1607 = vunpack.c.h.b16 %v199
    %v1608 = vunpack.c.l.b16 %v200
    %v1609 = vunpack.c.h.b16 %v200
    %v1610 = vunpack.c.l.b16 %v201
    %v1611 = vunpack.c.h.b16 %v201
    %v1612 = vunpack.c.l.b16 %v202
    %v1613 = vunpack.c.h.b16 %v202
    %v1614 = vunpack.c.l.b16 %v203
    %v1615 = vunpack.c.h.b16 %v203
    %v1616 = vunpack.c.l.b16 %v204
    %v1617 = vunpack.c.h.b16 %v204
    %v1618 = vunpack.c.l.b16 %v205
    %v1619 = vunpack.c.h.b16 %v205
    %v1620 = vunpack.c.l.b16 %v206
    %v1621 = vunpack.c.h.b16 %v206
    %v1622 = vunpack.c.l.b16 %v207
    %v1623 = vunpack.c.h.b16 %v207
    %v1624 = vunpack.c.l.b16 %v208
    %v1625 = vunpack.c.h.b16 %v208
    %v1626 = vunpack.c.l.b16 %v209
    %v1627 = vunpack.c.h.b16 %v209
    %v1628 = vunpack.c.l.b16 %v210
    %v1629 = vunpack.c.h.b16 %v210
    %v1630 = vunpack.c.l.b16 %v211
    %v1631 = vunpack.c.h.b16 %v211
    %v1632 = vunpack.c.l.b16 %v212
    %v1633 = vunpack.c.h.b16 %v212
    %v1634 = vunpack.c.l.b16 %v213
    %v1635 = vunpack.c.h.b16 %v213
    %v1636 = vunpack.c.l.b16 %v214
    %v1637 = vunpack.c.h.b16 %v214
    %v1638 = vunpack.c.l.b16 %v215
    %v1639 = vunpack.c.h.b16 %v215
    %v1640 = vunpack.c.l.b16 %v216
    %v1641 = vunpack.c.h.b16 %v216
    %v1642 = vunpack.c.l.b16 %v217
    %v1643 = vunpack.c.h.b16 %v217
    %v1644 = vunpack.c.l.b16 %v218
    %v1645 = vunpack.c.h.b16 %v218
    %v1646 = vunpack.c.l.b16 %v219
    %v1647 = vunpack.c.h.b16 %v219
    %v1648 = vunpack.c.l.b16 %v220
    %v1649 = vunpack.c.h.b16 %v220
    %v1650 = vunpack.c.l.b16 %v221
    %v1651 = vunpack.c.h.b16 %v221
    %v1652 = vunpack.c.l.b16 %v222
    %v1653 = vunpack.c.h.b16 %v222
    %v1654 = vunpack.c.l.b16 %v223
    %v1655 = vunpack.c.h.b16 %v223
    %v1656 = vunpack.c.l.b16 %v224
    %v1657 = vunpack.c.h.b16 %v224
    %v1658 = vunpack.c.l.b16 %v225
    %v1659 = vunpack.c.h.b16 %v225
    %v1660 = vunpack.c.l.b16 %v226
    %v1661 = vunpack.c.h.b16 %v226
    %v1662 = vunpack.c.l.b16 %v227
    %v1663 = vunpack.c.h.b16 %v227
    %v1664 = vunpack.c.l.b16 %v228
    %v1665 = vunpack.c.h.b16 %v228
    %v1666 = vunpack.c.l.b16 %v229
    %v1667 = vunpack.c.h.b16 %v229
    %v1668 = vunpack.c.l.b16 %v230
    %v1669 = vunpack.c.h.b16 %v230
    %v1670 = vunpack.c.l.b16 %v231
    %v1671 = vunpack.c.h.b16 %v231
    %v1672 = vunpack.c.l.b16 %v232
    %v1673 = vunpack.c.h.b16 %v232
    %v1674 = vunpack.c.l.b16 %v233
    %v1675 = vunpack.c.h.b16 %v233
    %v1676 = vunpack.c.l.b16 %v234
    %v1677 = vunpack.c.h.b16 %v234
    %v1678 = vunpack.c.l.b16 %v235
    %v1679 = vunpack.c.h.b16 %v235
    %v1680 = vunpack.c.l.b16 %v236
    %v1681 = vunpack.c.h.b16 %v236
    %v1682 = vunpack.c.l.b16 %v237
    %v1683 = vunpack.c.h.b16 %v237
    %v1684 = vunpack.c.l.b16 %v238
    %v1685 = vunpack.c.h.b16 %v238
    %v1686 = vunpack.c.l.b16 %v239
    %v1687 = vunpack.c.h.b16 %v239
    %v1688 = vunpack.c.l.b16 %v240
    %v1689 = vunpack.c.h.b16 %v240
    %v1690 = vunpack.c.l.b16 %v241
    %v1691 = vunpack.c.h.b16 %v241
    %v1692 = vunpack.c.l.b16 %v242
    %v1693 = vunpack.c.h.b16 %v242
    %v1694 = vunpack.c.l.b16 %v243
    %v1695 = vunpack.c.h.b16 %v243
    %v1696 = vunpack.c.l.b16 %v244
    %v1697 = vunpack.c.h.b16 %v244
    %v1698 = vunpack.c.l.b16 %v245
    %v1699 = vunpack.c.h.b16 %v245
    %v1700 = vunpack.c.l.b16 %v246
    %v1701 = vunpack.c.h.b16 %v246
    %v1702 = vunpack.c.l.b16 %v247
    %v1703 = vunpack.c.h.b16 %v247
    %v1704 = vunpack.c.l.b16 %v248
    %v1705 = vunpack.c.h.b16 %v248
    %v1706 = vunpack.c.l.b16 %v249
    %v1707 = vunpack.c.h.b16 %v249
    %v1708 = vunpack.c.l.b16 %v250
    %v1709 = vunpack.c.h.b16 %v250
    %v1710 = vunpack.c.l.b16 %v251
    %v1711 = vunpack.c.h.b16 %v251
    %v1712 = vunpack.c.l.b16 %v252
    %v1713 = vunpack.c.h.b16 %v252
    %v1714 = vunpack.c.l.b16 %v253
    %v1715 = vunpack.c.h.b16 %v253
    %v1716 = vunpack.c.l.b16 %v254
    %v1717 = vunpack.c.h.b16 %v254
    %v1718 = vunpack.c.l.b16 %v255
    %v1719 = vunpack.c.h.b16 %v255
    %v1720 = vunpack.c.l.b16 %v256
    %v1721 = vunpack.c.h.b16 %v256
    %v1722 = vunpack.c.l.b16 %v257
    %v1723 = vunpack.c.h.b16 %v257
    %v1724 = vunpack.c.l.b16 %v258
    %v1725 = vunpack.c.h.b16 %v258
    %v1726 = vunpack.c.l.b16 %v259
    %v1727 = vunpack.c.h.b16 %v259
    %v1728 = vunpack.c.l.b16 %v260
    %v1729 = vunpack.c.h.b16 %v260
    %v1730 = vunpack.c.l.b16 %v261
    %v1731 = vunpack.c.h.b16 %v261
    %v1732 = vunpack.c.l.b16 %v262
    %v1733 = vunpack.c.h.b16 %v262
    %v1734 = vunpack.c.l.b16 %v263
    %v1735 = vunpack.c.h.b16 %v263
    %v1736 = vunpack.c.l.b16 %v264
    %v1737 = vunpack.c.h.b16 %v264
    %v1738 = vunpack.c.l.b16 %v265
    %v1739 = vunpack.c.h.b16 %v265
    %v1740 = vunpack.c.l.b16 %v266
    %v1741 = vunpack.c.h.b16 %v266
    %v1742 = vunpack.c.l.b16 %v267
    %v1743 = vunpack.c.h.b16 %v267
    %v1744 = vunpack.c.l.b16 %v268
    %v1745 = vunpack.c.h.b16 %v268
    %v1746 = vunpack.c.l.b16 %v269
    %v1747 = vunpack.c.h.b16 %v269
    %v1748 = vunpack.c.l.b16 %v270
    %v1749 = vunpack.c.h.b16 %v270
    %v1750 = vunpack.c.l.b16 %v271
    %v1751 = vunpack.c.h.b16 %v271
    %v1752 = vunpack.c.l.b16 %v272
    %v1753 = vunpack.c.h.b16 %v272
    %v1754 = vunpack.c.l.b16 %v273
    %v1755 = vunpack.c.h.b16 %v273
    %v1756 = vunpack.c.l.b16 %v274
    %v1757 = vunpack.c.h.b16 %v274
    %v1758 = vunpack.c.l.b16 %v275
    %v1759 = vunpack.c.h.b16 %v275
    %v1760 = vunpack.c.l.b16 %v276
    %v1761 = vunpack.c.h.b16 %v276
    %v1762 = vunpack.c.l.b16 %v277
    %v1763 = vunpack.c.h.b16 %v277
    %v1764 = vunpack.c.l.b16 %v278
    %v1765 = vunpack.c.h.b16 %v278
    %v1766 = vunpack.c.l.b16 %v279
    %v1767 = vunpack.c.h.b16 %v279
    %v1768 = vunpack.c.l.b16 %v280
    %v1769 = vunpack.c.h.b16 %v280
    %v1770 = vunpack.c.l.b16 %v281
    %v1771 = vunpack.c.h.b16 %v281
    %v1772 = vunpack.c.l.b16 %v282
    %v1773 = vunpack.c.h.b16 %v282
    %v1774 = vunpack.c.l.b16 %v283
    %v1775 = vunpack.c.h.b16 %v283
    %v1776 = vunpack.c.l.b16 %v284
    %v1777 = vunpack.c.h.b16 %v284
    %v1778 = vunpack.c.l.b16 %v285
    %v1779 = vunpack.c.h.b16 %v285
    %v1780 = vunpack.c.l.b16 %v286
    %v1781 = vunpack.c.h.b16 %v286
    %v1782 = vunpack.c.l.b16 %v287
    %v1783 = vunpack.c.h.b16 %v287
    %v1784 = vunpack.c.l.b16 %v288
    %v1785 = vunpack.c.h.b16 %v288
    %v1786 = vunpack.c.l.b16 %v289
    %v1787 = vunpack.c.h.b16 %v289
    %v1788 = vunpack.c.l.b16 %v290
    %v1789 = vunpack.c.h.b16 %v290
    %v1790 = vunpack.c.l.b16 %v291
    %v1791 = vunpack.c.h.b16 %v291
    %v1792 = vunpack.c.l.b16 %v292
    %v1793 = vunpack.c.h.b16 %v292
    %v1794 = vunpack.c.l.b16 %v293
    %v1795 = vunpack.c.h.b16 %v293
    %v1796 = vunpack.c.l.b16 %v294
    %v1797 = vunpack.c.h.b16 %v294
    %v1798 = vunpack.c.l.b16 %v295
    %v1799 = vunpack.c.h.b16 %v295
    %v1800 = vunpack.c.l.b16 %v296
    %v1801 = vunpack.c.h.b16 %v296
    %v1802 = vunpack.c.l.b16 %v297
    %v1803 = vunpack.c.h.b16 %v297
    %v1804 = vunpack.c.l.b16 %v298
    %v1805 = vunpack.c.h.b16 %v298
    %v1806 = vunpack.c.l.b16 %v299
    %v1807 = vunpack.c.h.b16 %v299
    %v1808 = vunpack.c.l.b16 %v300
    %v1809 = vunpack.c.h.b16 %v300
    %v1810 = vunpack.c.l.b16 %v301
    %v1811 = vunpack.c.h.b16 %v301
    %v1812 = vunpack.c.l.b16 %v302
    %v1813 = vunpack.c.h.b16 %v302
    %v1814 = vunpack.c.l.b16 %v303
    %v1815 = vunpack.c.h.b16 %v303
    %v1816 = vunpack.c.l.b16 %v304
    %v1817 = vunpack.c.h.b16 %v304
    %v1818 = vunpack.c.l.b16 %v305
    %v1819 = vunpack.c.h.b16 %v305
    %v1820 = vunpack.c.l.b16 %v306
    %v1821 = vunpack.c.h.b16 %v306
    %v1822 = vunpack.c.l.b16 %v307
    %v1823 = vunpack.c.h.b16 %v307
    %v1824 = vunpack.c.l.b16 %v308
    %v1825 = vunpack.c.h.b16 %v308
    %v1826 = vunpack.c.l.b16 %v309
    %v1827 = vunpack.c.h.b16 %v309
    %v1828 = vunpack.c.l.b16 %v310
    %v1829 = vunpack.c.h.b16 %v310
    %v1830 = vunpack.c.l.b16 %v311
    %v1831 = vunpack.c.h.b16 %v311
    %v1832 = vunpack.c.l.b16 %v312
    %v1833 = vunpack.c.h.b16 %v312
    %v1834 = vunpack.c.l.b16 %v313
    %v1835 = vunpack.c.h.b16 %v313
    %v1836 = vpack.c.b16 %v1584, %v1580
    %v1837 = vpack.c.b16 %v1585, %v1581
    %v1838 = vpack.c.b16 %v1586, %v1582
    %v1839 = vpack.c.b16 %v1587, %v1583
    %v1840 = vpack.c.b16 %v1592, %v1588
    %v1841 = vpack.c.b16 %v1593, %v1589
    %v1842 = vpack.c.b16 %v1594, %v1590
    %v1843 = vpack.c.b16 %v1595, %v1591
    %v1844 = vpack.c.b16 %v1600, %v1596
    %v1845 = vpack.c.b16 %v1601, %v1597
    %v1846 = vpack.c.b16 %v1602, %v1598
    %v1847 = vpack.c.b16 %v1603, %v1599
    %v1848 = vpack.c.b16 %v1608, %v1604
    %v1849 = vpack.c.b16 %v1609, %v1605
    %v1850 = vpack.c.b16 %v1610, %v1606
    %v1851 = vpack.c.b16 %v1611, %v1607
    %v1852 = vpack.c.b16 %v1616, %v1612
    %v1853 = vpack.c.b16 %v1617, %v1613
    %v1854 = vpack.c.b16 %v1618, %v1614
    %v1855 = vpack.c.b16 %v1619, %v1615
    %v1856 = vpack.c.b16 %v1624, %v1620
    %v1857 = vpack.c.b16 %v1625, %v1621
    %v1858 = vpack.c.b16 %v1626, %v1622
    %v1859 = vpack.c.b16 %v1627, %v1623
    %v1860 = vpack.c.b16 %v1632, %v1628
    %v1861 = vpack.c.b16 %v1633, %v1629
    %v1862 = vpack.c.b16 %v1634, %v1630
    %v1863 = vpack.c.b16 %v1635, %v1631
    %v1864 = vpack.c.b16 %v1640, %v1636
    %v1865 = vpack.c.b16 %v1641, %v1637
    %v1866 = vpack.c.b16 %v1642, %v1638
    %v1867 = vpack.c.b16 %v1643, %v1639
    %v1868 = vpack.c.b16 %v1648, %v1644
    %v1869 = vpack.c.b16 %v1649, %v1645
    %v1870 = vpack.c.b16 %v1650, %v1646
    %v1871 = vpack.c.b16 %v1651, %v1647
    %v1872 = vpack.c.b16 %v1656, %v1652
    %v1873 = vpack.c.b16 %v1657, %v1653
    %v1874 = vpack.c.b16 %v1658, %v1654
    %v1875 = vpack.c.b16 %v1659, %v1655
    %v1876 = vpack.c.b16 %v1664, %v1660
    %v1877 = vpack.c.b16 %v1665, %v1661
    %v1878 = vpack.c.b16 %v1666, %v1662
    %v1879 = vpack.c.b16 %v1667, %v1663
    %v1880 = vpack.c.b16 %v1672, %v1668
    %v1881 = vpack.c.b16 %v1673, %v1669
    %v1882 = vpack.c.b16 %v1674, %v1670
    %v1883 = vpack.c.b16 %v1675, %v1671
    %v1884 = vpack.c.b16 %v1680, %v1676
    %v1885 = vpack.c.b16 %v1681, %v1677
    %v1886 = vpack.c.b16 %v1682, %v1678
    %v1887 = vpack.c.b16 %v1683, %v1679
    %v1888 = vpack.c.b16 %v1688, %v1684
    %v1889 = vpack.c.b16 %v1689, %v1685
    %v1890 = vpack.c.b16 %v1690, %v1686
    %v1891 = vpack.c.b16 %v1691, %v1687
    %v1892 = vpack.c.b16 %v1696, %v1692
    %v1893 = vpack.c.b16 %v1697, %v1693
    %v1894 = vpack.c.b16 %v1698, %v1694
    %v1895 = vpack.c.b16 %v1699, %v1695
    %v1896 = vpack.c.b16 %v1704, %v1700
    %v1897 = vpack.c.b16 %v1705, %v1701
    %v1898 = vpack.c.b16 %v1706, %v1702
    %v1899 = vpack.c.b16 %v1707, %v1703
    %v1900 = vpack.c.b16 %v1712, %v1708
    %v1901 = vpack.c.b16 %v1713, %v1709
    %v1902 = vpack.c.b16 %v1714, %v1710
    %v1903 = vpack.c.b16 %v1715, %v1711
    %v1904 = vpack.c.b16 %v1720, %v1716
    %v1905 = vpack.c.b16 %v1721, %v1717
    %v1906 = vpack.c.b16 %v1722, %v1718
    %v1907 = vpack.c.b16 %v1723, %v1719
    %v1908 = vpack.c.b16 %v1728, %v1724
    %v1909 = vpack.c.b16 %v1729, %v1725
    %v1910 = vpack.c.b16 %v1730, %v1726
    %v1911 = vpack.c.b16 %v1731, %v1727
    %v1912 = vpack.c.b16 %v1736, %v1732
    %v1913 = vpack.c.b16 %v1737, %v1733
    %v1914 = vpack.c.b16 %v1738, %v1734
    %v1915 = vpack.c.b16 %v1739, %v1735
    %v1916 = vpack.c.b16 %v1744, %v1740
    %v1917 = vpack.c.b16 %v1745, %v1741
    %v1918 = vpack.c.b16 %v1746, %v1742
    %v1919 = vpack.c.b16 %v1747, %v1743
    %v1920 = vpack.c.b16 %v1752, %v1748
    %v1921 = vpack.c.b16 %v1753, %v1749
    %v1922 = vpack.c.b16 %v1754, %v1750
    %v1923 = vpack.c.b16 %v1755, %v1751
    %v1924 = vpack.c.b16 %v1760, %v1756
    %v1925 = vpack.c.b16 %v1761, %v1757
    %v1926 = vpack.c.b16 %v1762, %v1758
    %v1927 = vpack.c.b16 %v1763, %v1759
    %v1928 = vpack.c.b16 %v1768, %v1764
    %v1929 = vpack.c.b16 %v1769, %v1765
    %v1930 = vpack.c.b16 %v1770, %v1766
    %v1931 = vpack.c.b16 %v1771, %v1767
    %v1932 = vpack.c.b16 %v1776, %v1772
    %v1933 = vpack.c.b16 %v1777, %v1773
    %v1934 = vpack.c.b16 %v1778, %v1774
    %v1935 = vpack.c.b16 %v1779, %v1775
    %v1936 = vpack.c.b16 %v1784, %v1780
    %v1937 = vpack.c.b16 %v1785, %v1781
    %v1938 = vpack.c.b16 %v1786, %v1782
    %v1939 = vpack.c.b16 %v1787, %v1783
    %v1940 = vpack.c.b16 %v1792, %v1788
    %v1941 = vpack.c.b16 %v1793, %v1789
    %v1942 = vpack.c.b16 %v1794, %v1790
    %v1943 = vpack.c.b16 %v1795, %v1791
    %v1944 = vpack.c.b16 %v1800, %v1796
    %v1945 = vpack.c.b16 %v1801, %v1797
    %v1946 = vpack.c.b16 %v1802, %v1798
    %v1947 = vpack.c.b16 %v1803, %v1799
    %v1948 = vpack.c.b16 %v1808, %v1804
    %v1949 = vpack.c.b16 %v1809, %v1805
    %v1950 = vpack.c.b16 %v1810, %v1806
    %v1951 = vpack.c.b16 %v1811, %v1807
    %v1952 = vpack.c.b16 %v1816, %v1812
    %v1953 = vpack.c.b16 %v1817, %v1813
    %v1954 = vpack.c.b16 %v1818, %v1814
    %v1955 = vpack.c.b16 %v1819, %v1815
    %v1956 = vpack.c.b16 %v1824, %v1820
    %v1957 = vpack.c.b16 %v1825, %v1821
    %v1958 = vpack.c.b16 %v1826, %v1822
    %v1959 = vpack.c.b16 %v1827, %v1823
    %v1960 = vpack.c.b16 %v1832, %v1828
    %v1961 = vpack.c.b16 %v1833, %v1829
    %v1962 = vpack.c.b16 %v1834, %v1830
    %v1963 = vpack.c.b16 %v1835, %v1831
    %2092 = vmatprep.subr.bf16.mxu0 %v1837
    %2093 = vmatpush1.bf16.msra.mxu0 %v1836
    %2094 = vmatprep.subr.bf16.mxu0 %v1841
    %2095 = vmatpush1.bf16.msra.mxu0 %v1840
    %2096 = vmatprep.subr.bf16.mxu0 %v1845
    %2097 = vmatpush1.bf16.msra.mxu0 %v1844
    %2098 = vmatprep.subr.bf16.mxu0 %v1849
    %2099 = vmatpush1.bf16.msra.mxu0 %v1848
    %2100 = vmatprep.subr.bf16.mxu0 %v1853
    %2101 = vmatpush1.bf16.msra.mxu0 %v1852
    %2102 = vmatprep.subr.bf16.mxu0 %v1857
    %2103 = vmatpush1.bf16.msra.mxu0 %v1856
    %2104 = vmatprep.subr.bf16.mxu0 %v1861
    %2105 = vmatpush1.bf16.msra.mxu0 %v1860
    %2106 = vmatprep.subr.bf16.mxu0 %v1865
    %2107 = vmatpush1.bf16.msra.mxu0 %v1864
    %2108 = vmatprep.subr.bf16.mxu0 %v1869
    %2109 = vmatpush1.bf16.msra.mxu0 %v1868
    %2110 = vmatprep.subr.bf16.mxu0 %v1873
    %2111 = vmatpush1.bf16.msra.mxu0 %v1872
    %2112 = vmatprep.subr.bf16.mxu0 %v1877
    %2113 = vmatpush1.bf16.msra.mxu0 %v1876
    %2114 = vmatprep.subr.bf16.mxu0 %v1881
    %2115 = vmatpush1.bf16.msra.mxu0 %v1880
    %2116 = vmatprep.subr.bf16.mxu0 %v1885
    %2117 = vmatpush1.bf16.msra.mxu0 %v1884
    %2118 = vmatprep.subr.bf16.mxu0 %v1889
    %2119 = vmatpush1.bf16.msra.mxu0 %v1888
    %2120 = vmatprep.subr.bf16.mxu0 %v1893
    %2121 = vmatpush1.bf16.msra.mxu0 %v1892
    %2122 = vmatprep.subr.bf16.mxu0 %v1897
    %2123 = vmatpush1.bf16.msra.mxu0 %v1896
    %2124 = vmatprep.mubr.bf16.mxu0 %v1369
    %2125 = vmatmul.mubr.bf16.gmra.mrb[0].mxu0 %v1352
    %v2126 = vpop.f32.mrb[0].mxu0
    %v2127 = vadd.f32 %v1193, %v2126
    %v2128 = vpop.f32.mrb[0].mxu0
    %v2129 = vadd.f32 %v1195, %v2128
    %v2130 = vpop.f32.mrb[0].mxu0
    %v2131 = vadd.f32 %v1197, %v2130
    %v2132 = vpop.f32.mrb[0].mxu0
    %v2133 = vadd.f32 %v1199, %v2132
    %2134 = vmatprep.mubr.bf16.mxu0 %v1421
    %2135 = vmatmul.mubr.bf16.gmra.mrb[0].mxu0 %v1412
    %v2136 = vpop.f32.mrb[0].mxu0
    %v2137 = vpop.f32.mrb[0].mxu0
    %v2138 = vpop.f32.mrb[0].mxu0
    %v2139 = vadd.f32 %v1205, %v2138
    %v2140 = vpop.f32.mrb[0].mxu0
    %v2141 = vadd.f32 %v1207, %v2140
    %2142 = vmatprep.mubr.bf16.mxu0 %v1420
    %2143 = vmatmul.mubr.bf16.gmra.mrb[0].mxu0 %v1411
    %v2144 = vpop.f32.mrb[0].mxu0
    %v2145 = vadd.f32 %v1211, %v2144
    %v2146 = vpop.f32.mrb[0].mxu0
    %v2147 = vadd.f32 %v1213, %v2146
    %v2148 = vpop.f32.mrb[0].mxu0
    %v2149 = vpop.f32.mrb[0].mxu0
    %2150 = vdwg.mxu0
    %2151 = vmatprep.subr.bf16.mxu0 %v1901
    %2152 = vmatpush1.bf16.msra.mxu0 %v1900
    %2153 = vmatprep.subr.bf16.mxu0 %v1905
    %2154 = vmatpush1.bf16.msra.mxu0 %v1904
    %2155 = vmatprep.subr.bf16.mxu0 %v1909
    %2156 = vmatpush1.bf16.msra.mxu0 %v1908
    %2157 = vmatprep.subr.bf16.mxu0 %v1913
    %2158 = vmatpush1.bf16.msra.mxu0 %v1912
    %2159 = vmatprep.subr.bf16.mxu0 %v1917
    %2160 = vmatpush1.bf16.msra.mxu0 %v1916
    %2161 = vmatprep.subr.bf16.mxu0 %v1921
    %2162 = vmatpush1.bf16.msra.mxu0 %v1920
    %2163 = vmatprep.subr.bf16.mxu0 %v1925
    %2164 = vmatpush1.bf16.msra.mxu0 %v1924
    %2165 = vmatprep.subr.bf16.mxu0 %v1929
    %2166 = vmatpush1.bf16.msra.mxu0 %v1928
    %2167 = vmatprep.subr.bf16.mxu0 %v1933
    %2168 = vmatpush1.bf16.msra.mxu0 %v1932
    %2169 = vmatprep.subr.bf16.mxu0 %v1937
    %2170 = vmatpush1.bf16.msra.mxu0 %v1936
    %2171 = vmatprep.subr.bf16.mxu0 %v1941
    %2172 = vmatpush1.bf16.msra.mxu0 %v1940
    %2173 = vmatprep.subr.bf16.mxu0 %v1945
    %2174 = vmatpush1.bf16.msra.mxu0 %v1944
    %2175 = vmatprep.subr.bf16.mxu0 %v1949
    %2176 = vmatpush1.bf16.msra.mxu0 %v1948
    %2177 = vmatprep.subr.bf16.mxu0 %v1953
    %2178 = vmatpush1.bf16.msra.mxu0 %v1952
    %2179 = vmatprep.subr.bf16.mxu0 %v1957
    %2180 = vmatpush1.bf16.msra.mxu0 %v1956
    %2181 = vmatprep.subr.bf16.mxu0 %v1961
    %2182 = vmatpush1.bf16.msra.mxu0 %v1960
    %2183 = vmatprep.mubr.bf16.mxu0 %v1403
    %2184 = vmatmul.mubr.bf16.gmra.mrb[0].mxu0 %v1386
    %v2185 = vpop.f32.mrb[0].mxu0
    %v2186 = vadd.f32 %v2127, %v2185
    %v2187 = vpop.f32.mrb[0].mxu0
    %v2188 = vadd.f32 %v2129, %v2187
    %v2189 = vpop.f32.mrb[0].mxu0
    %v2190 = vadd.f32 %v2131, %v2189
    %v2191 = vpop.f32.mrb[0].mxu0
    %v2192 = vadd.f32 %v2133, %v2191
    %2193 = vmatprep.mubr.bf16.mxu0 %v1439
    %2194 = vmatmul.mubr.bf16.gmra.mrb[0].mxu0 %v1430
    %v2195 = vpop.f32.mrb[0].mxu0
    %v2196 = vpop.f32.mrb[0].mxu0
    %v2197 = vpop.f32.mrb[0].mxu0
    %v2198 = vadd.f32 %v2139, %v2197
    %v2199 = vpop.f32.mrb[0].mxu0
    %v2200 = vadd.f32 %v2141, %v2199
    %2201 = vmatprep.mubr.bf16.mxu0 %v1438
    %2202 = vmatmul.mubr.bf16.gmra.mrb[0].mxu0 %v1429
    %v2203 = vpop.f32.mrb[0].mxu0
    %v2204 = vadd.f32 %v2145, %v2203
    %v2205 = vpop.f32.mrb[0].mxu0
    %v2206 = vadd.f32 %v2147, %v2205
    %v2207 = vpop.f32.mrb[0].mxu0
    %v2208 = vpop.f32.mrb[0].mxu0
    %2209 = vdwg.mxu0
    %2210 = vmatprep.subr.bf16.mxu0 %v1839
    %2211 = vmatpush1.bf16.msra.mxu0 %v1838
    %2212 = vmatprep.subr.bf16.mxu0 %v1843
    %2213 = vmatpush1.bf16.msra.mxu0 %v1842
    %2214 = vmatprep.subr.bf16.mxu0 %v1847
    %2215 = vmatpush1.bf16.msra.mxu0 %v1846
    %2216 = vmatprep.subr.bf16.mxu0 %v1851
    %2217 = vmatpush1.bf16.msra.mxu0 %v1850
    %2218 = vmatprep.subr.bf16.mxu0 %v1855
    %2219 = vmatpush1.bf16.msra.mxu0 %v1854
    %2220 = vmatprep.subr.bf16.mxu0 %v1859
    %2221 = vmatpush1.bf16.msra.mxu0 %v1858
    %2222 = vmatprep.subr.bf16.mxu0 %v1863
    %2223 = vmatpush1.bf16.msra.mxu0 %v1862
    %2224 = vmatprep.subr.bf16.mxu0 %v1867
    %2225 = vmatpush1.bf16.msra.mxu0 %v1866
    %2226 = vmatprep.subr.bf16.mxu0 %v1871
    %2227 = vmatpush1.bf16.msra.mxu0 %v1870
    %2228 = vmatprep.subr.bf16.mxu0 %v1875
    %2229 = vmatpush1.bf16.msra.mxu0 %v1874
    %2230 = vmatprep.subr.bf16.mxu0 %v1879
    %2231 = vmatpush1.bf16.msra.mxu0 %v1878
    %2232 = vmatprep.subr.bf16.mxu0 %v1883
    %2233 = vmatpush1.bf16.msra.mxu0 %v1882
    %2234 = vmatprep.subr.bf16.mxu0 %v1887
    %2235 = vmatpush1.bf16.msra.mxu0 %v1886
    %2236 = vmatprep.subr.bf16.mxu0 %v1891
    %2237 = vmatpush1.bf16.msra.mxu0 %v1890
    %2238 = vmatprep.subr.bf16.mxu0 %v1895
    %2239 = vmatpush1.bf16.msra.mxu0 %v1894
    %2240 = vmatprep.subr.bf16.mxu0 %v1899
    %2241 = vmatpush1.bf16.msra.mxu0 %v1898
    %2242 = vmatprep.mubr.bf16.mxu0 %v1369
    %2243 = vmatmul.mubr.bf16.gmra.mrb[0].mxu0 %v1352
    %v2244 = vpop.f32.mrb[0].mxu0
    %v2245 = vadd.f32 %v1311, %v2244
    %v2246 = vpop.f32.mrb[0].mxu0
    %v2247 = vadd.f32 %v1313, %v2246
    %v2248 = vpop.f32.mrb[0].mxu0
    %v2249 = vadd.f32 %v1315, %v2248
    %v2250 = vpop.f32.mrb[0].mxu0
    %v2251 = vadd.f32 %v1317, %v2250
    %2252 = vmatprep.mubr.bf16.mxu0 %v1421
    %2253 = vmatmul.mubr.bf16.gmra.mrb[0].mxu0 %v1412
    %v2254 = vpop.f32.mrb[0].mxu0
    %v2255 = vpop.f32.mrb[0].mxu0
    %v2256 = vpop.f32.mrb[0].mxu0
    %v2257 = vadd.f32 %v1323, %v2256
    %v2258 = vpop.f32.mrb[0].mxu0
    %v2259 = vadd.f32 %v1325, %v2258
    %2260 = vmatprep.mubr.bf16.mxu0 %v1420
    %2261 = vmatmul.mubr.bf16.gmra.mrb[0].mxu0 %v1411
    %v2262 = vpop.f32.mrb[0].mxu0
    %v2263 = vadd.f32 %v1329, %v2262
    %v2264 = vpop.f32.mrb[0].mxu0
    %v2265 = vadd.f32 %v1331, %v2264
    %v2266 = vpop.f32.mrb[0].mxu0
    %v2267 = vpop.f32.mrb[0].mxu0
    %2268 = vdwg.mxu0
    %2269 = vmatprep.subr.bf16.mxu0 %v1903
    %2270 = vmatpush1.bf16.msra.mxu0 %v1902
    %2271 = vmatprep.subr.bf16.mxu0 %v1907
    %2272 = vmatpush1.bf16.msra.mxu0 %v1906
    %2273 = vmatprep.subr.bf16.mxu0 %v1911
    %2274 = vmatpush1.bf16.msra.mxu0 %v1910
    %2275 = vmatprep.subr.bf16.mxu0 %v1915
    %2276 = vmatpush1.bf16.msra.mxu0 %v1914
    %2277 = vmatprep.subr.bf16.mxu0 %v1919
    %2278 = vmatpush1.bf16.msra.mxu0 %v1918
    %2279 = vmatprep.subr.bf16.mxu0 %v1923
    %2280 = vmatpush1.bf16.msra.mxu0 %v1922
    %2281 = vmatprep.subr.bf16.mxu0 %v1927
    %2282 = vmatpush1.bf16.msra.mxu0 %v1926
    %2283 = vmatprep.subr.bf16.mxu0 %v1931
    %2284 = vmatpush1.bf16.msra.mxu0 %v1930
    %2285 = vmatprep.subr.bf16.mxu0 %v1935
    %2286 = vmatpush1.bf16.msra.mxu0 %v1934
    %2287 = vmatprep.subr.bf16.mxu0 %v1939
    %2288 = vmatpush1.bf16.msra.mxu0 %v1938
    %2289 = vmatprep.subr.bf16.mxu0 %v1943
    %2290 = vmatpush1.bf16.msra.mxu0 %v1942
    %2291 = vmatprep.subr.bf16.mxu0 %v1947
    %2292 = vmatpush1.bf16.msra.mxu0 %v1946
    %2293 = vmatprep.subr.bf16.mxu0 %v1951
    %2294 = vmatpush1.bf16.msra.mxu0 %v1950
    %2295 = vmatprep.subr.bf16.mxu0 %v1955
    %2296 = vmatpush1.bf16.msra.mxu0 %v1954
    %2297 = vmatprep.subr.bf16.mxu0 %v1959
    %2298 = vmatpush1.bf16.msra.mxu0 %v1958
    %2299 = vmatprep.subr.bf16.mxu0 %v1963
    %2300 = vmatpush1.bf16.msra.mxu0 %v1962
    %2301 = vmatprep.mubr.bf16.mxu0 %v1403
    %2302 = vmatmul.mubr.bf16.gmra.mrb[0].mxu0 %v1386
    %v2303 = vpop.f32.mrb[0].mxu0
    %v2304 = vadd.f32 %v2245, %v2303
    %v2305 = vpop.f32.mrb[0].mxu0
    %v2306 = vadd.f32 %v2247, %v2305
    %v2307 = vpop.f32.mrb[0].mxu0
    %v2308 = vadd.f32 %v2249, %v2307
    %v2309 = vpop.f32.mrb[0].mxu0
    %v2310 = vadd.f32 %v2251, %v2309
    %2311 = vmatprep.mubr.bf16.mxu0 %v1439
    %2312 = vmatmul.mubr.bf16.gmra.mrb[0].mxu0 %v1430
    %v2313 = vpop.f32.mrb[0].mxu0
    %v2314 = vpop.f32.mrb[0].mxu0
    %v2315 = vpop.f32.mrb[0].mxu0
    %v2316 = vadd.f32 %v2257, %v2315
    %v2317 = vpop.f32.mrb[0].mxu0
    %v2318 = vadd.f32 %v2259, %v2317
    %2319 = vmatprep.mubr.bf16.mxu0 %v1438
    %2320 = vmatmul.mubr.bf16.gmra.mrb[0].mxu0 %v1429
    %v2321 = vpop.f32.mrb[0].mxu0
    %v2322 = vadd.f32 %v2263, %v2321
    %v2323 = vpop.f32.mrb[0].mxu0
    %v2324 = vadd.f32 %v2265, %v2323
    %v2325 = vpop.f32.mrb[0].mxu0
    %v2326 = vpop.f32.mrb[0].mxu0
    %2327 = vdwg.mxu0
    %v2328 = vld [vmem:[#allocation2 + $0x20] sm:$0xfe]
    %v2329 = vld [vmem:[#allocation2 + $0x28] sm:$0xfe]
    %v2330 = vld [vmem:[#allocation2 + $0x30] sm:$0xfe]
    %v2331 = vld [vmem:[#allocation2 + $0x38] sm:$0xfe]
    %v2332 = vld [vmem:[#allocation2 + $0x40] sm:$0xff]
    %v2333 = vld [vmem:[#allocation2 + $0x48] sm:$0xff]
    %v2334 = vld [vmem:[#allocation2 + $0x50] sm:$0xff]
    %v2335 = vld [vmem:[#allocation2 + $0x58] sm:$0xff]
    %v2336 = vld [vmem:[#allocation2 + $0x60] sm:$0xff]
    %v2337 = vld [vmem:[#allocation2 + $0x68] sm:$0xff]
    %v2338 = vld [vmem:[#allocation2 + $0x70] sm:$0xff]
    %v2339 = vld [vmem:[#allocation2 + $0x78] sm:$0xff]
    %v2340 = vld [vmem:[#allocation2 + $0x80] sm:$0xff]
    %v2341 = vld [vmem:[#allocation2 + $0x88] sm:$0xff]
    %v2342 = vld [vmem:[#allocation2 + $0x90] sm:$0xff]
    %v2343 = vld [vmem:[#allocation2 + $0x98] sm:$0xff]
    %v2344 = vld [vmem:[#allocation2 + $0xa0] sm:$0xff]
    %v2345 = vld [vmem:[#allocation2 + $0xa8] sm:$0xff]
    %v2346 = vld [vmem:[#allocation2 + $0xb0] sm:$0xff]
    %v2347 = vld [vmem:[#allocation2 + $0xb8] sm:$0xff]
    %v2348 = vld [vmem:[#allocation2 + $0xc0] sm:$0x1]
    %v2349 = vld [vmem:[#allocation2 + $0xc8] sm:$0x1]
    %v2350 = vld [vmem:[#allocation2 + $0xd0] sm:$0x1]
    %v2351 = vld [vmem:[#allocation2 + $0xd8] sm:$0x1]
    %v2352 = vpack.c.bf16 %v2332, %v2328
    %v2353 = vpack.c.bf16 %v2333, %v2329
    %v2354 = vpack.c.bf16 %v2334, %v2330
    %v2355 = vpack.c.bf16 %v2335, %v2331
    %v2356 = vpack.c.bf16 %v2340, %v2336
    %v2357 = vpack.c.bf16 %v2341, %v2337
    %v2358 = vpack.c.bf16 %v2342, %v2338
    %v2359 = vpack.c.bf16 %v2343, %v2339
    %v2360 = vpack.c.bf16 %v2348, %v2344
    %v2361 = vpack.c.bf16 %v2349, %v2345
    %v2362 = vpack.c.bf16 %v2350, %v2346
    %v2363 = vpack.c.bf16 %v2351, %v2347
    %s2364 = scalar_lea.vmem [#allocation6], 2048
    %v2365 = vld [vmem:[%s2364] sm:$0xff]
    %v2366 = vld [vmem:[%s2364 + $0x8] sm:$0xff]
    %v2367 = vld [vmem:[%s2364 + $0x10] sm:$0xff]
    %v2368 = vld [vmem:[%s2364 + $0x18] sm:$0xff]
    %v2369 = vld [vmem:[%s2364 + $0x20] sm:$0xff]
    %v2370 = vld [vmem:[%s2364 + $0x28] sm:$0xff]
    %v2371 = vld [vmem:[%s2364 + $0x30] sm:$0xff]
    %v2372 = vld [vmem:[%s2364 + $0x38] sm:$0xff]
    %v2373 = vld [vmem:[%s2364 + $0x40] sm:$0xff]
    %v2374 = vld [vmem:[%s2364 + $0x48] sm:$0xff]
    %v2375 = vld [vmem:[%s2364 + $0x50] sm:$0xff]
    %v2376 = vld [vmem:[%s2364 + $0x58] sm:$0xff]
    %v2377 = vld [vmem:[%s2364 + $0x60] sm:$0xff]
    %v2378 = vld [vmem:[%s2364 + $0x68] sm:$0xff]
    %v2379 = vld [vmem:[%s2364 + $0x70] sm:$0xff]
    %v2380 = vld [vmem:[%s2364 + $0x78] sm:$0xff]
    %v2381 = vld [vmem:[%s2364 + $0x80] sm:$0xff]
    %v2382 = vld [vmem:[%s2364 + $0x88] sm:$0xff]
    %v2383 = vld [vmem:[%s2364 + $0x90] sm:$0xff]
    %v2384 = vld [vmem:[%s2364 + $0x98] sm:$0xff]
    %v2385 = vld [vmem:[%s2364 + $0xa0] sm:$0xff]
    %v2386 = vld [vmem:[%s2364 + $0xa8] sm:$0xff]
    %v2387 = vld [vmem:[%s2364 + $0xb0] sm:$0xff]
    %v2388 = vld [vmem:[%s2364 + $0xb8] sm:$0xff]
    %v2389 = vld [vmem:[%s2364 + $0xc0] sm:$0xff]
    %v2390 = vld [vmem:[%s2364 + $0xc8] sm:$0xff]
    %v2391 = vld [vmem:[%s2364 + $0xd0] sm:$0xff]
    %v2392 = vld [vmem:[%s2364 + $0xd8] sm:$0xff]
    %v2393 = vld [vmem:[%s2364 + $0xe0] sm:$0xff]
    %v2394 = vld [vmem:[%s2364 + $0xe8] sm:$0xff]
    %v2395 = vld [vmem:[%s2364 + $0xf0] sm:$0xff]
    %v2396 = vld [vmem:[%s2364 + $0xf8] sm:$0xff]
    %v2397 = vld [vmem:[%s2364 + $0x100] sm:$0xff]
    %v2398 = vld [vmem:[%s2364 + $0x108] sm:$0xff]
    %v2399 = vld [vmem:[%s2364 + $0x110] sm:$0xff]
    %v2400 = vld [vmem:[%s2364 + $0x118] sm:$0xff]
    %v2401 = vld [vmem:[%s2364 + $0x120] sm:$0xff]
    %v2402 = vld [vmem:[%s2364 + $0x128] sm:$0xff]
    %v2403 = vld [vmem:[%s2364 + $0x130] sm:$0xff]
    %v2404 = vld [vmem:[%s2364 + $0x138] sm:$0xff]
    %v2405 = vld [vmem:[%s2364 + $0x140] sm:$0xff]
    %v2406 = vld [vmem:[%s2364 + $0x148] sm:$0xff]
    %v2407 = vld [vmem:[%s2364 + $0x150] sm:$0xff]
    %v2408 = vld [vmem:[%s2364 + $0x158] sm:$0xff]
    %v2409 = vld [vmem:[%s2364 + $0x160] sm:$0xff]
    %v2410 = vld [vmem:[%s2364 + $0x168] sm:$0xff]
    %v2411 = vld [vmem:[%s2364 + $0x170] sm:$0xff]
    %v2412 = vld [vmem:[%s2364 + $0x178] sm:$0xff]
    %v2413 = vld [vmem:[%s2364 + $0x180] sm:$0xff]
    %v2414 = vld [vmem:[%s2364 + $0x188] sm:$0xff]
    %v2415 = vld [vmem:[%s2364 + $0x190] sm:$0xff]
    %v2416 = vld [vmem:[%s2364 + $0x198] sm:$0xff]
    %v2417 = vld [vmem:[%s2364 + $0x1a0] sm:$0xff]
    %v2418 = vld [vmem:[%s2364 + $0x1a8] sm:$0xff]
    %v2419 = vld [vmem:[%s2364 + $0x1b0] sm:$0xff]
    %v2420 = vld [vmem:[%s2364 + $0x1b8] sm:$0xff]
    %v2421 = vld [vmem:[%s2364 + $0x1c0] sm:$0xff]
    %v2422 = vld [vmem:[%s2364 + $0x1c8] sm:$0xff]
    %v2423 = vld [vmem:[%s2364 + $0x1d0] sm:$0xff]
    %v2424 = vld [vmem:[%s2364 + $0x1d8] sm:$0xff]
    %v2425 = vld [vmem:[%s2364 + $0x1e0] sm:$0xff]
    %v2426 = vld [vmem:[%s2364 + $0x1e8] sm:$0xff]
    %v2427 = vld [vmem:[%s2364 + $0x1f0] sm:$0xff]
    %v2428 = vld [vmem:[%s2364 + $0x1f8] sm:$0xff]
    %v2429 = vld [vmem:[%s2364 + $0x200] sm:$0xff]
    %v2430 = vld [vmem:[%s2364 + $0x208] sm:$0xff]
    %v2431 = vld [vmem:[%s2364 + $0x210] sm:$0xff]
    %v2432 = vld [vmem:[%s2364 + $0x218] sm:$0xff]
    %v2433 = vld [vmem:[%s2364 + $0x220] sm:$0xff]
    %v2434 = vld [vmem:[%s2364 + $0x228] sm:$0xff]
    %v2435 = vld [vmem:[%s2364 + $0x230] sm:$0xff]
    %v2436 = vld [vmem:[%s2364 + $0x238] sm:$0xff]
    %v2437 = vld [vmem:[%s2364 + $0x240] sm:$0xff]
    %v2438 = vld [vmem:[%s2364 + $0x248] sm:$0xff]
    %v2439 = vld [vmem:[%s2364 + $0x250] sm:$0xff]
    %v2440 = vld [vmem:[%s2364 + $0x258] sm:$0xff]
    %v2441 = vld [vmem:[%s2364 + $0x260] sm:$0xff]
    %v2442 = vld [vmem:[%s2364 + $0x268] sm:$0xff]
    %v2443 = vld [vmem:[%s2364 + $0x270] sm:$0xff]
    %v2444 = vld [vmem:[%s2364 + $0x278] sm:$0xff]
    %v2445 = vld [vmem:[%s2364 + $0x280] sm:$0xff]
    %v2446 = vld [vmem:[%s2364 + $0x288] sm:$0xff]
    %v2447 = vld [vmem:[%s2364 + $0x290] sm:$0xff]
    %v2448 = vld [vmem:[%s2364 + $0x298] sm:$0xff]
    %v2449 = vld [vmem:[%s2364 + $0x2a0] sm:$0xff]
    %v2450 = vld [vmem:[%s2364 + $0x2a8] sm:$0xff]
    %v2451 = vld [vmem:[%s2364 + $0x2b0] sm:$0xff]
    %v2452 = vld [vmem:[%s2364 + $0x2b8] sm:$0xff]
    %v2453 = vld [vmem:[%s2364 + $0x2c0] sm:$0xff]
    %v2454 = vld [vmem:[%s2364 + $0x2c8] sm:$0xff]
    %v2455 = vld [vmem:[%s2364 + $0x2d0] sm:$0xff]
    %v2456 = vld [vmem:[%s2364 + $0x2d8] sm:$0xff]
    %v2457 = vld [vmem:[%s2364 + $0x2e0] sm:$0xff]
    %v2458 = vld [vmem:[%s2364 + $0x2e8] sm:$0xff]
    %v2459 = vld [vmem:[%s2364 + $0x2f0] sm:$0xff]
    %v2460 = vld [vmem:[%s2364 + $0x2f8] sm:$0xff]
    %v2461 = vld [vmem:[%s2364 + $0x300] sm:$0xff]
    %v2462 = vld [vmem:[%s2364 + $0x308] sm:$0xff]
    %v2463 = vld [vmem:[%s2364 + $0x310] sm:$0xff]
    %v2464 = vld [vmem:[%s2364 + $0x318] sm:$0xff]
    %v2465 = vld [vmem:[%s2364 + $0x320] sm:$0xff]
    %v2466 = vld [vmem:[%s2364 + $0x328] sm:$0xff]
    %v2467 = vld [vmem:[%s2364 + $0x330] sm:$0xff]
    %v2468 = vld [vmem:[%s2364 + $0x338] sm:$0xff]
    %v2469 = vld [vmem:[%s2364 + $0x340] sm:$0xff]
    %v2470 = vld [vmem:[%s2364 + $0x348] sm:$0xff]
    %v2471 = vld [vmem:[%s2364 + $0x350] sm:$0xff]
    %v2472 = vld [vmem:[%s2364 + $0x358] sm:$0xff]
    %v2473 = vld [vmem:[%s2364 + $0x360] sm:$0xff]
    %v2474 = vld [vmem:[%s2364 + $0x368] sm:$0xff]
    %v2475 = vld [vmem:[%s2364 + $0x370] sm:$0xff]
    %v2476 = vld [vmem:[%s2364 + $0x378] sm:$0xff]
    %v2477 = vld [vmem:[%s2364 + $0x380] sm:$0xff]
    %v2478 = vld [vmem:[%s2364 + $0x388] sm:$0xff]
    %v2479 = vld [vmem:[%s2364 + $0x390] sm:$0xff]
    %v2480 = vld [vmem:[%s2364 + $0x398] sm:$0xff]
    %v2481 = vld [vmem:[%s2364 + $0x3a0] sm:$0xff]
    %v2482 = vld [vmem:[%s2364 + $0x3a8] sm:$0xff]
    %v2483 = vld [vmem:[%s2364 + $0x3b0] sm:$0xff]
    %v2484 = vld [vmem:[%s2364 + $0x3b8] sm:$0xff]
    %v2485 = vld [vmem:[%s2364 + $0x3c0] sm:$0xff]
    %v2486 = vld [vmem:[%s2364 + $0x3c8] sm:$0xff]
    %v2487 = vld [vmem:[%s2364 + $0x3d0] sm:$0xff]
    %v2488 = vld [vmem:[%s2364 + $0x3d8] sm:$0xff]
    %v2489 = vld [vmem:[%s2364 + $0x3e0] sm:$0xff]
    %v2490 = vld [vmem:[%s2364 + $0x3e8] sm:$0xff]
    %v2491 = vld [vmem:[%s2364 + $0x3f0] sm:$0xff]
    %v2492 = vld [vmem:[%s2364 + $0x3f8] sm:$0xff]
    %vm2493 = vsmask.f32 7424
    %v2495 = vshrl.u32 %v2352, 16
    %v2497 = vshll.u32 %v2352, 16
    %v2499 = vrot.slane %v2497, 1
    %v2500 = vor.u32 %v2495, %v2499
    %v2502 = vshll.u32 %v2356, 16
    %v2504 = vrot.slane %v2502, 1
    %v2505 = vsel %vm2493, %v2500, %v2504
    %v2507 = vshrl.u32 %v2353, 16
    %v2509 = vshll.u32 %v2353, 16
    %v2511 = vrot.slane %v2509, 1
    %v2512 = vor.u32 %v2507, %v2511
    %v2514 = vshll.u32 %v2357, 16
    %v2516 = vrot.slane %v2514, 1
    %v2517 = vsel %vm2493, %v2512, %v2516
    %v2519 = vshrl.u32 %v2354, 16
    %v2521 = vshll.u32 %v2354, 16
    %v2523 = vrot.slane %v2521, 1
    %v2524 = vor.u32 %v2519, %v2523
    %v2526 = vshll.u32 %v2358, 16
    %v2528 = vrot.slane %v2526, 1
    %v2529 = vsel %vm2493, %v2524, %v2528
    %v2531 = vshrl.u32 %v2355, 16
    %v2533 = vshll.u32 %v2355, 16
    %v2535 = vrot.slane %v2533, 1
    %v2536 = vor.u32 %v2531, %v2535
    %v2538 = vshll.u32 %v2359, 16
    %v2540 = vrot.slane %v2538, 1
    %v2541 = vsel %vm2493, %v2536, %v2540
    %v2542 = vshrl.u32 %v2356, 16
    %v2544 = vor.u32 %v2542, %v2504
    %v2546 = vshll.u32 %v2360, 16
    %v2548 = vrot.slane %v2546, 1
    %v2549 = vsel %vm2493, %v2544, %v2548
    %v2550 = vshrl.u32 %v2357, 16
    %v2552 = vor.u32 %v2550, %v2516
    %v2554 = vshll.u32 %v2361, 16
    %v2556 = vrot.slane %v2554, 1
    %v2557 = vsel %vm2493, %v2552, %v2556
    %v2558 = vshrl.u32 %v2358, 16
    %v2560 = vor.u32 %v2558, %v2528
    %v2562 = vshll.u32 %v2362, 16
    %v2564 = vrot.slane %v2562, 1
    %v2565 = vsel %vm2493, %v2560, %v2564
    %v2566 = vshrl.u32 %v2359, 16
    %v2568 = vor.u32 %v2566, %v2540
    %v2570 = vshll.u32 %v2363, 16
    %v2572 = vrot.slane %v2570, 1
    %v2573 = vsel %vm2493, %v2568, %v2572
    %v2574 = vshrl.u32 %v2360, 16
    %v2576 = vor.u32 %v2574, %v2548
    %v2577 = vshrl.u32 %v2361, 16
    %v2579 = vor.u32 %v2577, %v2556
    %v2580 = vshrl.u32 %v2362, 16
    %v2582 = vor.u32 %v2580, %v2564
    %v2583 = vshrl.u32 %v2363, 16
    %v2585 = vor.u32 %v2583, %v2572
    %v2726 = vunpack.c.l.b16 %v2365
    %v2727 = vunpack.c.h.b16 %v2365
    %v2728 = vunpack.c.l.b16 %v2366
    %v2729 = vunpack.c.h.b16 %v2366
    %v2730 = vunpack.c.l.b16 %v2367
    %v2731 = vunpack.c.h.b16 %v2367
    %v2732 = vunpack.c.l.b16 %v2368
    %v2733 = vunpack.c.h.b16 %v2368
    %v2734 = vunpack.c.l.b16 %v2369
    %v2735 = vunpack.c.h.b16 %v2369
    %v2736 = vunpack.c.l.b16 %v2370
    %v2737 = vunpack.c.h.b16 %v2370
    %v2738 = vunpack.c.l.b16 %v2371
    %v2739 = vunpack.c.h.b16 %v2371
    %v2740 = vunpack.c.l.b16 %v2372
    %v2741 = vunpack.c.h.b16 %v2372
    %v2742 = vunpack.c.l.b16 %v2373
    %v2743 = vunpack.c.h.b16 %v2373
    %v2744 = vunpack.c.l.b16 %v2374
    %v2745 = vunpack.c.h.b16 %v2374
    %v2746 = vunpack.c.l.b16 %v2375
    %v2747 = vunpack.c.h.b16 %v2375
    %v2748 = vunpack.c.l.b16 %v2376
    %v2749 = vunpack.c.h.b16 %v2376
    %v2750 = vunpack.c.l.b16 %v2377
    %v2751 = vunpack.c.h.b16 %v2377
    %v2752 = vunpack.c.l.b16 %v2378
    %v2753 = vunpack.c.h.b16 %v2378
    %v2754 = vunpack.c.l.b16 %v2379
    %v2755 = vunpack.c.h.b16 %v2379
    %v2756 = vunpack.c.l.b16 %v2380
    %v2757 = vunpack.c.h.b16 %v2380
    %v2758 = vunpack.c.l.b16 %v2381
    %v2759 = vunpack.c.h.b16 %v2381
    %v2760 = vunpack.c.l.b16 %v2382
    %v2761 = vunpack.c.h.b16 %v2382
    %v2762 = vunpack.c.l.b16 %v2383
    %v2763 = vunpack.c.h.b16 %v2383
    %v2764 = vunpack.c.l.b16 %v2384
    %v2765 = vunpack.c.h.b16 %v2384
    %v2766 = vunpack.c.l.b16 %v2385
    %v2767 = vunpack.c.h.b16 %v2385
    %v2768 = vunpack.c.l.b16 %v2386
    %v2769 = vunpack.c.h.b16 %v2386
    %v2770 = vunpack.c.l.b16 %v2387
    %v2771 = vunpack.c.h.b16 %v2387
    %v2772 = vunpack.c.l.b16 %v2388
    %v2773 = vunpack.c.h.b16 %v2388
    %v2774 = vunpack.c.l.b16 %v2389
    %v2775 = vunpack.c.h.b16 %v2389
    %v2776 = vunpack.c.l.b16 %v2390
    %v2777 = vunpack.c.h.b16 %v2390
    %v2778 = vunpack.c.l.b16 %v2391
    %v2779 = vunpack.c.h.b16 %v2391
    %v2780 = vunpack.c.l.b16 %v2392
    %v2781 = vunpack.c.h.b16 %v2392
    %v2782 = vunpack.c.l.b16 %v2393
    %v2783 = vunpack.c.h.b16 %v2393
    %v2784 = vunpack.c.l.b16 %v2394
    %v2785 = vunpack.c.h.b16 %v2394
    %v2786 = vunpack.c.l.b16 %v2395
    %v2787 = vunpack.c.h.b16 %v2395
    %v2788 = vunpack.c.l.b16 %v2396
    %v2789 = vunpack.c.h.b16 %v2396
    %v2790 = vunpack.c.l.b16 %v2397
    %v2791 = vunpack.c.h.b16 %v2397
    %v2792 = vunpack.c.l.b16 %v2398
    %v2793 = vunpack.c.h.b16 %v2398
    %v2794 = vunpack.c.l.b16 %v2399
    %v2795 = vunpack.c.h.b16 %v2399
    %v2796 = vunpack.c.l.b16 %v2400
    %v2797 = vunpack.c.h.b16 %v2400
    %v2798 = vunpack.c.l.b16 %v2401
    %v2799 = vunpack.c.h.b16 %v2401
    %v2800 = vunpack.c.l.b16 %v2402
    %v2801 = vunpack.c.h.b16 %v2402
    %v2802 = vunpack.c.l.b16 %v2403
    %v2803 = vunpack.c.h.b16 %v2403
    %v2804 = vunpack.c.l.b16 %v2404
    %v2805 = vunpack.c.h.b16 %v2404
    %v2806 = vunpack.c.l.b16 %v2405
    %v2807 = vunpack.c.h.b16 %v2405
    %v2808 = vunpack.c.l.b16 %v2406
    %v2809 = vunpack.c.h.b16 %v2406
    %v2810 = vunpack.c.l.b16 %v2407
    %v2811 = vunpack.c.h.b16 %v2407
    %v2812 = vunpack.c.l.b16 %v2408
    %v2813 = vunpack.c.h.b16 %v2408
    %v2814 = vunpack.c.l.b16 %v2409
    %v2815 = vunpack.c.h.b16 %v2409
    %v2816 = vunpack.c.l.b16 %v2410
    %v2817 = vunpack.c.h.b16 %v2410
    %v2818 = vunpack.c.l.b16 %v2411
    %v2819 = vunpack.c.h.b16 %v2411
    %v2820 = vunpack.c.l.b16 %v2412
    %v2821 = vunpack.c.h.b16 %v2412
    %v2822 = vunpack.c.l.b16 %v2413
    %v2823 = vunpack.c.h.b16 %v2413
    %v2824 = vunpack.c.l.b16 %v2414
    %v2825 = vunpack.c.h.b16 %v2414
    %v2826 = vunpack.c.l.b16 %v2415
    %v2827 = vunpack.c.h.b16 %v2415
    %v2828 = vunpack.c.l.b16 %v2416
    %v2829 = vunpack.c.h.b16 %v2416
    %v2830 = vunpack.c.l.b16 %v2417
    %v2831 = vunpack.c.h.b16 %v2417
    %v2832 = vunpack.c.l.b16 %v2418
    %v2833 = vunpack.c.h.b16 %v2418
    %v2834 = vunpack.c.l.b16 %v2419
    %v2835 = vunpack.c.h.b16 %v2419
    %v2836 = vunpack.c.l.b16 %v2420
    %v2837 = vunpack.c.h.b16 %v2420
    %v2838 = vunpack.c.l.b16 %v2421
    %v2839 = vunpack.c.h.b16 %v2421
    %v2840 = vunpack.c.l.b16 %v2422
    %v2841 = vunpack.c.h.b16 %v2422
    %v2842 = vunpack.c.l.b16 %v2423
    %v2843 = vunpack.c.h.b16 %v2423
    %v2844 = vunpack.c.l.b16 %v2424
    %v2845 = vunpack.c.h.b16 %v2424
    %v2846 = vunpack.c.l.b16 %v2425
    %v2847 = vunpack.c.h.b16 %v2425
    %v2848 = vunpack.c.l.b16 %v2426
    %v2849 = vunpack.c.h.b16 %v2426
    %v2850 = vunpack.c.l.b16 %v2427
    %v2851 = vunpack.c.h.b16 %v2427
    %v2852 = vunpack.c.l.b16 %v2428
    %v2853 = vunpack.c.h.b16 %v2428
    %v2854 = vunpack.c.l.b16 %v2429
    %v2855 = vunpack.c.h.b16 %v2429
    %v2856 = vunpack.c.l.b16 %v2430
    %v2857 = vunpack.c.h.b16 %v2430
    %v2858 = vunpack.c.l.b16 %v2431
    %v2859 = vunpack.c.h.b16 %v2431
    %v2860 = vunpack.c.l.b16 %v2432
    %v2861 = vunpack.c.h.b16 %v2432
    %v2862 = vunpack.c.l.b16 %v2433
    %v2863 = vunpack.c.h.b16 %v2433
    %v2864 = vunpack.c.l.b16 %v2434
    %v2865 = vunpack.c.h.b16 %v2434
    %v2866 = vunpack.c.l.b16 %v2435
    %v2867 = vunpack.c.h.b16 %v2435
    %v2868 = vunpack.c.l.b16 %v2436
    %v2869 = vunpack.c.h.b16 %v2436
    %v2870 = vunpack.c.l.b16 %v2437
    %v2871 = vunpack.c.h.b16 %v2437
    %v2872 = vunpack.c.l.b16 %v2438
    %v2873 = vunpack.c.h.b16 %v2438
    %v2874 = vunpack.c.l.b16 %v2439
    %v2875 = vunpack.c.h.b16 %v2439
    %v2876 = vunpack.c.l.b16 %v2440
    %v2877 = vunpack.c.h.b16 %v2440
    %v2878 = vunpack.c.l.b16 %v2441
    %v2879 = vunpack.c.h.b16 %v2441
    %v2880 = vunpack.c.l.b16 %v2442
    %v2881 = vunpack.c.h.b16 %v2442
    %v2882 = vunpack.c.l.b16 %v2443
    %v2883 = vunpack.c.h.b16 %v2443
    %v2884 = vunpack.c.l.b16 %v2444
    %v2885 = vunpack.c.h.b16 %v2444
    %v2886 = vunpack.c.l.b16 %v2445
    %v2887 = vunpack.c.h.b16 %v2445
    %v2888 = vunpack.c.l.b16 %v2446
    %v2889 = vunpack.c.h.b16 %v2446
    %v2890 = vunpack.c.l.b16 %v2447
    %v2891 = vunpack.c.h.b16 %v2447
    %v2892 = vunpack.c.l.b16 %v2448
    %v2893 = vunpack.c.h.b16 %v2448
    %v2894 = vunpack.c.l.b16 %v2449
    %v2895 = vunpack.c.h.b16 %v2449
    %v2896 = vunpack.c.l.b16 %v2450
    %v2897 = vunpack.c.h.b16 %v2450
    %v2898 = vunpack.c.l.b16 %v2451
    %v2899 = vunpack.c.h.b16 %v2451
    %v2900 = vunpack.c.l.b16 %v2452
    %v2901 = vunpack.c.h.b16 %v2452
    %v2902 = vunpack.c.l.b16 %v2453
    %v2903 = vunpack.c.h.b16 %v2453
    %v2904 = vunpack.c.l.b16 %v2454
    %v2905 = vunpack.c.h.b16 %v2454
    %v2906 = vunpack.c.l.b16 %v2455
    %v2907 = vunpack.c.h.b16 %v2455
    %v2908 = vunpack.c.l.b16 %v2456
    %v2909 = vunpack.c.h.b16 %v2456
    %v2910 = vunpack.c.l.b16 %v2457
    %v2911 = vunpack.c.h.b16 %v2457
    %v2912 = vunpack.c.l.b16 %v2458
    %v2913 = vunpack.c.h.b16 %v2458
    %v2914 = vunpack.c.l.b16 %v2459
    %v2915 = vunpack.c.h.b16 %v2459
    %v2916 = vunpack.c.l.b16 %v2460
    %v2917 = vunpack.c.h.b16 %v2460
    %v2918 = vunpack.c.l.b16 %v2461
    %v2919 = vunpack.c.h.b16 %v2461
    %v2920 = vunpack.c.l.b16 %v2462
    %v2921 = vunpack.c.h.b16 %v2462
    %v2922 = vunpack.c.l.b16 %v2463
    %v2923 = vunpack.c.h.b16 %v2463
    %v2924 = vunpack.c.l.b16 %v2464
    %v2925 = vunpack.c.h.b16 %v2464
    %v2926 = vunpack.c.l.b16 %v2465
    %v2927 = vunpack.c.h.b16 %v2465
    %v2928 = vunpack.c.l.b16 %v2466
    %v2929 = vunpack.c.h.b16 %v2466
    %v2930 = vunpack.c.l.b16 %v2467
    %v2931 = vunpack.c.h.b16 %v2467
    %v2932 = vunpack.c.l.b16 %v2468
    %v2933 = vunpack.c.h.b16 %v2468
    %v2934 = vunpack.c.l.b16 %v2469
    %v2935 = vunpack.c.h.b16 %v2469
    %v2936 = vunpack.c.l.b16 %v2470
    %v2937 = vunpack.c.h.b16 %v2470
    %v2938 = vunpack.c.l.b16 %v2471
    %v2939 = vunpack.c.h.b16 %v2471
    %v2940 = vunpack.c.l.b16 %v2472
    %v2941 = vunpack.c.h.b16 %v2472
    %v2942 = vunpack.c.l.b16 %v2473
    %v2943 = vunpack.c.h.b16 %v2473
    %v2944 = vunpack.c.l.b16 %v2474
    %v2945 = vunpack.c.h.b16 %v2474
    %v2946 = vunpack.c.l.b16 %v2475
    %v2947 = vunpack.c.h.b16 %v2475
    %v2948 = vunpack.c.l.b16 %v2476
    %v2949 = vunpack.c.h.b16 %v2476
    %v2950 = vunpack.c.l.b16 %v2477
    %v2951 = vunpack.c.h.b16 %v2477
    %v2952 = vunpack.c.l.b16 %v2478
    %v2953 = vunpack.c.h.b16 %v2478
    %v2954 = vunpack.c.l.b16 %v2479
    %v2955 = vunpack.c.h.b16 %v2479
    %v2956 = vunpack.c.l.b16 %v2480
    %v2957 = vunpack.c.h.b16 %v2480
    %v2958 = vunpack.c.l.b16 %v2481
    %v2959 = vunpack.c.h.b16 %v2481
    %v2960 = vunpack.c.l.b16 %v2482
    %v2961 = vunpack.c.h.b16 %v2482
    %v2962 = vunpack.c.l.b16 %v2483
    %v2963 = vunpack.c.h.b16 %v2483
    %v2964 = vunpack.c.l.b16 %v2484
    %v2965 = vunpack.c.h.b16 %v2484
    %v2966 = vunpack.c.l.b16 %v2485
    %v2967 = vunpack.c.h.b16 %v2485
    %v2968 = vunpack.c.l.b16 %v2486
    %v2969 = vunpack.c.h.b16 %v2486
    %v2970 = vunpack.c.l.b16 %v2487
    %v2971 = vunpack.c.h.b16 %v2487
    %v2972 = vunpack.c.l.b16 %v2488
    %v2973 = vunpack.c.h.b16 %v2488
    %v2974 = vunpack.c.l.b16 %v2489
    %v2975 = vunpack.c.h.b16 %v2489
    %v2976 = vunpack.c.l.b16 %v2490
    %v2977 = vunpack.c.h.b16 %v2490
    %v2978 = vunpack.c.l.b16 %v2491
    %v2979 = vunpack.c.h.b16 %v2491
    %v2980 = vunpack.c.l.b16 %v2492
    %v2981 = vunpack.c.h.b16 %v2492
    %v2982 = vpack.c.b16 %v2730, %v2726
    %v2983 = vpack.c.b16 %v2731, %v2727
    %v2984 = vpack.c.b16 %v2732, %v2728
    %v2985 = vpack.c.b16 %v2733, %v2729
    %v2986 = vpack.c.b16 %v2738, %v2734
    %v2987 = vpack.c.b16 %v2739, %v2735
    %v2988 = vpack.c.b16 %v2740, %v2736
    %v2989 = vpack.c.b16 %v2741, %v2737
    %v2990 = vpack.c.b16 %v2746, %v2742
    %v2991 = vpack.c.b16 %v2747, %v2743
    %v2992 = vpack.c.b16 %v2748, %v2744
    %v2993 = vpack.c.b16 %v2749, %v2745
    %v2994 = vpack.c.b16 %v2754, %v2750
    %v2995 = vpack.c.b16 %v2755, %v2751
    %v2996 = vpack.c.b16 %v2756, %v2752
    %v2997 = vpack.c.b16 %v2757, %v2753
    %v2998 = vpack.c.b16 %v2762, %v2758
    %v2999 = vpack.c.b16 %v2763, %v2759
    %v3000 = vpack.c.b16 %v2764, %v2760
    %v3001 = vpack.c.b16 %v2765, %v2761
    %v3002 = vpack.c.b16 %v2770, %v2766
    %v3003 = vpack.c.b16 %v2771, %v2767
    %v3004 = vpack.c.b16 %v2772, %v2768
    %v3005 = vpack.c.b16 %v2773, %v2769
    %v3006 = vpack.c.b16 %v2778, %v2774
    %v3007 = vpack.c.b16 %v2779, %v2775
    %v3008 = vpack.c.b16 %v2780, %v2776
    %v3009 = vpack.c.b16 %v2781, %v2777
    %v3010 = vpack.c.b16 %v2786, %v2782
    %v3011 = vpack.c.b16 %v2787, %v2783
    %v3012 = vpack.c.b16 %v2788, %v2784
    %v3013 = vpack.c.b16 %v2789, %v2785
    %v3014 = vpack.c.b16 %v2794, %v2790
    %v3015 = vpack.c.b16 %v2795, %v2791
    %v3016 = vpack.c.b16 %v2796, %v2792
    %v3017 = vpack.c.b16 %v2797, %v2793
    %v3018 = vpack.c.b16 %v2802, %v2798
    %v3019 = vpack.c.b16 %v2803, %v2799
    %v3020 = vpack.c.b16 %v2804, %v2800
    %v3021 = vpack.c.b16 %v2805, %v2801
    %v3022 = vpack.c.b16 %v2810, %v2806
    %v3023 = vpack.c.b16 %v2811, %v2807
    %v3024 = vpack.c.b16 %v2812, %v2808
    %v3025 = vpack.c.b16 %v2813, %v2809
    %v3026 = vpack.c.b16 %v2818, %v2814
    %v3027 = vpack.c.b16 %v2819, %v2815
    %v3028 = vpack.c.b16 %v2820, %v2816
    %v3029 = vpack.c.b16 %v2821, %v2817
    %v3030 = vpack.c.b16 %v2826, %v2822
    %v3031 = vpack.c.b16 %v2827, %v2823
    %v3032 = vpack.c.b16 %v2828, %v2824
    %v3033 = vpack.c.b16 %v2829, %v2825
    %v3034 = vpack.c.b16 %v2834, %v2830
    %v3035 = vpack.c.b16 %v2835, %v2831
    %v3036 = vpack.c.b16 %v2836, %v2832
    %v3037 = vpack.c.b16 %v2837, %v2833
    %v3038 = vpack.c.b16 %v2842, %v2838
    %v3039 = vpack.c.b16 %v2843, %v2839
    %v3040 = vpack.c.b16 %v2844, %v2840
    %v3041 = vpack.c.b16 %v2845, %v2841
    %v3042 = vpack.c.b16 %v2850, %v2846
    %v3043 = vpack.c.b16 %v2851, %v2847
    %v3044 = vpack.c.b16 %v2852, %v2848
    %v3045 = vpack.c.b16 %v2853, %v2849
    %v3046 = vpack.c.b16 %v2858, %v2854
    %v3047 = vpack.c.b16 %v2859, %v2855
    %v3048 = vpack.c.b16 %v2860, %v2856
    %v3049 = vpack.c.b16 %v2861, %v2857
    %v3050 = vpack.c.b16 %v2866, %v2862
    %v3051 = vpack.c.b16 %v2867, %v2863
    %v3052 = vpack.c.b16 %v2868, %v2864
    %v3053 = vpack.c.b16 %v2869, %v2865
    %v3054 = vpack.c.b16 %v2874, %v2870
    %v3055 = vpack.c.b16 %v2875, %v2871
    %v3056 = vpack.c.b16 %v2876, %v2872
    %v3057 = vpack.c.b16 %v2877, %v2873
    %v3058 = vpack.c.b16 %v2882, %v2878
    %v3059 = vpack.c.b16 %v2883, %v2879
    %v3060 = vpack.c.b16 %v2884, %v2880
    %v3061 = vpack.c.b16 %v2885, %v2881
    %v3062 = vpack.c.b16 %v2890, %v2886
    %v3063 = vpack.c.b16 %v2891, %v2887
    %v3064 = vpack.c.b16 %v2892, %v2888
    %v3065 = vpack.c.b16 %v2893, %v2889
    %v3066 = vpack.c.b16 %v2898, %v2894
    %v3067 = vpack.c.b16 %v2899, %v2895
    %v3068 = vpack.c.b16 %v2900, %v2896
    %v3069 = vpack.c.b16 %v2901, %v2897
    %v3070 = vpack.c.b16 %v2906, %v2902
    %v3071 = vpack.c.b16 %v2907, %v2903
    %v3072 = vpack.c.b16 %v2908, %v2904
    %v3073 = vpack.c.b16 %v2909, %v2905
    %v3074 = vpack.c.b16 %v2914, %v2910
    %v3075 = vpack.c.b16 %v2915, %v2911
    %v3076 = vpack.c.b16 %v2916, %v2912
    %v3077 = vpack.c.b16 %v2917, %v2913
    %v3078 = vpack.c.b16 %v2922, %v2918
    %v3079 = vpack.c.b16 %v2923, %v2919
    %v3080 = vpack.c.b16 %v2924, %v2920
    %v3081 = vpack.c.b16 %v2925, %v2921
    %v3082 = vpack.c.b16 %v2930, %v2926
    %v3083 = vpack.c.b16 %v2931, %v2927
    %v3084 = vpack.c.b16 %v2932, %v2928
    %v3085 = vpack.c.b16 %v2933, %v2929
    %v3086 = vpack.c.b16 %v2938, %v2934
    %v3087 = vpack.c.b16 %v2939, %v2935
    %v3088 = vpack.c.b16 %v2940, %v2936
    %v3089 = vpack.c.b16 %v2941, %v2937
    %v3090 = vpack.c.b16 %v2946, %v2942
    %v3091 = vpack.c.b16 %v2947, %v2943
    %v3092 = vpack.c.b16 %v2948, %v2944
    %v3093 = vpack.c.b16 %v2949, %v2945
    %v3094 = vpack.c.b16 %v2954, %v2950
    %v3095 = vpack.c.b16 %v2955, %v2951
    %v3096 = vpack.c.b16 %v2956, %v2952
    %v3097 = vpack.c.b16 %v2957, %v2953
    %v3098 = vpack.c.b16 %v2962, %v2958
    %v3099 = vpack.c.b16 %v2963, %v2959
    %v3100 = vpack.c.b16 %v2964, %v2960
    %v3101 = vpack.c.b16 %v2965, %v2961
    %v3102 = vpack.c.b16 %v2970, %v2966
    %v3103 = vpack.c.b16 %v2971, %v2967
    %v3104 = vpack.c.b16 %v2972, %v2968
    %v3105 = vpack.c.b16 %v2973, %v2969
    %v3106 = vpack.c.b16 %v2978, %v2974
    %v3107 = vpack.c.b16 %v2979, %v2975
    %v3108 = vpack.c.b16 %v2980, %v2976
    %v3109 = vpack.c.b16 %v2981, %v2977
    %3238 = vmatprep.subr.bf16.mxu0 %v2983
    %3239 = vmatpush1.bf16.msra.mxu0 %v2982
    %3240 = vmatprep.subr.bf16.mxu0 %v2987
    %3241 = vmatpush1.bf16.msra.mxu0 %v2986
    %3242 = vmatprep.subr.bf16.mxu0 %v2991
    %3243 = vmatpush1.bf16.msra.mxu0 %v2990
    %3244 = vmatprep.subr.bf16.mxu0 %v2995
    %3245 = vmatpush1.bf16.msra.mxu0 %v2994
    %3246 = vmatprep.subr.bf16.mxu0 %v2999
    %3247 = vmatpush1.bf16.msra.mxu0 %v2998
    %3248 = vmatprep.subr.bf16.mxu0 %v3003
    %3249 = vmatpush1.bf16.msra.mxu0 %v3002
    %3250 = vmatprep.subr.bf16.mxu0 %v3007
    %3251 = vmatpush1.bf16.msra.mxu0 %v3006
    %3252 = vmatprep.subr.bf16.mxu0 %v3011
    %3253 = vmatpush1.bf16.msra.mxu0 %v3010
    %3254 = vmatprep.subr.bf16.mxu0 %v3015
    %3255 = vmatpush1.bf16.msra.mxu0 %v3014
    %3256 = vmatprep.subr.bf16.mxu0 %v3019
    %3257 = vmatpush1.bf16.msra.mxu0 %v3018
    %3258 = vmatprep.subr.bf16.mxu0 %v3023
    %3259 = vmatpush1.bf16.msra.mxu0 %v3022
    %3260 = vmatprep.subr.bf16.mxu0 %v3027
    %3261 = vmatpush1.bf16.msra.mxu0 %v3026
    %3262 = vmatprep.subr.bf16.mxu0 %v3031
    %3263 = vmatpush1.bf16.msra.mxu0 %v3030
    %3264 = vmatprep.subr.bf16.mxu0 %v3035
    %3265 = vmatpush1.bf16.msra.mxu0 %v3034
    %3266 = vmatprep.subr.bf16.mxu0 %v3039
    %3267 = vmatpush1.bf16.msra.mxu0 %v3038
    %3268 = vmatprep.subr.bf16.mxu0 %v3043
    %3269 = vmatpush1.bf16.msra.mxu0 %v3042
    %3270 = vmatprep.mubr.bf16.mxu0 %v2517
    %3271 = vmatmul.mubr.bf16.gmra.mrb[0].mxu0 %v2505
    %v3272 = vpop.f32.mrb[0].mxu0
    %v3273 = vadd.f32 0.0, %v3272
    %v3274 = vpop.f32.mrb[0].mxu0
    %v3275 = vadd.f32 0.0, %v3274
    %v3276 = vpop.f32.mrb[0].mxu0
    %v3277 = vadd.f32 0.0, %v3276
    %v3278 = vpop.f32.mrb[0].mxu0
    %v3279 = vadd.f32 0.0, %v3278
    %3280 = vmatprep.mubr.bf16.mxu0 %v2557
    %3281 = vmatmul.mubr.bf16.gmra.mrb[0].mxu0 %v2549
    %v3282 = vpop.f32.mrb[0].mxu0
    %v3283 = vpop.f32.mrb[0].mxu0
    %v3284 = vpop.f32.mrb[0].mxu0
    %v3285 = vadd.f32 0.0, %v3284
    %v3286 = vpop.f32.mrb[0].mxu0
    %v3287 = vadd.f32 0.0, %v3286
    %3288 = vmatprep.mubr.bf16.mxu0 %v2579
    %3289 = vmatmul.mubr.bf16.gmra.mrb[0].mxu0 %v2576
    %v3290 = vpop.f32.mrb[0].mxu0
    %v3291 = vadd.f32 0.0, %v3290
    %v3292 = vpop.f32.mrb[0].mxu0
    %v3293 = vadd.f32 0.0, %v3292
    %v3294 = vpop.f32.mrb[0].mxu0
    %v3295 = vpop.f32.mrb[0].mxu0
    %3296 = vdwg.mxu0
    %3297 = vmatprep.subr.bf16.mxu0 %v3047
    %3298 = vmatpush1.bf16.msra.mxu0 %v3046
    %3299 = vmatprep.subr.bf16.mxu0 %v3051
    %3300 = vmatpush1.bf16.msra.mxu0 %v3050
    %3301 = vmatprep.subr.bf16.mxu0 %v3055
    %3302 = vmatpush1.bf16.msra.mxu0 %v3054
    %3303 = vmatprep.subr.bf16.mxu0 %v3059
    %3304 = vmatpush1.bf16.msra.mxu0 %v3058
    %3305 = vmatprep.subr.bf16.mxu0 %v3063
    %3306 = vmatpush1.bf16.msra.mxu0 %v3062
    %3307 = vmatprep.subr.bf16.mxu0 %v3067
    %3308 = vmatpush1.bf16.msra.mxu0 %v3066
    %3309 = vmatprep.subr.bf16.mxu0 %v3071
    %3310 = vmatpush1.bf16.msra.mxu0 %v3070
    %3311 = vmatprep.subr.bf16.mxu0 %v3075
    %3312 = vmatpush1.bf16.msra.mxu0 %v3074
    %3313 = vmatprep.subr.bf16.mxu0 %v3079
    %3314 = vmatpush1.bf16.msra.mxu0 %v3078
    %3315 = vmatprep.subr.bf16.mxu0 %v3083
    %3316 = vmatpush1.bf16.msra.mxu0 %v3082
    %3317 = vmatprep.subr.bf16.mxu0 %v3087
    %3318 = vmatpush1.bf16.msra.mxu0 %v3086
    %3319 = vmatprep.subr.bf16.mxu0 %v3091
    %3320 = vmatpush1.bf16.msra.mxu0 %v3090
    %3321 = vmatprep.subr.bf16.mxu0 %v3095
    %3322 = vmatpush1.bf16.msra.mxu0 %v3094
    %3323 = vmatprep.subr.bf16.mxu0 %v3099
    %3324 = vmatpush1.bf16.msra.mxu0 %v3098
    %3325 = vmatprep.subr.bf16.mxu0 %v3103
    %3326 = vmatpush1.bf16.msra.mxu0 %v3102
    %3327 = vmatprep.subr.bf16.mxu0 %v3107
    %3328 = vmatpush1.bf16.msra.mxu0 %v3106
    %3329 = vmatprep.mubr.bf16.mxu0 %v2541
    %3330 = vmatmul.mubr.bf16.gmra.mrb[0].mxu0 %v2529
    %v3331 = vpop.f32.mrb[0].mxu0
    %v3332 = vadd.f32 %v3273, %v3331
    %v3333 = vpop.f32.mrb[0].mxu0
    %v3334 = vadd.f32 %v3275, %v3333
    %v3335 = vpop.f32.mrb[0].mxu0
    %v3336 = vadd.f32 %v3277, %v3335
    %v3337 = vpop.f32.mrb[0].mxu0
    %v3338 = vadd.f32 %v3279, %v3337
    %3339 = vmatprep.mubr.bf16.mxu0 %v2573
    %3340 = vmatmul.mubr.bf16.gmra.mrb[0].mxu0 %v2565
    %v3341 = vpop.f32.mrb[0].mxu0
    %v3342 = vpop.f32.mrb[0].mxu0
    %v3343 = vpop.f32.mrb[0].mxu0
    %v3344 = vadd.f32 %v3285, %v3343
    %v3345 = vpop.f32.mrb[0].mxu0
    %v3346 = vadd.f32 %v3287, %v3345
    %3347 = vmatprep.mubr.bf16.mxu0 %v2585
    %3348 = vmatmul.mubr.bf16.gmra.mrb[0].mxu0 %v2582
    %v3349 = vpop.f32.mrb[0].mxu0
    %v3350 = vadd.f32 %v3291, %v3349
    %v3351 = vpop.f32.mrb[0].mxu0
    %v3352 = vadd.f32 %v3293, %v3351
    %v3353 = vpop.f32.mrb[0].mxu0
    %v3354 = vpop.f32.mrb[0].mxu0
    %3355 = vdwg.mxu0
    %3356 = vmatprep.subr.bf16.mxu0 %v2985
    %3357 = vmatpush1.bf16.msra.mxu0 %v2984
    %3358 = vmatprep.subr.bf16.mxu0 %v2989
    %3359 = vmatpush1.bf16.msra.mxu0 %v2988
    %3360 = vmatprep.subr.bf16.mxu0 %v2993
    %3361 = vmatpush1.bf16.msra.mxu0 %v2992
    %3362 = vmatprep.subr.bf16.mxu0 %v2997
    %3363 = vmatpush1.bf16.msra.mxu0 %v2996
    %3364 = vmatprep.subr.bf16.mxu0 %v3001
    %3365 = vmatpush1.bf16.msra.mxu0 %v3000
    %3366 = vmatprep.subr.bf16.mxu0 %v3005
    %3367 = vmatpush1.bf16.msra.mxu0 %v3004
    %3368 = vmatprep.subr.bf16.mxu0 %v3009
    %3369 = vmatpush1.bf16.msra.mxu0 %v3008
    %3370 = vmatprep.subr.bf16.mxu0 %v3013
    %3371 = vmatpush1.bf16.msra.mxu0 %v3012
    %3372 = vmatprep.subr.bf16.mxu0 %v3017
    %3373 = vmatpush1.bf16.msra.mxu0 %v3016
    %3374 = vmatprep.subr.bf16.mxu0 %v3021
    %3375 = vmatpush1.bf16.msra.mxu0 %v3020
    %3376 = vmatprep.subr.bf16.mxu0 %v3025
    %3377 = vmatpush1.bf16.msra.mxu0 %v3024
    %3378 = vmatprep.subr.bf16.mxu0 %v3029
    %3379 = vmatpush1.bf16.msra.mxu0 %v3028
    %3380 = vmatprep.subr.bf16.mxu0 %v3033
    %3381 = vmatpush1.bf16.msra.mxu0 %v3032
    %3382 = vmatprep.subr.bf16.mxu0 %v3037
    %3383 = vmatpush1.bf16.msra.mxu0 %v3036
    %3384 = vmatprep.subr.bf16.mxu0 %v3041
    %3385 = vmatpush1.bf16.msra.mxu0 %v3040
    %3386 = vmatprep.subr.bf16.mxu0 %v3045
    %3387 = vmatpush1.bf16.msra.mxu0 %v3044
    %3388 = vmatprep.mubr.bf16.mxu0 %v2517
    %3389 = vmatmul.mubr.bf16.gmra.mrb[0].mxu0 %v2505
    %v3390 = vpop.f32.mrb[0].mxu0
    %v3391 = vadd.f32 0.0, %v3390
    %v3392 = vpop.f32.mrb[0].mxu0
    %v3393 = vadd.f32 0.0, %v3392
    %v3394 = vpop.f32.mrb[0].mxu0
    %v3395 = vadd.f32 0.0, %v3394
    %v3396 = vpop.f32.mrb[0].mxu0
    %v3397 = vadd.f32 0.0, %v3396
    %3398 = vmatprep.mubr.bf16.mxu0 %v2557
    %3399 = vmatmul.mubr.bf16.gmra.mrb[0].mxu0 %v2549
    %v3400 = vpop.f32.mrb[0].mxu0
    %v3401 = vpop.f32.mrb[0].mxu0
    %v3402 = vpop.f32.mrb[0].mxu0
    %v3403 = vadd.f32 0.0, %v3402
    %v3404 = vpop.f32.mrb[0].mxu0
    %v3405 = vadd.f32 0.0, %v3404
    %3406 = vmatprep.mubr.bf16.mxu0 %v2579
    %3407 = vmatmul.mubr.bf16.gmra.mrb[0].mxu0 %v2576
    %v3408 = vpop.f32.mrb[0].mxu0
    %v3409 = vadd.f32 0.0, %v3408
    %v3410 = vpop.f32.mrb[0].mxu0
    %v3411 = vadd.f32 0.0, %v3410
    %v3412 = vpop.f32.mrb[0].mxu0
    %v3413 = vpop.f32.mrb[0].mxu0
    %3414 = vdwg.mxu0
    %3415 = vmatprep.subr.bf16.mxu0 %v3049
    %3416 = vmatpush1.bf16.msra.mxu0 %v3048
    %3417 = vmatprep.subr.bf16.mxu0 %v3053
    %3418 = vmatpush1.bf16.msra.mxu0 %v3052
    %3419 = vmatprep.subr.bf16.mxu0 %v3057
    %3420 = vmatpush1.bf16.msra.mxu0 %v3056
    %3421 = vmatprep.subr.bf16.mxu0 %v3061
    %3422 = vmatpush1.bf16.msra.mxu0 %v3060
    %3423 = vmatprep.subr.bf16.mxu0 %v3065
    %3424 = vmatpush1.bf16.msra.mxu0 %v3064
    %3425 = vmatprep.subr.bf16.mxu0 %v3069
    %3426 = vmatpush1.bf16.msra.mxu0 %v3068
    %3427 = vmatprep.subr.bf16.mxu0 %v3073
    %3428 = vmatpush1.bf16.msra.mxu0 %v3072
    %3429 = vmatprep.subr.bf16.mxu0 %v3077
    %3430 = vmatpush1.bf16.msra.mxu0 %v3076
    %3431 = vmatprep.subr.bf16.mxu0 %v3081
    %3432 = vmatpush1.bf16.msra.mxu0 %v3080
    %3433 = vmatprep.subr.bf16.mxu0 %v3085
    %3434 = vmatpush1.bf16.msra.mxu0 %v3084
    %3435 = vmatprep.subr.bf16.mxu0 %v3089
    %3436 = vmatpush1.bf16.msra.mxu0 %v3088
    %3437 = vmatprep.subr.bf16.mxu0 %v3093
    %3438 = vmatpush1.bf16.msra.mxu0 %v3092
    %3439 = vmatprep.subr.bf16.mxu0 %v3097
    %3440 = vmatpush1.bf16.msra.mxu0 %v3096
    %3441 = vmatprep.subr.bf16.mxu0 %v3101
    %3442 = vmatpush1.bf16.msra.mxu0 %v3100
    %3443 = vmatprep.subr.bf16.mxu0 %v3105
    %3444 = vmatpush1.bf16.msra.mxu0 %v3104
    %3445 = vmatprep.subr.bf16.mxu0 %v3109
    %3446 = vmatpush1.bf16.msra.mxu0 %v3108
    %3447 = vmatprep.mubr.bf16.mxu0 %v2541
    %3448 = vmatmul.mubr.bf16.gmra.mrb[0].mxu0 %v2529
    %v3449 = vpop.f32.mrb[0].mxu0
    %v3450 = vadd.f32 %v3391, %v3449
    %v3451 = vpop.f32.mrb[0].mxu0
    %v3452 = vadd.f32 %v3393, %v3451
    %v3453 = vpop.f32.mrb[0].mxu0
    %v3454 = vadd.f32 %v3395, %v3453
    %v3455 = vpop.f32.mrb[0].mxu0
    %v3456 = vadd.f32 %v3397, %v3455
    %3457 = vmatprep.mubr.bf16.mxu0 %v2573
    %3458 = vmatmul.mubr.bf16.gmra.mrb[0].mxu0 %v2565
    %v3459 = vpop.f32.mrb[0].mxu0
    %v3460 = vpop.f32.mrb[0].mxu0
    %v3461 = vpop.f32.mrb[0].mxu0
    %v3462 = vadd.f32 %v3403, %v3461
    %v3463 = vpop.f32.mrb[0].mxu0
    %v3464 = vadd.f32 %v3405, %v3463
    %3465 = vmatprep.mubr.bf16.mxu0 %v2585
    %3466 = vmatmul.mubr.bf16.gmra.mrb[0].mxu0 %v2582
    %v3467 = vpop.f32.mrb[0].mxu0
    %v3468 = vadd.f32 %v3409, %v3467
    %v3469 = vpop.f32.mrb[0].mxu0
    %v3470 = vadd.f32 %v3411, %v3469
    %v3471 = vpop.f32.mrb[0].mxu0
    %v3472 = vpop.f32.mrb[0].mxu0
    %3473 = vdwg.mxu0
    %v3474 = vadd.f32 %v2186, %v3332
    %v3475 = vadd.f32 %v2188, %v3334
    %v3476 = vadd.f32 %v2304, %v3450
    %v3477 = vadd.f32 %v2306, %v3452
    %v3478 = vadd.f32 %v2190, %v3336
    %v3479 = vadd.f32 %v2192, %v3338
    %v3480 = vadd.f32 %v2308, %v3454
    %v3481 = vadd.f32 %v2310, %v3456
    %v3482 = vadd.f32 %v2198, %v3344
    %v3483 = vadd.f32 %v2200, %v3346
    %v3484 = vadd.f32 %v2316, %v3462
    %v3485 = vadd.f32 %v2318, %v3464
    %v3486 = vadd.f32 %v2204, %v3350
    %v3487 = vadd.f32 %v2206, %v3352
    %v3488 = vadd.f32 %v2322, %v3468
    %v3489 = vadd.f32 %v2324, %v3470
    %v3490 = vld [vmem:[#allocation9] sm:$0xf]
    %v3492 = vlaneseq
    %v3493 = vshrl.u32 %v3492, 7
    %v3494 = vsub.s32 0, %v3493
    %v3495 = vrot.slane %v3490, %v3494
    %v3496 = vlaneseq
    %v3497 = vshrl.u32 %v3496, 7
    %v3498 = vsub.s32 1, %v3497
    %v3499 = vrot.slane %v3490, %v3498
    %v3500 = vlaneseq
    %v3501 = vshrl.u32 %v3500, 7
    %v3502 = vsub.s32 2, %v3501
    %v3503 = vrot.slane %v3490, %v3502
    %v3504 = vlaneseq
    %v3505 = vshrl.u32 %v3504, 7
    %v3506 = vsub.s32 3, %v3505
    %v3507 = vrot.slane %v3490, %v3506
    %v3512 = vadd.f32 %v3474, %v3495
    %v3513 = vadd.f32 %v3475, %v3499
    %v3514 = vadd.f32 %v3476, %v3503
    %v3515 = vadd.f32 %v3477, %v3507
    %v3516 = vadd.f32 %v3478, %v3495
    %v3517 = vadd.f32 %v3479, %v3499
    %v3518 = vadd.f32 %v3480, %v3503
    %v3519 = vadd.f32 %v3481, %v3507
    %v3520 = vadd.f32 %v3482, %v3495
    %v3521 = vadd.f32 %v3483, %v3499
    %v3522 = vadd.f32 %v3484, %v3503
    %v3523 = vadd.f32 %v3485, %v3507
    %v3524 = vadd.f32 %v3486, %v3495
    %v3525 = vadd.f32 %v3487, %v3499
    %v3526 = vadd.f32 %v3488, %v3503
    %v3527 = vadd.f32 %v3489, %v3507
    %v3528 = vmax.f32 %v3512, 0.0
    %v3529 = vmax.f32 %v3513, 0.0
    %v3530 = vmax.f32 %v3514, 0.0
    %v3531 = vmax.f32 %v3515, 0.0
    %v3532 = vmax.f32 %v3516, 0.0
    %v3533 = vmax.f32 %v3517, 0.0
    %v3534 = vmax.f32 %v3518, 0.0
    %v3535 = vmax.f32 %v3519, 0.0
    %v3536 = vmax.f32 %v3520, 0.0
    %v3537 = vmax.f32 %v3521, 0.0
    %v3538 = vmax.f32 %v3522, 0.0
    %v3539 = vmax.f32 %v3523, 0.0
    %v3540 = vmax.f32 %v3524, 0.0
    %v3541 = vmax.f32 %v3525, 0.0
    %v3542 = vmax.f32 %v3526, 0.0
    %v3543 = vmax.f32 %v3527, 0.0
    %3544 = vst [vmem:[#allocation2 + $0x20] sm:$0xff] %v3528
    %3545 = vst [vmem:[#allocation2 + $0x28] sm:$0xff] %v3529
    %3546 = vst [vmem:[#allocation2 + $0x30] sm:$0xff] %v3530
    %3547 = vst [vmem:[#allocation2 + $0x38] sm:$0xff] %v3531
    %3548 = vst [vmem:[#allocation2 + $0x40] sm:$0xff] %v3532
    %3549 = vst [vmem:[#allocation2 + $0x48] sm:$0xff] %v3533
    %3550 = vst [vmem:[#allocation2 + $0x50] sm:$0xff] %v3534
    %3551 = vst [vmem:[#allocation2 + $0x58] sm:$0xff] %v3535
    %3552 = vst [vmem:[#allocation2 + $0x80] sm:$0xff] %v3536
    %3553 = vst [vmem:[#allocation2 + $0x88] sm:$0xff] %v3537
    %3554 = vst [vmem:[#allocation2 + $0x90] sm:$0xff] %v3538
    %3555 = vst [vmem:[#allocation2 + $0x98] sm:$0xff] %v3539
    %3556 = vst [vmem:[#allocation2 + $0xa0] sm:$0xff] %v3540
    %3557 = vst [vmem:[#allocation2 + $0xa8] sm:$0xff] %v3541
    %3558 = vst [vmem:[#allocation2 + $0xb0] sm:$0xff] %v3542
    %3559 = vst [vmem:[#allocation2 + $0xb8] sm:$0xff] %v3543
    %v3560 = vld [vmem:[#allocation2] sm:$0x80]
    %v3561 = vld [vmem:[#allocation2 + $0x8] sm:$0x80]
    %v3562 = vld [vmem:[#allocation2 + $0x10] sm:$0x80]
    %v3563 = vld [vmem:[#allocation2 + $0x18] sm:$0x80]
    %v3564 = vld [vmem:[#allocation2 + $0x20] sm:$0xff]
    %v3565 = vld [vmem:[#allocation2 + $0x28] sm:$0xff]
    %v3566 = vld [vmem:[#allocation2 + $0x30] sm:$0xff]
    %v3567 = vld [vmem:[#allocation2 + $0x38] sm:$0xff]
    %v3568 = vld [vmem:[#allocation2 + $0x40] sm:$0xff]
    %v3569 = vld [vmem:[#allocation2 + $0x48] sm:$0xff]
    %v3570 = vld [vmem:[#allocation2 + $0x50] sm:$0xff]
    %v3571 = vld [vmem:[#allocation2 + $0x58] sm:$0xff]
    %v3572 = vld [vmem:[#allocation2 + $0x60] sm:$0xff]
    %v3573 = vld [vmem:[#allocation2 + $0x68] sm:$0xff]
    %v3574 = vld [vmem:[#allocation2 + $0x70] sm:$0xff]
    %v3575 = vld [vmem:[#allocation2 + $0x78] sm:$0xff]
    %v3576 = vld [vmem:[#allocation2 + $0x80] sm:$0xff]
    %v3577 = vld [vmem:[#allocation2 + $0x88] sm:$0xff]
    %v3578 = vld [vmem:[#allocation2 + $0x90] sm:$0xff]
    %v3579 = vld [vmem:[#allocation2 + $0x98] sm:$0xff]
    %v3580 = vld [vmem:[#allocation2 + $0xa0] sm:$0x7f]
    %v3581 = vld [vmem:[#allocation2 + $0xa8] sm:$0x7f]
    %v3582 = vld [vmem:[#allocation2 + $0xb0] sm:$0x7f]
    %v3583 = vld [vmem:[#allocation2 + $0xb8] sm:$0x7f]
    %v3584 = vpack.c.bf16 %v3564, %v3560
    %v3585 = vpack.c.bf16 %v3565, %v3561
    %v3586 = vpack.c.bf16 %v3566, %v3562
    %v3587 = vpack.c.bf16 %v3567, %v3563
    %v3588 = vpack.c.bf16 %v3572, %v3568
    %v3589 = vpack.c.bf16 %v3573, %v3569
    %v3590 = vpack.c.bf16 %v3574, %v3570
    %v3591 = vpack.c.bf16 %v3575, %v3571
    %v3592 = vpack.c.bf16 %v3580, %v3576
    %v3593 = vpack.c.bf16 %v3581, %v3577
    %v3594 = vpack.c.bf16 %v3582, %v3578
    %v3595 = vpack.c.bf16 %v3583, %v3579
    %v3596 = vld [vmem:[#allocation8] sm:$0xff]
    %v3597 = vld [vmem:[#allocation8 + $0x8] sm:$0xff]
    %v3598 = vld [vmem:[#allocation8 + $0x10] sm:$0xff]
    %v3599 = vld [vmem:[#allocation8 + $0x18] sm:$0xff]
    %v3600 = vld [vmem:[#allocation8 + $0x20] sm:$0xff]
    %v3601 = vld [vmem:[#allocation8 + $0x28] sm:$0xff]
    %v3602 = vld [vmem:[#allocation8 + $0x30] sm:$0xff]
    %v3603 = vld [vmem:[#allocation8 + $0x38] sm:$0xff]
    %v3604 = vld [vmem:[#allocation8 + $0x40] sm:$0xff]
    %v3605 = vld [vmem:[#allocation8 + $0x48] sm:$0xff]
    %v3606 = vld [vmem:[#allocation8 + $0x50] sm:$0xff]
    %v3607 = vld [vmem:[#allocation8 + $0x58] sm:$0xff]
    %v3608 = vld [vmem:[#allocation8 + $0x60] sm:$0xff]
    %v3609 = vld [vmem:[#allocation8 + $0x68] sm:$0xff]
    %v3610 = vld [vmem:[#allocation8 + $0x70] sm:$0xff]
    %v3611 = vld [vmem:[#allocation8 + $0x78] sm:$0xff]
    %v3612 = vld [vmem:[#allocation8 + $0x80] sm:$0xff]
    %v3613 = vld [vmem:[#allocation8 + $0x88] sm:$0xff]
    %v3614 = vld [vmem:[#allocation8 + $0x90] sm:$0xff]
    %v3615 = vld [vmem:[#allocation8 + $0x98] sm:$0xff]
    %v3616 = vld [vmem:[#allocation8 + $0xa0] sm:$0xff]
    %v3617 = vld [vmem:[#allocation8 + $0xa8] sm:$0xff]
    %v3618 = vld [vmem:[#allocation8 + $0xb0] sm:$0xff]
    %v3619 = vld [vmem:[#allocation8 + $0xb8] sm:$0xff]
    %v3620 = vld [vmem:[#allocation8 + $0xc0] sm:$0xff]
    %v3621 = vld [vmem:[#allocation8 + $0xc8] sm:$0xff]
    %v3622 = vld [vmem:[#allocation8 + $0xd0] sm:$0xff]
    %v3623 = vld [vmem:[#allocation8 + $0xd8] sm:$0xff]
    %v3624 = vld [vmem:[#allocation8 + $0xe0] sm:$0xff]
    %v3625 = vld [vmem:[#allocation8 + $0xe8] sm:$0xff]
    %v3626 = vld [vmem:[#allocation8 + $0xf0] sm:$0xff]
    %v3627 = vld [vmem:[#allocation8 + $0xf8] sm:$0xff]
    %v3628 = vld [vmem:[#allocation8 + $0x100] sm:$0xff]
    %v3629 = vld [vmem:[#allocation8 + $0x108] sm:$0xff]
    %v3630 = vld [vmem:[#allocation8 + $0x110] sm:$0xff]
    %v3631 = vld [vmem:[#allocation8 + $0x118] sm:$0xff]
    %v3632 = vld [vmem:[#allocation8 + $0x120] sm:$0xff]
    %v3633 = vld [vmem:[#allocation8 + $0x128] sm:$0xff]
    %v3634 = vld [vmem:[#allocation8 + $0x130] sm:$0xff]
    %v3635 = vld [vmem:[#allocation8 + $0x138] sm:$0xff]
    %v3636 = vld [vmem:[#allocation8 + $0x140] sm:$0xff]
    %v3637 = vld [vmem:[#allocation8 + $0x148] sm:$0xff]
    %v3638 = vld [vmem:[#allocation8 + $0x150] sm:$0xff]
    %v3639 = vld [vmem:[#allocation8 + $0x158] sm:$0xff]
    %v3640 = vld [vmem:[#allocation8 + $0x160] sm:$0xff]
    %v3641 = vld [vmem:[#allocation8 + $0x168] sm:$0xff]
    %v3642 = vld [vmem:[#allocation8 + $0x170] sm:$0xff]
    %v3643 = vld [vmem:[#allocation8 + $0x178] sm:$0xff]
    %v3644 = vld [vmem:[#allocation8 + $0x180] sm:$0xff]
    %v3645 = vld [vmem:[#allocation8 + $0x188] sm:$0xff]
    %v3646 = vld [vmem:[#allocation8 + $0x190] sm:$0xff]
    %v3647 = vld [vmem:[#allocation8 + $0x198] sm:$0xff]
    %v3648 = vld [vmem:[#allocation8 + $0x1a0] sm:$0xff]
    %v3649 = vld [vmem:[#allocation8 + $0x1a8] sm:$0xff]
    %v3650 = vld [vmem:[#allocation8 + $0x1b0] sm:$0xff]
    %v3651 = vld [vmem:[#allocation8 + $0x1b8] sm:$0xff]
    %v3652 = vld [vmem:[#allocation8 + $0x1c0] sm:$0xff]
    %v3653 = vld [vmem:[#allocation8 + $0x1c8] sm:$0xff]
    %v3654 = vld [vmem:[#allocation8 + $0x1d0] sm:$0xff]
    %v3655 = vld [vmem:[#allocation8 + $0x1d8] sm:$0xff]
    %v3656 = vld [vmem:[#allocation8 + $0x1e0] sm:$0xff]
    %v3657 = vld [vmem:[#allocation8 + $0x1e8] sm:$0xff]
    %v3658 = vld [vmem:[#allocation8 + $0x1f0] sm:$0xff]
    %v3659 = vld [vmem:[#allocation8 + $0x1f8] sm:$0xff]
    %v3660 = vld [vmem:[#allocation8 + $0x200] sm:$0xff]
    %v3661 = vld [vmem:[#allocation8 + $0x208] sm:$0xff]
    %v3662 = vld [vmem:[#allocation8 + $0x210] sm:$0xff]
    %v3663 = vld [vmem:[#allocation8 + $0x218] sm:$0xff]
    %v3664 = vld [vmem:[#allocation8 + $0x220] sm:$0xff]
    %v3665 = vld [vmem:[#allocation8 + $0x228] sm:$0xff]
    %v3666 = vld [vmem:[#allocation8 + $0x230] sm:$0xff]
    %v3667 = vld [vmem:[#allocation8 + $0x238] sm:$0xff]
    %v3668 = vld [vmem:[#allocation8 + $0x240] sm:$0xff]
    %v3669 = vld [vmem:[#allocation8 + $0x248] sm:$0xff]
    %v3670 = vld [vmem:[#allocation8 + $0x250] sm:$0xff]
    %v3671 = vld [vmem:[#allocation8 + $0x258] sm:$0xff]
    %v3672 = vld [vmem:[#allocation8 + $0x260] sm:$0xff]
    %v3673 = vld [vmem:[#allocation8 + $0x268] sm:$0xff]
    %v3674 = vld [vmem:[#allocation8 + $0x270] sm:$0xff]
    %v3675 = vld [vmem:[#allocation8 + $0x278] sm:$0xff]
    %v3676 = vld [vmem:[#allocation8 + $0x280] sm:$0xff]
    %v3677 = vld [vmem:[#allocation8 + $0x288] sm:$0xff]
    %v3678 = vld [vmem:[#allocation8 + $0x290] sm:$0xff]
    %v3679 = vld [vmem:[#allocation8 + $0x298] sm:$0xff]
    %v3680 = vld [vmem:[#allocation8 + $0x2a0] sm:$0xff]
    %v3681 = vld [vmem:[#allocation8 + $0x2a8] sm:$0xff]
    %v3682 = vld [vmem:[#allocation8 + $0x2b0] sm:$0xff]
    %v3683 = vld [vmem:[#allocation8 + $0x2b8] sm:$0xff]
    %v3684 = vld [vmem:[#allocation8 + $0x2c0] sm:$0xff]
    %v3685 = vld [vmem:[#allocation8 + $0x2c8] sm:$0xff]
    %v3686 = vld [vmem:[#allocation8 + $0x2d0] sm:$0xff]
    %v3687 = vld [vmem:[#allocation8 + $0x2d8] sm:$0xff]
    %v3688 = vld [vmem:[#allocation8 + $0x2e0] sm:$0xff]
    %v3689 = vld [vmem:[#allocation8 + $0x2e8] sm:$0xff]
    %v3690 = vld [vmem:[#allocation8 + $0x2f0] sm:$0xff]
    %v3691 = vld [vmem:[#allocation8 + $0x2f8] sm:$0xff]
    %v3692 = vld [vmem:[#allocation8 + $0x300] sm:$0xff]
    %v3693 = vld [vmem:[#allocation8 + $0x308] sm:$0xff]
    %v3694 = vld [vmem:[#allocation8 + $0x310] sm:$0xff]
    %v3695 = vld [vmem:[#allocation8 + $0x318] sm:$0xff]
    %v3696 = vld [vmem:[#allocation8 + $0x320] sm:$0xff]
    %v3697 = vld [vmem:[#allocation8 + $0x328] sm:$0xff]
    %v3698 = vld [vmem:[#allocation8 + $0x330] sm:$0xff]
    %v3699 = vld [vmem:[#allocation8 + $0x338] sm:$0xff]
    %v3700 = vld [vmem:[#allocation8 + $0x340] sm:$0xff]
    %v3701 = vld [vmem:[#allocation8 + $0x348] sm:$0xff]
    %v3702 = vld [vmem:[#allocation8 + $0x350] sm:$0xff]
    %v3703 = vld [vmem:[#allocation8 + $0x358] sm:$0xff]
    %v3704 = vld [vmem:[#allocation8 + $0x360] sm:$0xff]
    %v3705 = vld [vmem:[#allocation8 + $0x368] sm:$0xff]
    %v3706 = vld [vmem:[#allocation8 + $0x370] sm:$0xff]
    %v3707 = vld [vmem:[#allocation8 + $0x378] sm:$0xff]
    %v3708 = vld [vmem:[#allocation8 + $0x380] sm:$0xff]
    %v3709 = vld [vmem:[#allocation8 + $0x388] sm:$0xff]
    %v3710 = vld [vmem:[#allocation8 + $0x390] sm:$0xff]
    %v3711 = vld [vmem:[#allocation8 + $0x398] sm:$0xff]
    %v3712 = vld [vmem:[#allocation8 + $0x3a0] sm:$0xff]
    %v3713 = vld [vmem:[#allocation8 + $0x3a8] sm:$0xff]
    %v3714 = vld [vmem:[#allocation8 + $0x3b0] sm:$0xff]
    %v3715 = vld [vmem:[#allocation8 + $0x3b8] sm:$0xff]
    %v3716 = vld [vmem:[#allocation8 + $0x3c0] sm:$0xff]
    %v3717 = vld [vmem:[#allocation8 + $0x3c8] sm:$0xff]
    %v3718 = vld [vmem:[#allocation8 + $0x3d0] sm:$0xff]
    %v3719 = vld [vmem:[#allocation8 + $0x3d8] sm:$0xff]
    %v3720 = vld [vmem:[#allocation8 + $0x3e0] sm:$0xff]
    %v3721 = vld [vmem:[#allocation8 + $0x3e8] sm:$0xff]
    %v3722 = vld [vmem:[#allocation8 + $0x3f0] sm:$0xff]
    %v3723 = vld [vmem:[#allocation8 + $0x3f8] sm:$0xff]
    %v3724 = vld [vmem:[#allocation2 + $0xa0] sm:$0xff]
    %v3725 = vld [vmem:[#allocation2 + $0xa8] sm:$0xff]
    %v3726 = vld [vmem:[#allocation2 + $0xb0] sm:$0xff]
    %v3727 = vld [vmem:[#allocation2 + $0xb8] sm:$0xff]
    %v3728 = vpack.c.bf16 %v3568, %v3564
    %v3729 = vpack.c.bf16 %v3569, %v3565
    %v3730 = vpack.c.bf16 %v3570, %v3566
    %v3731 = vpack.c.bf16 %v3571, %v3567
    %v3732 = vpack.c.bf16 %v3576, %v3572
    %v3733 = vpack.c.bf16 %v3577, %v3573
    %v3734 = vpack.c.bf16 %v3578, %v3574
    %v3735 = vpack.c.bf16 %v3579, %v3575
    %v3736 = vpack.c.bf16 %v3724, %v3724
    %v3737 = vpack.c.bf16 %v3725, %v3725
    %v3738 = vpack.c.bf16 %v3726, %v3726
    %v3739 = vpack.c.bf16 %v3727, %v3727
    %s3740 = scalar_lea.vmem [#allocation8], 1024
    %v3741 = vld [vmem:[%s3740] sm:$0xff]
    %v3742 = vld [vmem:[%s3740 + $0x8] sm:$0xff]
    %v3743 = vld [vmem:[%s3740 + $0x10] sm:$0xff]
    %v3744 = vld [vmem:[%s3740 + $0x18] sm:$0xff]
    %v3745 = vld [vmem:[%s3740 + $0x20] sm:$0xff]
    %v3746 = vld [vmem:[%s3740 + $0x28] sm:$0xff]
    %v3747 = vld [vmem:[%s3740 + $0x30] sm:$0xff]
    %v3748 = vld [vmem:[%s3740 + $0x38] sm:$0xff]
    %v3749 = vld [vmem:[%s3740 + $0x40] sm:$0xff]
    %v3750 = vld [vmem:[%s3740 + $0x48] sm:$0xff]
    %v3751 = vld [vmem:[%s3740 + $0x50] sm:$0xff]
    %v3752 = vld [vmem:[%s3740 + $0x58] sm:$0xff]
    %v3753 = vld [vmem:[%s3740 + $0x60] sm:$0xff]
    %v3754 = vld [vmem:[%s3740 + $0x68] sm:$0xff]
    %v3755 = vld [vmem:[%s3740 + $0x70] sm:$0xff]
    %v3756 = vld [vmem:[%s3740 + $0x78] sm:$0xff]
    %v3757 = vld [vmem:[%s3740 + $0x80] sm:$0xff]
    %v3758 = vld [vmem:[%s3740 + $0x88] sm:$0xff]
    %v3759 = vld [vmem:[%s3740 + $0x90] sm:$0xff]
    %v3760 = vld [vmem:[%s3740 + $0x98] sm:$0xff]
    %v3761 = vld [vmem:[%s3740 + $0xa0] sm:$0xff]
    %v3762 = vld [vmem:[%s3740 + $0xa8] sm:$0xff]
    %v3763 = vld [vmem:[%s3740 + $0xb0] sm:$0xff]
    %v3764 = vld [vmem:[%s3740 + $0xb8] sm:$0xff]
    %v3765 = vld [vmem:[%s3740 + $0xc0] sm:$0xff]
    %v3766 = vld [vmem:[%s3740 + $0xc8] sm:$0xff]
    %v3767 = vld [vmem:[%s3740 + $0xd0] sm:$0xff]
    %v3768 = vld [vmem:[%s3740 + $0xd8] sm:$0xff]
    %v3769 = vld [vmem:[%s3740 + $0xe0] sm:$0xff]
    %v3770 = vld [vmem:[%s3740 + $0xe8] sm:$0xff]
    %v3771 = vld [vmem:[%s3740 + $0xf0] sm:$0xff]
    %v3772 = vld [vmem:[%s3740 + $0xf8] sm:$0xff]
    %v3773 = vld [vmem:[%s3740 + $0x100] sm:$0xff]
    %v3774 = vld [vmem:[%s3740 + $0x108] sm:$0xff]
    %v3775 = vld [vmem:[%s3740 + $0x110] sm:$0xff]
    %v3776 = vld [vmem:[%s3740 + $0x118] sm:$0xff]
    %v3777 = vld [vmem:[%s3740 + $0x120] sm:$0xff]
    %v3778 = vld [vmem:[%s3740 + $0x128] sm:$0xff]
    %v3779 = vld [vmem:[%s3740 + $0x130] sm:$0xff]
    %v3780 = vld [vmem:[%s3740 + $0x138] sm:$0xff]
    %v3781 = vld [vmem:[%s3740 + $0x140] sm:$0xff]
    %v3782 = vld [vmem:[%s3740 + $0x148] sm:$0xff]
    %v3783 = vld [vmem:[%s3740 + $0x150] sm:$0xff]
    %v3784 = vld [vmem:[%s3740 + $0x158] sm:$0xff]
    %v3785 = vld [vmem:[%s3740 + $0x160] sm:$0xff]
    %v3786 = vld [vmem:[%s3740 + $0x168] sm:$0xff]
    %v3787 = vld [vmem:[%s3740 + $0x170] sm:$0xff]
    %v3788 = vld [vmem:[%s3740 + $0x178] sm:$0xff]
    %v3789 = vld [vmem:[%s3740 + $0x180] sm:$0xff]
    %v3790 = vld [vmem:[%s3740 + $0x188] sm:$0xff]
    %v3791 = vld [vmem:[%s3740 + $0x190] sm:$0xff]
    %v3792 = vld [vmem:[%s3740 + $0x198] sm:$0xff]
    %v3793 = vld [vmem:[%s3740 + $0x1a0] sm:$0xff]
    %v3794 = vld [vmem:[%s3740 + $0x1a8] sm:$0xff]
    %v3795 = vld [vmem:[%s3740 + $0x1b0] sm:$0xff]
    %v3796 = vld [vmem:[%s3740 + $0x1b8] sm:$0xff]
    %v3797 = vld [vmem:[%s3740 + $0x1c0] sm:$0xff]
    %v3798 = vld [vmem:[%s3740 + $0x1c8] sm:$0xff]
    %v3799 = vld [vmem:[%s3740 + $0x1d0] sm:$0xff]
    %v3800 = vld [vmem:[%s3740 + $0x1d8] sm:$0xff]
    %v3801 = vld [vmem:[%s3740 + $0x1e0] sm:$0xff]
    %v3802 = vld [vmem:[%s3740 + $0x1e8] sm:$0xff]
    %v3803 = vld [vmem:[%s3740 + $0x1f0] sm:$0xff]
    %v3804 = vld [vmem:[%s3740 + $0x1f8] sm:$0xff]
    %v3805 = vld [vmem:[%s3740 + $0x200] sm:$0xff]
    %v3806 = vld [vmem:[%s3740 + $0x208] sm:$0xff]
    %v3807 = vld [vmem:[%s3740 + $0x210] sm:$0xff]
    %v3808 = vld [vmem:[%s3740 + $0x218] sm:$0xff]
    %v3809 = vld [vmem:[%s3740 + $0x220] sm:$0xff]
    %v3810 = vld [vmem:[%s3740 + $0x228] sm:$0xff]
    %v3811 = vld [vmem:[%s3740 + $0x230] sm:$0xff]
    %v3812 = vld [vmem:[%s3740 + $0x238] sm:$0xff]
    %v3813 = vld [vmem:[%s3740 + $0x240] sm:$0xff]
    %v3814 = vld [vmem:[%s3740 + $0x248] sm:$0xff]
    %v3815 = vld [vmem:[%s3740 + $0x250] sm:$0xff]
    %v3816 = vld [vmem:[%s3740 + $0x258] sm:$0xff]
    %v3817 = vld [vmem:[%s3740 + $0x260] sm:$0xff]
    %v3818 = vld [vmem:[%s3740 + $0x268] sm:$0xff]
    %v3819 = vld [vmem:[%s3740 + $0x270] sm:$0xff]
    %v3820 = vld [vmem:[%s3740 + $0x278] sm:$0xff]
    %v3821 = vld [vmem:[%s3740 + $0x280] sm:$0xff]
    %v3822 = vld [vmem:[%s3740 + $0x288] sm:$0xff]
    %v3823 = vld [vmem:[%s3740 + $0x290] sm:$0xff]
    %v3824 = vld [vmem:[%s3740 + $0x298] sm:$0xff]
    %v3825 = vld [vmem:[%s3740 + $0x2a0] sm:$0xff]
    %v3826 = vld [vmem:[%s3740 + $0x2a8] sm:$0xff]
    %v3827 = vld [vmem:[%s3740 + $0x2b0] sm:$0xff]
    %v3828 = vld [vmem:[%s3740 + $0x2b8] sm:$0xff]
    %v3829 = vld [vmem:[%s3740 + $0x2c0] sm:$0xff]
    %v3830 = vld [vmem:[%s3740 + $0x2c8] sm:$0xff]
    %v3831 = vld [vmem:[%s3740 + $0x2d0] sm:$0xff]
    %v3832 = vld [vmem:[%s3740 + $0x2d8] sm:$0xff]
    %v3833 = vld [vmem:[%s3740 + $0x2e0] sm:$0xff]
    %v3834 = vld [vmem:[%s3740 + $0x2e8] sm:$0xff]
    %v3835 = vld [vmem:[%s3740 + $0x2f0] sm:$0xff]
    %v3836 = vld [vmem:[%s3740 + $0x2f8] sm:$0xff]
    %v3837 = vld [vmem:[%s3740 + $0x300] sm:$0xff]
    %v3838 = vld [vmem:[%s3740 + $0x308] sm:$0xff]
    %v3839 = vld [vmem:[%s3740 + $0x310] sm:$0xff]
    %v3840 = vld [vmem:[%s3740 + $0x318] sm:$0xff]
    %v3841 = vld [vmem:[%s3740 + $0x320] sm:$0xff]
    %v3842 = vld [vmem:[%s3740 + $0x328] sm:$0xff]
    %v3843 = vld [vmem:[%s3740 + $0x330] sm:$0xff]
    %v3844 = vld [vmem:[%s3740 + $0x338] sm:$0xff]
    %v3845 = vld [vmem:[%s3740 + $0x340] sm:$0xff]
    %v3846 = vld [vmem:[%s3740 + $0x348] sm:$0xff]
    %v3847 = vld [vmem:[%s3740 + $0x350] sm:$0xff]
    %v3848 = vld [vmem:[%s3740 + $0x358] sm:$0xff]
    %v3849 = vld [vmem:[%s3740 + $0x360] sm:$0xff]
    %v3850 = vld [vmem:[%s3740 + $0x368] sm:$0xff]
    %v3851 = vld [vmem:[%s3740 + $0x370] sm:$0xff]
    %v3852 = vld [vmem:[%s3740 + $0x378] sm:$0xff]
    %v3853 = vld [vmem:[%s3740 + $0x380] sm:$0xff]
    %v3854 = vld [vmem:[%s3740 + $0x388] sm:$0xff]
    %v3855 = vld [vmem:[%s3740 + $0x390] sm:$0xff]
    %v3856 = vld [vmem:[%s3740 + $0x398] sm:$0xff]
    %v3857 = vld [vmem:[%s3740 + $0x3a0] sm:$0xff]
    %v3858 = vld [vmem:[%s3740 + $0x3a8] sm:$0xff]
    %v3859 = vld [vmem:[%s3740 + $0x3b0] sm:$0xff]
    %v3860 = vld [vmem:[%s3740 + $0x3b8] sm:$0xff]
    %v3861 = vld [vmem:[%s3740 + $0x3c0] sm:$0xff]
    %v3862 = vld [vmem:[%s3740 + $0x3c8] sm:$0xff]
    %v3863 = vld [vmem:[%s3740 + $0x3d0] sm:$0xff]
    %v3864 = vld [vmem:[%s3740 + $0x3d8] sm:$0xff]
    %v3865 = vld [vmem:[%s3740 + $0x3e0] sm:$0xff]
    %v3866 = vld [vmem:[%s3740 + $0x3e8] sm:$0xff]
    %v3867 = vld [vmem:[%s3740 + $0x3f0] sm:$0xff]
    %v3868 = vld [vmem:[%s3740 + $0x3f8] sm:$0xff]
    %v3997 = vunpack.c.l.b16 %v3741
    %v3998 = vunpack.c.h.b16 %v3741
    %v3999 = vunpack.c.l.b16 %v3742
    %v4000 = vunpack.c.h.b16 %v3742
    %v4001 = vunpack.c.l.b16 %v3743
    %v4002 = vunpack.c.h.b16 %v3743
    %v4003 = vunpack.c.l.b16 %v3744
    %v4004 = vunpack.c.h.b16 %v3744
    %v4005 = vunpack.c.l.b16 %v3745
    %v4006 = vunpack.c.h.b16 %v3745
    %v4007 = vunpack.c.l.b16 %v3746
    %v4008 = vunpack.c.h.b16 %v3746
    %v4009 = vunpack.c.l.b16 %v3747
    %v4010 = vunpack.c.h.b16 %v3747
    %v4011 = vunpack.c.l.b16 %v3748
    %v4012 = vunpack.c.h.b16 %v3748
    %v4013 = vunpack.c.l.b16 %v3749
    %v4014 = vunpack.c.h.b16 %v3749
    %v4015 = vunpack.c.l.b16 %v3750
    %v4016 = vunpack.c.h.b16 %v3750
    %v4017 = vunpack.c.l.b16 %v3751
    %v4018 = vunpack.c.h.b16 %v3751
    %v4019 = vunpack.c.l.b16 %v3752
    %v4020 = vunpack.c.h.b16 %v3752
    %v4021 = vunpack.c.l.b16 %v3753
    %v4022 = vunpack.c.h.b16 %v3753
    %v4023 = vunpack.c.l.b16 %v3754
    %v4024 = vunpack.c.h.b16 %v3754
    %v4025 = vunpack.c.l.b16 %v3755
    %v4026 = vunpack.c.h.b16 %v3755
    %v4027 = vunpack.c.l.b16 %v3756
    %v4028 = vunpack.c.h.b16 %v3756
    %v4029 = vunpack.c.l.b16 %v3757
    %v4030 = vunpack.c.h.b16 %v3757
    %v4031 = vunpack.c.l.b16 %v3758
    %v4032 = vunpack.c.h.b16 %v3758
    %v4033 = vunpack.c.l.b16 %v3759
    %v4034 = vunpack.c.h.b16 %v3759
    %v4035 = vunpack.c.l.b16 %v3760
    %v4036 = vunpack.c.h.b16 %v3760
    %v4037 = vunpack.c.l.b16 %v3761
    %v4038 = vunpack.c.h.b16 %v3761
    %v4039 = vunpack.c.l.b16 %v3762
    %v4040 = vunpack.c.h.b16 %v3762
    %v4041 = vunpack.c.l.b16 %v3763
    %v4042 = vunpack.c.h.b16 %v3763
    %v4043 = vunpack.c.l.b16 %v3764
    %v4044 = vunpack.c.h.b16 %v3764
    %v4045 = vunpack.c.l.b16 %v3765
    %v4046 = vunpack.c.h.b16 %v3765
    %v4047 = vunpack.c.l.b16 %v3766
    %v4048 = vunpack.c.h.b16 %v3766
    %v4049 = vunpack.c.l.b16 %v3767
    %v4050 = vunpack.c.h.b16 %v3767
    %v4051 = vunpack.c.l.b16 %v3768
    %v4052 = vunpack.c.h.b16 %v3768
    %v4053 = vunpack.c.l.b16 %v3769
    %v4054 = vunpack.c.h.b16 %v3769
    %v4055 = vunpack.c.l.b16 %v3770
    %v4056 = vunpack.c.h.b16 %v3770
    %v4057 = vunpack.c.l.b16 %v3771
    %v4058 = vunpack.c.h.b16 %v3771
    %v4059 = vunpack.c.l.b16 %v3772
    %v4060 = vunpack.c.h.b16 %v3772
    %v4061 = vunpack.c.l.b16 %v3773
    %v4062 = vunpack.c.h.b16 %v3773
    %v4063 = vunpack.c.l.b16 %v3774
    %v4064 = vunpack.c.h.b16 %v3774
    %v4065 = vunpack.c.l.b16 %v3775
    %v4066 = vunpack.c.h.b16 %v3775
    %v4067 = vunpack.c.l.b16 %v3776
    %v4068 = vunpack.c.h.b16 %v3776
    %v4069 = vunpack.c.l.b16 %v3777
    %v4070 = vunpack.c.h.b16 %v3777
    %v4071 = vunpack.c.l.b16 %v3778
    %v4072 = vunpack.c.h.b16 %v3778
    %v4073 = vunpack.c.l.b16 %v3779
    %v4074 = vunpack.c.h.b16 %v3779
    %v4075 = vunpack.c.l.b16 %v3780
    %v4076 = vunpack.c.h.b16 %v3780
    %v4077 = vunpack.c.l.b16 %v3781
    %v4078 = vunpack.c.h.b16 %v3781
    %v4079 = vunpack.c.l.b16 %v3782
    %v4080 = vunpack.c.h.b16 %v3782
    %v4081 = vunpack.c.l.b16 %v3783
    %v4082 = vunpack.c.h.b16 %v3783
    %v4083 = vunpack.c.l.b16 %v3784
    %v4084 = vunpack.c.h.b16 %v3784
    %v4085 = vunpack.c.l.b16 %v3785
    %v4086 = vunpack.c.h.b16 %v3785
    %v4087 = vunpack.c.l.b16 %v3786
    %v4088 = vunpack.c.h.b16 %v3786
    %v4089 = vunpack.c.l.b16 %v3787
    %v4090 = vunpack.c.h.b16 %v3787
    %v4091 = vunpack.c.l.b16 %v3788
    %v4092 = vunpack.c.h.b16 %v3788
    %v4093 = vunpack.c.l.b16 %v3789
    %v4094 = vunpack.c.h.b16 %v3789
    %v4095 = vunpack.c.l.b16 %v3790
    %v4096 = vunpack.c.h.b16 %v3790
    %v4097 = vunpack.c.l.b16 %v3791
    %v4098 = vunpack.c.h.b16 %v3791
    %v4099 = vunpack.c.l.b16 %v3792
    %v4100 = vunpack.c.h.b16 %v3792
    %v4101 = vunpack.c.l.b16 %v3793
    %v4102 = vunpack.c.h.b16 %v3793
    %v4103 = vunpack.c.l.b16 %v3794
    %v4104 = vunpack.c.h.b16 %v3794
    %v4105 = vunpack.c.l.b16 %v3795
    %v4106 = vunpack.c.h.b16 %v3795
    %v4107 = vunpack.c.l.b16 %v3796
    %v4108 = vunpack.c.h.b16 %v3796
    %v4109 = vunpack.c.l.b16 %v3797
    %v4110 = vunpack.c.h.b16 %v3797
    %v4111 = vunpack.c.l.b16 %v3798
    %v4112 = vunpack.c.h.b16 %v3798
    %v4113 = vunpack.c.l.b16 %v3799
    %v4114 = vunpack.c.h.b16 %v3799
    %v4115 = vunpack.c.l.b16 %v3800
    %v4116 = vunpack.c.h.b16 %v3800
    %v4117 = vunpack.c.l.b16 %v3801
    %v4118 = vunpack.c.h.b16 %v3801
    %v4119 = vunpack.c.l.b16 %v3802
    %v4120 = vunpack.c.h.b16 %v3802
    %v4121 = vunpack.c.l.b16 %v3803
    %v4122 = vunpack.c.h.b16 %v3803
    %v4123 = vunpack.c.l.b16 %v3804
    %v4124 = vunpack.c.h.b16 %v3804
    %v4125 = vunpack.c.l.b16 %v3805
    %v4126 = vunpack.c.h.b16 %v3805
    %v4127 = vunpack.c.l.b16 %v3806
    %v4128 = vunpack.c.h.b16 %v3806
    %v4129 = vunpack.c.l.b16 %v3807
    %v4130 = vunpack.c.h.b16 %v3807
    %v4131 = vunpack.c.l.b16 %v3808
    %v4132 = vunpack.c.h.b16 %v3808
    %v4133 = vunpack.c.l.b16 %v3809
    %v4134 = vunpack.c.h.b16 %v3809
    %v4135 = vunpack.c.l.b16 %v3810
    %v4136 = vunpack.c.h.b16 %v3810
    %v4137 = vunpack.c.l.b16 %v3811
    %v4138 = vunpack.c.h.b16 %v3811
    %v4139 = vunpack.c.l.b16 %v3812
    %v4140 = vunpack.c.h.b16 %v3812
    %v4141 = vunpack.c.l.b16 %v3813
    %v4142 = vunpack.c.h.b16 %v3813
    %v4143 = vunpack.c.l.b16 %v3814
    %v4144 = vunpack.c.h.b16 %v3814
    %v4145 = vunpack.c.l.b16 %v3815
    %v4146 = vunpack.c.h.b16 %v3815
    %v4147 = vunpack.c.l.b16 %v3816
    %v4148 = vunpack.c.h.b16 %v3816
    %v4149 = vunpack.c.l.b16 %v3817
    %v4150 = vunpack.c.h.b16 %v3817
    %v4151 = vunpack.c.l.b16 %v3818
    %v4152 = vunpack.c.h.b16 %v3818
    %v4153 = vunpack.c.l.b16 %v3819
    %v4154 = vunpack.c.h.b16 %v3819
    %v4155 = vunpack.c.l.b16 %v3820
    %v4156 = vunpack.c.h.b16 %v3820
    %v4157 = vunpack.c.l.b16 %v3821
    %v4158 = vunpack.c.h.b16 %v3821
    %v4159 = vunpack.c.l.b16 %v3822
    %v4160 = vunpack.c.h.b16 %v3822
    %v4161 = vunpack.c.l.b16 %v3823
    %v4162 = vunpack.c.h.b16 %v3823
    %v4163 = vunpack.c.l.b16 %v3824
    %v4164 = vunpack.c.h.b16 %v3824
    %v4165 = vunpack.c.l.b16 %v3825
    %v4166 = vunpack.c.h.b16 %v3825
    %v4167 = vunpack.c.l.b16 %v3826
    %v4168 = vunpack.c.h.b16 %v3826
    %v4169 = vunpack.c.l.b16 %v3827
    %v4170 = vunpack.c.h.b16 %v3827
    %v4171 = vunpack.c.l.b16 %v3828
    %v4172 = vunpack.c.h.b16 %v3828
    %v4173 = vunpack.c.l.b16 %v3829
    %v4174 = vunpack.c.h.b16 %v3829
    %v4175 = vunpack.c.l.b16 %v3830
    %v4176 = vunpack.c.h.b16 %v3830
    %v4177 = vunpack.c.l.b16 %v3831
    %v4178 = vunpack.c.h.b16 %v3831
    %v4179 = vunpack.c.l.b16 %v3832
    %v4180 = vunpack.c.h.b16 %v3832
    %v4181 = vunpack.c.l.b16 %v3833
    %v4182 = vunpack.c.h.b16 %v3833
    %v4183 = vunpack.c.l.b16 %v3834
    %v4184 = vunpack.c.h.b16 %v3834
    %v4185 = vunpack.c.l.b16 %v3835
    %v4186 = vunpack.c.h.b16 %v3835
    %v4187 = vunpack.c.l.b16 %v3836
    %v4188 = vunpack.c.h.b16 %v3836
    %v4189 = vunpack.c.l.b16 %v3837
    %v4190 = vunpack.c.h.b16 %v3837
    %v4191 = vunpack.c.l.b16 %v3838
    %v4192 = vunpack.c.h.b16 %v3838
    %v4193 = vunpack.c.l.b16 %v3839
    %v4194 = vunpack.c.h.b16 %v3839
    %v4195 = vunpack.c.l.b16 %v3840
    %v4196 = vunpack.c.h.b16 %v3840
    %v4197 = vunpack.c.l.b16 %v3841
    %v4198 = vunpack.c.h.b16 %v3841
    %v4199 = vunpack.c.l.b16 %v3842
    %v4200 = vunpack.c.h.b16 %v3842
    %v4201 = vunpack.c.l.b16 %v3843
    %v4202 = vunpack.c.h.b16 %v3843
    %v4203 = vunpack.c.l.b16 %v3844
    %v4204 = vunpack.c.h.b16 %v3844
    %v4205 = vunpack.c.l.b16 %v3845
    %v4206 = vunpack.c.h.b16 %v3845
    %v4207 = vunpack.c.l.b16 %v3846
    %v4208 = vunpack.c.h.b16 %v3846
    %v4209 = vunpack.c.l.b16 %v3847
    %v4210 = vunpack.c.h.b16 %v3847
    %v4211 = vunpack.c.l.b16 %v3848
    %v4212 = vunpack.c.h.b16 %v3848
    %v4213 = vunpack.c.l.b16 %v3849
    %v4214 = vunpack.c.h.b16 %v3849
    %v4215 = vunpack.c.l.b16 %v3850
    %v4216 = vunpack.c.h.b16 %v3850
    %v4217 = vunpack.c.l.b16 %v3851
    %v4218 = vunpack.c.h.b16 %v3851
    %v4219 = vunpack.c.l.b16 %v3852
    %v4220 = vunpack.c.h.b16 %v3852
    %v4221 = vunpack.c.l.b16 %v3853
    %v4222 = vunpack.c.h.b16 %v3853
    %v4223 = vunpack.c.l.b16 %v3854
    %v4224 = vunpack.c.h.b16 %v3854
    %v4225 = vunpack.c.l.b16 %v3855
    %v4226 = vunpack.c.h.b16 %v3855
    %v4227 = vunpack.c.l.b16 %v3856
    %v4228 = vunpack.c.h.b16 %v3856
    %v4229 = vunpack.c.l.b16 %v3857
    %v4230 = vunpack.c.h.b16 %v3857
    %v4231 = vunpack.c.l.b16 %v3858
    %v4232 = vunpack.c.h.b16 %v3858
    %v4233 = vunpack.c.l.b16 %v3859
    %v4234 = vunpack.c.h.b16 %v3859
    %v4235 = vunpack.c.l.b16 %v3860
    %v4236 = vunpack.c.h.b16 %v3860
    %v4237 = vunpack.c.l.b16 %v3861
    %v4238 = vunpack.c.h.b16 %v3861
    %v4239 = vunpack.c.l.b16 %v3862
    %v4240 = vunpack.c.h.b16 %v3862
    %v4241 = vunpack.c.l.b16 %v3863
    %v4242 = vunpack.c.h.b16 %v3863
    %v4243 = vunpack.c.l.b16 %v3864
    %v4244 = vunpack.c.h.b16 %v3864
    %v4245 = vunpack.c.l.b16 %v3865
    %v4246 = vunpack.c.h.b16 %v3865
    %v4247 = vunpack.c.l.b16 %v3866
    %v4248 = vunpack.c.h.b16 %v3866
    %v4249 = vunpack.c.l.b16 %v3867
    %v4250 = vunpack.c.h.b16 %v3867
    %v4251 = vunpack.c.l.b16 %v3868
    %v4252 = vunpack.c.h.b16 %v3868
    %v4253 = vpack.c.b16 %v4001, %v3997
    %v4254 = vpack.c.b16 %v4002, %v3998
    %v4255 = vpack.c.b16 %v4003, %v3999
    %v4256 = vpack.c.b16 %v4004, %v4000
    %v4257 = vpack.c.b16 %v4009, %v4005
    %v4258 = vpack.c.b16 %v4010, %v4006
    %v4259 = vpack.c.b16 %v4011, %v4007
    %v4260 = vpack.c.b16 %v4012, %v4008
    %v4261 = vpack.c.b16 %v4017, %v4013
    %v4262 = vpack.c.b16 %v4018, %v4014
    %v4263 = vpack.c.b16 %v4019, %v4015
    %v4264 = vpack.c.b16 %v4020, %v4016
    %v4265 = vpack.c.b16 %v4025, %v4021
    %v4266 = vpack.c.b16 %v4026, %v4022
    %v4267 = vpack.c.b16 %v4027, %v4023
    %v4268 = vpack.c.b16 %v4028, %v4024
    %v4269 = vpack.c.b16 %v4033, %v4029
    %v4270 = vpack.c.b16 %v4034, %v4030
    %v4271 = vpack.c.b16 %v4035, %v4031
    %v4272 = vpack.c.b16 %v4036, %v4032
    %v4273 = vpack.c.b16 %v4041, %v4037
    %v4274 = vpack.c.b16 %v4042, %v4038
    %v4275 = vpack.c.b16 %v4043, %v4039
    %v4276 = vpack.c.b16 %v4044, %v4040
    %v4277 = vpack.c.b16 %v4049, %v4045
    %v4278 = vpack.c.b16 %v4050, %v4046
    %v4279 = vpack.c.b16 %v4051, %v4047
    %v4280 = vpack.c.b16 %v4052, %v4048
    %v4281 = vpack.c.b16 %v4057, %v4053
    %v4282 = vpack.c.b16 %v4058, %v4054
    %v4283 = vpack.c.b16 %v4059, %v4055
    %v4284 = vpack.c.b16 %v4060, %v4056
    %v4285 = vpack.c.b16 %v4065, %v4061
    %v4286 = vpack.c.b16 %v4066, %v4062
    %v4287 = vpack.c.b16 %v4067, %v4063
    %v4288 = vpack.c.b16 %v4068, %v4064
    %v4289 = vpack.c.b16 %v4073, %v4069
    %v4290 = vpack.c.b16 %v4074, %v4070
    %v4291 = vpack.c.b16 %v4075, %v4071
    %v4292 = vpack.c.b16 %v4076, %v4072
    %v4293 = vpack.c.b16 %v4081, %v4077
    %v4294 = vpack.c.b16 %v4082, %v4078
    %v4295 = vpack.c.b16 %v4083, %v4079
    %v4296 = vpack.c.b16 %v4084, %v4080
    %v4297 = vpack.c.b16 %v4089, %v4085
    %v4298 = vpack.c.b16 %v4090, %v4086
    %v4299 = vpack.c.b16 %v4091, %v4087
    %v4300 = vpack.c.b16 %v4092, %v4088
    %v4301 = vpack.c.b16 %v4097, %v4093
    %v4302 = vpack.c.b16 %v4098, %v4094
    %v4303 = vpack.c.b16 %v4099, %v4095
    %v4304 = vpack.c.b16 %v4100, %v4096
    %v4305 = vpack.c.b16 %v4105, %v4101
    %v4306 = vpack.c.b16 %v4106, %v4102
    %v4307 = vpack.c.b16 %v4107, %v4103
    %v4308 = vpack.c.b16 %v4108, %v4104
    %v4309 = vpack.c.b16 %v4113, %v4109
    %v4310 = vpack.c.b16 %v4114, %v4110
    %v4311 = vpack.c.b16 %v4115, %v4111
    %v4312 = vpack.c.b16 %v4116, %v4112
    %v4313 = vpack.c.b16 %v4121, %v4117
    %v4314 = vpack.c.b16 %v4122, %v4118
    %v4315 = vpack.c.b16 %v4123, %v4119
    %v4316 = vpack.c.b16 %v4124, %v4120
    %v4317 = vpack.c.b16 %v4129, %v4125
    %v4318 = vpack.c.b16 %v4130, %v4126
    %v4319 = vpack.c.b16 %v4131, %v4127
    %v4320 = vpack.c.b16 %v4132, %v4128
    %v4321 = vpack.c.b16 %v4137, %v4133
    %v4322 = vpack.c.b16 %v4138, %v4134
    %v4323 = vpack.c.b16 %v4139, %v4135
    %v4324 = vpack.c.b16 %v4140, %v4136
    %v4325 = vpack.c.b16 %v4145, %v4141
    %v4326 = vpack.c.b16 %v4146, %v4142
    %v4327 = vpack.c.b16 %v4147, %v4143
    %v4328 = vpack.c.b16 %v4148, %v4144
    %v4329 = vpack.c.b16 %v4153, %v4149
    %v4330 = vpack.c.b16 %v4154, %v4150
    %v4331 = vpack.c.b16 %v4155, %v4151
    %v4332 = vpack.c.b16 %v4156, %v4152
    %v4333 = vpack.c.b16 %v4161, %v4157
    %v4334 = vpack.c.b16 %v4162, %v4158
    %v4335 = vpack.c.b16 %v4163, %v4159
    %v4336 = vpack.c.b16 %v4164, %v4160
    %v4337 = vpack.c.b16 %v4169, %v4165
    %v4338 = vpack.c.b16 %v4170, %v4166
    %v4339 = vpack.c.b16 %v4171, %v4167
    %v4340 = vpack.c.b16 %v4172, %v4168
    %v4341 = vpack.c.b16 %v4177, %v4173
    %v4342 = vpack.c.b16 %v4178, %v4174
    %v4343 = vpack.c.b16 %v4179, %v4175
    %v4344 = vpack.c.b16 %v4180, %v4176
    %v4345 = vpack.c.b16 %v4185, %v4181
    %v4346 = vpack.c.b16 %v4186, %v4182
    %v4347 = vpack.c.b16 %v4187, %v4183
    %v4348 = vpack.c.b16 %v4188, %v4184
    %v4349 = vpack.c.b16 %v4193, %v4189
    %v4350 = vpack.c.b16 %v4194, %v4190
    %v4351 = vpack.c.b16 %v4195, %v4191
    %v4352 = vpack.c.b16 %v4196, %v4192
    %v4353 = vpack.c.b16 %v4201, %v4197
    %v4354 = vpack.c.b16 %v4202, %v4198
    %v4355 = vpack.c.b16 %v4203, %v4199
    %v4356 = vpack.c.b16 %v4204, %v4200
    %v4357 = vpack.c.b16 %v4209, %v4205
    %v4358 = vpack.c.b16 %v4210, %v4206
    %v4359 = vpack.c.b16 %v4211, %v4207
    %v4360 = vpack.c.b16 %v4212, %v4208
    %v4361 = vpack.c.b16 %v4217, %v4213
    %v4362 = vpack.c.b16 %v4218, %v4214
    %v4363 = vpack.c.b16 %v4219, %v4215
    %v4364 = vpack.c.b16 %v4220, %v4216
    %v4365 = vpack.c.b16 %v4225, %v4221
    %v4366 = vpack.c.b16 %v4226, %v4222
    %v4367 = vpack.c.b16 %v4227, %v4223
    %v4368 = vpack.c.b16 %v4228, %v4224
    %v4369 = vpack.c.b16 %v4233, %v4229
    %v4370 = vpack.c.b16 %v4234, %v4230
    %v4371 = vpack.c.b16 %v4235, %v4231
    %v4372 = vpack.c.b16 %v4236, %v4232
    %v4373 = vpack.c.b16 %v4241, %v4237
    %v4374 = vpack.c.b16 %v4242, %v4238
    %v4375 = vpack.c.b16 %v4243, %v4239
    %v4376 = vpack.c.b16 %v4244, %v4240
    %v4377 = vpack.c.b16 %v4249, %v4245
    %v4378 = vpack.c.b16 %v4250, %v4246
    %v4379 = vpack.c.b16 %v4251, %v4247
    %v4380 = vpack.c.b16 %v4252, %v4248
    %4509 = vmatprep.subr.bf16.mxu0 %v4254
    %4510 = vmatpush1.bf16.msra.mxu0 %v4253
    %4511 = vmatprep.subr.bf16.mxu0 %v4258
    %4512 = vmatpush1.bf16.msra.mxu0 %v4257
    %4513 = vmatprep.subr.bf16.mxu0 %v4262
    %4514 = vmatpush1.bf16.msra.mxu0 %v4261
    %4515 = vmatprep.subr.bf16.mxu0 %v4266
    %4516 = vmatpush1.bf16.msra.mxu0 %v4265
    %4517 = vmatprep.subr.bf16.mxu0 %v4270
    %4518 = vmatpush1.bf16.msra.mxu0 %v4269
    %4519 = vmatprep.subr.bf16.mxu0 %v4274
    %4520 = vmatpush1.bf16.msra.mxu0 %v4273
    %4521 = vmatprep.subr.bf16.mxu0 %v4278
    %4522 = vmatpush1.bf16.msra.mxu0 %v4277
    %4523 = vmatprep.subr.bf16.mxu0 %v4282
    %4524 = vmatpush1.bf16.msra.mxu0 %v4281
    %4525 = vmatprep.subr.bf16.mxu0 %v4286
    %4526 = vmatpush1.bf16.msra.mxu0 %v4285
    %4527 = vmatprep.subr.bf16.mxu0 %v4290
    %4528 = vmatpush1.bf16.msra.mxu0 %v4289
    %4529 = vmatprep.subr.bf16.mxu0 %v4294
    %4530 = vmatpush1.bf16.msra.mxu0 %v4293
    %4531 = vmatprep.subr.bf16.mxu0 %v4298
    %4532 = vmatpush1.bf16.msra.mxu0 %v4297
    %4533 = vmatprep.subr.bf16.mxu0 %v4302
    %4534 = vmatpush1.bf16.msra.mxu0 %v4301
    %4535 = vmatprep.subr.bf16.mxu0 %v4306
    %4536 = vmatpush1.bf16.msra.mxu0 %v4305
    %4537 = vmatprep.subr.bf16.mxu0 %v4310
    %4538 = vmatpush1.bf16.msra.mxu0 %v4309
    %4539 = vmatprep.subr.bf16.mxu0 %v4314
    %4540 = vmatpush1.bf16.msra.mxu0 %v4313
    %4541 = vmatprep.mubr.bf16.mxu0 %v3729
    %4542 = vmatmul.mubr.bf16.gmra.mrb[0].mxu0 %v3728
    %v4543 = vpop.f32.mrb[0].mxu0
    %v4544 = vadd.f32 0.0, %v4543
    %v4545 = vpop.f32.mrb[0].mxu0
    %v4546 = vadd.f32 0.0, %v4545
    %v4547 = vpop.f32.mrb[0].mxu0
    %v4548 = vadd.f32 0.0, %v4547
    %v4549 = vpop.f32.mrb[0].mxu0
    %v4550 = vadd.f32 0.0, %v4549
    %4551 = vmatprep.mubr.bf16.mxu0 %v3733
    %4552 = vmatmul.mubr.bf16.gmra.mrb[0].mxu0 %v3732
    %v4553 = vpop.f32.mrb[0].mxu0
    %v4554 = vpop.f32.mrb[0].mxu0
    %v4555 = vpop.f32.mrb[0].mxu0
    %v4556 = vadd.f32 0.0, %v4555
    %v4557 = vpop.f32.mrb[0].mxu0
    %v4558 = vadd.f32 0.0, %v4557
    %4559 = vmatprep.mubr.bf16.mxu0 %v3737
    %4560 = vmatmul.mubr.bf16.gmra.mrb[0].mxu0 %v3736
    %v4561 = vpop.f32.mrb[0].mxu0
    %v4562 = vadd.f32 0.0, %v4561
    %v4563 = vpop.f32.mrb[0].mxu0
    %v4564 = vadd.f32 0.0, %v4563
    %v4565 = vpop.f32.mrb[0].mxu0
    %v4566 = vpop.f32.mrb[0].mxu0
    %4567 = vdwg.mxu0
    %4568 = vmatprep.subr.bf16.mxu0 %v4318
    %4569 = vmatpush1.bf16.msra.mxu0 %v4317
    %4570 = vmatprep.subr.bf16.mxu0 %v4322
    %4571 = vmatpush1.bf16.msra.mxu0 %v4321
    %4572 = vmatprep.subr.bf16.mxu0 %v4326
    %4573 = vmatpush1.bf16.msra.mxu0 %v4325
    %4574 = vmatprep.subr.bf16.mxu0 %v4330
    %4575 = vmatpush1.bf16.msra.mxu0 %v4329
    %4576 = vmatprep.subr.bf16.mxu0 %v4334
    %4577 = vmatpush1.bf16.msra.mxu0 %v4333
    %4578 = vmatprep.subr.bf16.mxu0 %v4338
    %4579 = vmatpush1.bf16.msra.mxu0 %v4337
    %4580 = vmatprep.subr.bf16.mxu0 %v4342
    %4581 = vmatpush1.bf16.msra.mxu0 %v4341
    %4582 = vmatprep.subr.bf16.mxu0 %v4346
    %4583 = vmatpush1.bf16.msra.mxu0 %v4345
    %4584 = vmatprep.subr.bf16.mxu0 %v4350
    %4585 = vmatpush1.bf16.msra.mxu0 %v4349
    %4586 = vmatprep.subr.bf16.mxu0 %v4354
    %4587 = vmatpush1.bf16.msra.mxu0 %v4353
    %4588 = vmatprep.subr.bf16.mxu0 %v4358
    %4589 = vmatpush1.bf16.msra.mxu0 %v4357
    %4590 = vmatprep.subr.bf16.mxu0 %v4362
    %4591 = vmatpush1.bf16.msra.mxu0 %v4361
    %4592 = vmatprep.subr.bf16.mxu0 %v4366
    %4593 = vmatpush1.bf16.msra.mxu0 %v4365
    %4594 = vmatprep.subr.bf16.mxu0 %v4370
    %4595 = vmatpush1.bf16.msra.mxu0 %v4369
    %4596 = vmatprep.subr.bf16.mxu0 %v4374
    %4597 = vmatpush1.bf16.msra.mxu0 %v4373
    %4598 = vmatprep.subr.bf16.mxu0 %v4378
    %4599 = vmatpush1.bf16.msra.mxu0 %v4377
    %4600 = vmatprep.mubr.bf16.mxu0 %v3731
    %4601 = vmatmul.mubr.bf16.gmra.mrb[0].mxu0 %v3730
    %v4602 = vpop.f32.mrb[0].mxu0
    %v4603 = vadd.f32 %v4544, %v4602
    %v4604 = vpop.f32.mrb[0].mxu0
    %v4605 = vadd.f32 %v4546, %v4604
    %v4606 = vpop.f32.mrb[0].mxu0
    %v4607 = vadd.f32 %v4548, %v4606
    %v4608 = vpop.f32.mrb[0].mxu0
    %v4609 = vadd.f32 %v4550, %v4608
    %4610 = vmatprep.mubr.bf16.mxu0 %v3735
    %4611 = vmatmul.mubr.bf16.gmra.mrb[0].mxu0 %v3734
    %v4612 = vpop.f32.mrb[0].mxu0
    %v4613 = vpop.f32.mrb[0].mxu0
    %v4614 = vpop.f32.mrb[0].mxu0
    %v4615 = vadd.f32 %v4556, %v4614
    %v4616 = vpop.f32.mrb[0].mxu0
    %v4617 = vadd.f32 %v4558, %v4616
    %4618 = vmatprep.mubr.bf16.mxu0 %v3739
    %4619 = vmatmul.mubr.bf16.gmra.mrb[0].mxu0 %v3738
    %v4620 = vpop.f32.mrb[0].mxu0
    %v4621 = vadd.f32 %v4562, %v4620
    %v4622 = vpop.f32.mrb[0].mxu0
    %v4623 = vadd.f32 %v4564, %v4622
    %v4624 = vpop.f32.mrb[0].mxu0
    %v4625 = vpop.f32.mrb[0].mxu0
    %4626 = vdwg.mxu0
    %4627 = vmatprep.subr.bf16.mxu0 %v4256
    %4628 = vmatpush1.bf16.msra.mxu0 %v4255
    %4629 = vmatprep.subr.bf16.mxu0 %v4260
    %4630 = vmatpush1.bf16.msra.mxu0 %v4259
    %4631 = vmatprep.subr.bf16.mxu0 %v4264
    %4632 = vmatpush1.bf16.msra.mxu0 %v4263
    %4633 = vmatprep.subr.bf16.mxu0 %v4268
    %4634 = vmatpush1.bf16.msra.mxu0 %v4267
    %4635 = vmatprep.subr.bf16.mxu0 %v4272
    %4636 = vmatpush1.bf16.msra.mxu0 %v4271
    %4637 = vmatprep.subr.bf16.mxu0 %v4276
    %4638 = vmatpush1.bf16.msra.mxu0 %v4275
    %4639 = vmatprep.subr.bf16.mxu0 %v4280
    %4640 = vmatpush1.bf16.msra.mxu0 %v4279
    %4641 = vmatprep.subr.bf16.mxu0 %v4284
    %4642 = vmatpush1.bf16.msra.mxu0 %v4283
    %4643 = vmatprep.subr.bf16.mxu0 %v4288
    %4644 = vmatpush1.bf16.msra.mxu0 %v4287
    %4645 = vmatprep.subr.bf16.mxu0 %v4292
    %4646 = vmatpush1.bf16.msra.mxu0 %v4291
    %4647 = vmatprep.subr.bf16.mxu0 %v4296
    %4648 = vmatpush1.bf16.msra.mxu0 %v4295
    %4649 = vmatprep.subr.bf16.mxu0 %v4300
    %4650 = vmatpush1.bf16.msra.mxu0 %v4299
    %4651 = vmatprep.subr.bf16.mxu0 %v4304
    %4652 = vmatpush1.bf16.msra.mxu0 %v4303
    %4653 = vmatprep.subr.bf16.mxu0 %v4308
    %4654 = vmatpush1.bf16.msra.mxu0 %v4307
    %4655 = vmatprep.subr.bf16.mxu0 %v4312
    %4656 = vmatpush1.bf16.msra.mxu0 %v4311
    %4657 = vmatprep.subr.bf16.mxu0 %v4316
    %4658 = vmatpush1.bf16.msra.mxu0 %v4315
    %4659 = vmatprep.mubr.bf16.mxu0 %v3729
    %4660 = vmatmul.mubr.bf16.gmra.mrb[0].mxu0 %v3728
    %v4661 = vpop.f32.mrb[0].mxu0
    %v4662 = vadd.f32 0.0, %v4661
    %v4663 = vpop.f32.mrb[0].mxu0
    %v4664 = vadd.f32 0.0, %v4663
    %v4665 = vpop.f32.mrb[0].mxu0
    %v4666 = vadd.f32 0.0, %v4665
    %v4667 = vpop.f32.mrb[0].mxu0
    %v4668 = vadd.f32 0.0, %v4667
    %4669 = vmatprep.mubr.bf16.mxu0 %v3733
    %4670 = vmatmul.mubr.bf16.gmra.mrb[0].mxu0 %v3732
    %v4671 = vpop.f32.mrb[0].mxu0
    %v4672 = vpop.f32.mrb[0].mxu0
    %v4673 = vpop.f32.mrb[0].mxu0
    %v4674 = vadd.f32 0.0, %v4673
    %v4675 = vpop.f32.mrb[0].mxu0
    %v4676 = vadd.f32 0.0, %v4675
    %4677 = vmatprep.mubr.bf16.mxu0 %v3737
    %4678 = vmatmul.mubr.bf16.gmra.mrb[0].mxu0 %v3736
    %v4679 = vpop.f32.mrb[0].mxu0
    %v4680 = vadd.f32 0.0, %v4679
    %v4681 = vpop.f32.mrb[0].mxu0
    %v4682 = vadd.f32 0.0, %v4681
    %v4683 = vpop.f32.mrb[0].mxu0
    %v4684 = vpop.f32.mrb[0].mxu0
    %4685 = vdwg.mxu0
    %4686 = vmatprep.subr.bf16.mxu0 %v4320
    %4687 = vmatpush1.bf16.msra.mxu0 %v4319
    %4688 = vmatprep.subr.bf16.mxu0 %v4324
    %4689 = vmatpush1.bf16.msra.mxu0 %v4323
    %4690 = vmatprep.subr.bf16.mxu0 %v4328
    %4691 = vmatpush1.bf16.msra.mxu0 %v4327
    %4692 = vmatprep.subr.bf16.mxu0 %v4332
    %4693 = vmatpush1.bf16.msra.mxu0 %v4331
    %4694 = vmatprep.subr.bf16.mxu0 %v4336
    %4695 = vmatpush1.bf16.msra.mxu0 %v4335
    %4696 = vmatprep.subr.bf16.mxu0 %v4340
    %4697 = vmatpush1.bf16.msra.mxu0 %v4339
    %4698 = vmatprep.subr.bf16.mxu0 %v4344
    %4699 = vmatpush1.bf16.msra.mxu0 %v4343
    %4700 = vmatprep.subr.bf16.mxu0 %v4348
    %4701 = vmatpush1.bf16.msra.mxu0 %v4347
    %4702 = vmatprep.subr.bf16.mxu0 %v4352
    %4703 = vmatpush1.bf16.msra.mxu0 %v4351
    %4704 = vmatprep.subr.bf16.mxu0 %v4356
    %4705 = vmatpush1.bf16.msra.mxu0 %v4355
    %4706 = vmatprep.subr.bf16.mxu0 %v4360
    %4707 = vmatpush1.bf16.msra.mxu0 %v4359
    %4708 = vmatprep.subr.bf16.mxu0 %v4364
    %4709 = vmatpush1.bf16.msra.mxu0 %v4363
    %4710 = vmatprep.subr.bf16.mxu0 %v4368
    %4711 = vmatpush1.bf16.msra.mxu0 %v4367
    %4712 = vmatprep.subr.bf16.mxu0 %v4372
    %4713 = vmatpush1.bf16.msra.mxu0 %v4371
    %4714 = vmatprep.subr.bf16.mxu0 %v4376
    %4715 = vmatpush1.bf16.msra.mxu0 %v4375
    %4716 = vmatprep.subr.bf16.mxu0 %v4380
    %4717 = vmatpush1.bf16.msra.mxu0 %v4379
    %4718 = vmatprep.mubr.bf16.mxu0 %v3731
    %4719 = vmatmul.mubr.bf16.gmra.mrb[0].mxu0 %v3730
    %v4720 = vpop.f32.mrb[0].mxu0
    %v4721 = vadd.f32 %v4662, %v4720
    %v4722 = vpop.f32.mrb[0].mxu0
    %v4723 = vadd.f32 %v4664, %v4722
    %v4724 = vpop.f32.mrb[0].mxu0
    %v4725 = vadd.f32 %v4666, %v4724
    %v4726 = vpop.f32.mrb[0].mxu0
    %v4727 = vadd.f32 %v4668, %v4726
    %4728 = vmatprep.mubr.bf16.mxu0 %v3735
    %4729 = vmatmul.mubr.bf16.gmra.mrb[0].mxu0 %v3734
    %v4730 = vpop.f32.mrb[0].mxu0
    %v4731 = vpop.f32.mrb[0].mxu0
    %v4732 = vpop.f32.mrb[0].mxu0
    %v4733 = vadd.f32 %v4674, %v4732
    %v4734 = vpop.f32.mrb[0].mxu0
    %v4735 = vadd.f32 %v4676, %v4734
    %4736 = vmatprep.mubr.bf16.mxu0 %v3739
    %4737 = vmatmul.mubr.bf16.gmra.mrb[0].mxu0 %v3738
    %v4738 = vpop.f32.mrb[0].mxu0
    %v4739 = vadd.f32 %v4680, %v4738
    %v4740 = vpop.f32.mrb[0].mxu0
    %v4741 = vadd.f32 %v4682, %v4740
    %v4742 = vpop.f32.mrb[0].mxu0
    %v4743 = vpop.f32.mrb[0].mxu0
    %4744 = vdwg.mxu0
    %v4746 = vshrl.u32 %v3584, 16
    %v4748 = vrot.slane %v4746, 3
    %v4749 = vshll.u32 %v3584, 16
    %v4751 = vrot.slane %v4749, 4
    %v4752 = vor.u32 %v4748, %v4751
    %v4754 = vshrl.u32 %v3588, 16
    %v4756 = vrot.slane %v4754, 3
    %v4757 = vshll.u32 %v3588, 16
    %v4759 = vrot.slane %v4757, 4
    %v4760 = vor.u32 %v4756, %v4759
    %v4761 = vsel %vm1335, %v4752, %v4760
    %v4763 = vshrl.u32 %v3585, 16
    %v4765 = vrot.slane %v4763, 3
    %v4766 = vshll.u32 %v3585, 16
    %v4768 = vrot.slane %v4766, 4
    %v4769 = vor.u32 %v4765, %v4768
    %v4771 = vshrl.u32 %v3589, 16
    %v4773 = vrot.slane %v4771, 3
    %v4774 = vshll.u32 %v3589, 16
    %v4776 = vrot.slane %v4774, 4
    %v4777 = vor.u32 %v4773, %v4776
    %v4778 = vsel %vm1335, %v4769, %v4777
    %v4780 = vshrl.u32 %v3586, 16
    %v4782 = vrot.slane %v4780, 3
    %v4783 = vshll.u32 %v3586, 16
    %v4785 = vrot.slane %v4783, 4
    %v4786 = vor.u32 %v4782, %v4785
    %v4788 = vshrl.u32 %v3590, 16
    %v4790 = vrot.slane %v4788, 3
    %v4791 = vshll.u32 %v3590, 16
    %v4793 = vrot.slane %v4791, 4
    %v4794 = vor.u32 %v4790, %v4793
    %v4795 = vsel %vm1335, %v4786, %v4794
    %v4797 = vshrl.u32 %v3587, 16
    %v4799 = vrot.slane %v4797, 3
    %v4800 = vshll.u32 %v3587, 16
    %v4802 = vrot.slane %v4800, 4
    %v4803 = vor.u32 %v4799, %v4802
    %v4805 = vshrl.u32 %v3591, 16
    %v4807 = vrot.slane %v4805, 3
    %v4808 = vshll.u32 %v3591, 16
    %v4810 = vrot.slane %v4808, 4
    %v4811 = vor.u32 %v4807, %v4810
    %v4812 = vsel %vm1335, %v4803, %v4811
    %v4814 = vshrl.u32 %v3592, 16
    %v4816 = vrot.slane %v4814, 3
    %v4817 = vshll.u32 %v3592, 16
    %v4819 = vrot.slane %v4817, 4
    %v4820 = vor.u32 %v4816, %v4819
    %v4821 = vsel %vm1335, %v4760, %v4820
    %v4823 = vshrl.u32 %v3593, 16
    %v4825 = vrot.slane %v4823, 3
    %v4826 = vshll.u32 %v3593, 16
    %v4828 = vrot.slane %v4826, 4
    %v4829 = vor.u32 %v4825, %v4828
    %v4830 = vsel %vm1335, %v4777, %v4829
    %v4832 = vshrl.u32 %v3594, 16
    %v4834 = vrot.slane %v4832, 3
    %v4835 = vshll.u32 %v3594, 16
    %v4837 = vrot.slane %v4835, 4
    %v4838 = vor.u32 %v4834, %v4837
    %v4839 = vsel %vm1335, %v4794, %v4838
    %v4841 = vshrl.u32 %v3595, 16
    %v4843 = vrot.slane %v4841, 3
    %v4844 = vshll.u32 %v3595, 16
    %v4846 = vrot.slane %v4844, 4
    %v4847 = vor.u32 %v4843, %v4846
    %v4848 = vsel %vm1335, %v4811, %v4847
    %v4989 = vunpack.c.l.b16 %v3596
    %v4990 = vunpack.c.h.b16 %v3596
    %v4991 = vunpack.c.l.b16 %v3597
    %v4992 = vunpack.c.h.b16 %v3597
    %v4993 = vunpack.c.l.b16 %v3598
    %v4994 = vunpack.c.h.b16 %v3598
    %v4995 = vunpack.c.l.b16 %v3599
    %v4996 = vunpack.c.h.b16 %v3599
    %v4997 = vunpack.c.l.b16 %v3600
    %v4998 = vunpack.c.h.b16 %v3600
    %v4999 = vunpack.c.l.b16 %v3601
    %v5000 = vunpack.c.h.b16 %v3601
    %v5001 = vunpack.c.l.b16 %v3602
    %v5002 = vunpack.c.h.b16 %v3602
    %v5003 = vunpack.c.l.b16 %v3603
    %v5004 = vunpack.c.h.b16 %v3603
    %v5005 = vunpack.c.l.b16 %v3604
    %v5006 = vunpack.c.h.b16 %v3604
    %v5007 = vunpack.c.l.b16 %v3605
    %v5008 = vunpack.c.h.b16 %v3605
    %v5009 = vunpack.c.l.b16 %v3606
    %v5010 = vunpack.c.h.b16 %v3606
    %v5011 = vunpack.c.l.b16 %v3607
    %v5012 = vunpack.c.h.b16 %v3607
    %v5013 = vunpack.c.l.b16 %v3608
    %v5014 = vunpack.c.h.b16 %v3608
    %v5015 = vunpack.c.l.b16 %v3609
    %v5016 = vunpack.c.h.b16 %v3609
    %v5017 = vunpack.c.l.b16 %v3610
    %v5018 = vunpack.c.h.b16 %v3610
    %v5019 = vunpack.c.l.b16 %v3611
    %v5020 = vunpack.c.h.b16 %v3611
    %v5021 = vunpack.c.l.b16 %v3612
    %v5022 = vunpack.c.h.b16 %v3612
    %v5023 = vunpack.c.l.b16 %v3613
    %v5024 = vunpack.c.h.b16 %v3613
    %v5025 = vunpack.c.l.b16 %v3614
    %v5026 = vunpack.c.h.b16 %v3614
    %v5027 = vunpack.c.l.b16 %v3615
    %v5028 = vunpack.c.h.b16 %v3615
    %v5029 = vunpack.c.l.b16 %v3616
    %v5030 = vunpack.c.h.b16 %v3616
    %v5031 = vunpack.c.l.b16 %v3617
    %v5032 = vunpack.c.h.b16 %v3617
    %v5033 = vunpack.c.l.b16 %v3618
    %v5034 = vunpack.c.h.b16 %v3618
    %v5035 = vunpack.c.l.b16 %v3619
    %v5036 = vunpack.c.h.b16 %v3619
    %v5037 = vunpack.c.l.b16 %v3620
    %v5038 = vunpack.c.h.b16 %v3620
    %v5039 = vunpack.c.l.b16 %v3621
    %v5040 = vunpack.c.h.b16 %v3621
    %v5041 = vunpack.c.l.b16 %v3622
    %v5042 = vunpack.c.h.b16 %v3622
    %v5043 = vunpack.c.l.b16 %v3623
    %v5044 = vunpack.c.h.b16 %v3623
    %v5045 = vunpack.c.l.b16 %v3624
    %v5046 = vunpack.c.h.b16 %v3624
    %v5047 = vunpack.c.l.b16 %v3625
    %v5048 = vunpack.c.h.b16 %v3625
    %v5049 = vunpack.c.l.b16 %v3626
    %v5050 = vunpack.c.h.b16 %v3626
    %v5051 = vunpack.c.l.b16 %v3627
    %v5052 = vunpack.c.h.b16 %v3627
    %v5053 = vunpack.c.l.b16 %v3628
    %v5054 = vunpack.c.h.b16 %v3628
    %v5055 = vunpack.c.l.b16 %v3629
    %v5056 = vunpack.c.h.b16 %v3629
    %v5057 = vunpack.c.l.b16 %v3630
    %v5058 = vunpack.c.h.b16 %v3630
    %v5059 = vunpack.c.l.b16 %v3631
    %v5060 = vunpack.c.h.b16 %v3631
    %v5061 = vunpack.c.l.b16 %v3632
    %v5062 = vunpack.c.h.b16 %v3632
    %v5063 = vunpack.c.l.b16 %v3633
    %v5064 = vunpack.c.h.b16 %v3633
    %v5065 = vunpack.c.l.b16 %v3634
    %v5066 = vunpack.c.h.b16 %v3634
    %v5067 = vunpack.c.l.b16 %v3635
    %v5068 = vunpack.c.h.b16 %v3635
    %v5069 = vunpack.c.l.b16 %v3636
    %v5070 = vunpack.c.h.b16 %v3636
    %v5071 = vunpack.c.l.b16 %v3637
    %v5072 = vunpack.c.h.b16 %v3637
    %v5073 = vunpack.c.l.b16 %v3638
    %v5074 = vunpack.c.h.b16 %v3638
    %v5075 = vunpack.c.l.b16 %v3639
    %v5076 = vunpack.c.h.b16 %v3639
    %v5077 = vunpack.c.l.b16 %v3640
    %v5078 = vunpack.c.h.b16 %v3640
    %v5079 = vunpack.c.l.b16 %v3641
    %v5080 = vunpack.c.h.b16 %v3641
    %v5081 = vunpack.c.l.b16 %v3642
    %v5082 = vunpack.c.h.b16 %v3642
    %v5083 = vunpack.c.l.b16 %v3643
    %v5084 = vunpack.c.h.b16 %v3643
    %v5085 = vunpack.c.l.b16 %v3644
    %v5086 = vunpack.c.h.b16 %v3644
    %v5087 = vunpack.c.l.b16 %v3645
    %v5088 = vunpack.c.h.b16 %v3645
    %v5089 = vunpack.c.l.b16 %v3646
    %v5090 = vunpack.c.h.b16 %v3646
    %v5091 = vunpack.c.l.b16 %v3647
    %v5092 = vunpack.c.h.b16 %v3647
    %v5093 = vunpack.c.l.b16 %v3648
    %v5094 = vunpack.c.h.b16 %v3648
    %v5095 = vunpack.c.l.b16 %v3649
    %v5096 = vunpack.c.h.b16 %v3649
    %v5097 = vunpack.c.l.b16 %v3650
    %v5098 = vunpack.c.h.b16 %v3650
    %v5099 = vunpack.c.l.b16 %v3651
    %v5100 = vunpack.c.h.b16 %v3651
    %v5101 = vunpack.c.l.b16 %v3652
    %v5102 = vunpack.c.h.b16 %v3652
    %v5103 = vunpack.c.l.b16 %v3653
    %v5104 = vunpack.c.h.b16 %v3653
    %v5105 = vunpack.c.l.b16 %v3654
    %v5106 = vunpack.c.h.b16 %v3654
    %v5107 = vunpack.c.l.b16 %v3655
    %v5108 = vunpack.c.h.b16 %v3655
    %v5109 = vunpack.c.l.b16 %v3656
    %v5110 = vunpack.c.h.b16 %v3656
    %v5111 = vunpack.c.l.b16 %v3657
    %v5112 = vunpack.c.h.b16 %v3657
    %v5113 = vunpack.c.l.b16 %v3658
    %v5114 = vunpack.c.h.b16 %v3658
    %v5115 = vunpack.c.l.b16 %v3659
    %v5116 = vunpack.c.h.b16 %v3659
    %v5117 = vunpack.c.l.b16 %v3660
    %v5118 = vunpack.c.h.b16 %v3660
    %v5119 = vunpack.c.l.b16 %v3661
    %v5120 = vunpack.c.h.b16 %v3661
    %v5121 = vunpack.c.l.b16 %v3662
    %v5122 = vunpack.c.h.b16 %v3662
    %v5123 = vunpack.c.l.b16 %v3663
    %v5124 = vunpack.c.h.b16 %v3663
    %v5125 = vunpack.c.l.b16 %v3664
    %v5126 = vunpack.c.h.b16 %v3664
    %v5127 = vunpack.c.l.b16 %v3665
    %v5128 = vunpack.c.h.b16 %v3665
    %v5129 = vunpack.c.l.b16 %v3666
    %v5130 = vunpack.c.h.b16 %v3666
    %v5131 = vunpack.c.l.b16 %v3667
    %v5132 = vunpack.c.h.b16 %v3667
    %v5133 = vunpack.c.l.b16 %v3668
    %v5134 = vunpack.c.h.b16 %v3668
    %v5135 = vunpack.c.l.b16 %v3669
    %v5136 = vunpack.c.h.b16 %v3669
    %v5137 = vunpack.c.l.b16 %v3670
    %v5138 = vunpack.c.h.b16 %v3670
    %v5139 = vunpack.c.l.b16 %v3671
    %v5140 = vunpack.c.h.b16 %v3671
    %v5141 = vunpack.c.l.b16 %v3672
    %v5142 = vunpack.c.h.b16 %v3672
    %v5143 = vunpack.c.l.b16 %v3673
    %v5144 = vunpack.c.h.b16 %v3673
    %v5145 = vunpack.c.l.b16 %v3674
    %v5146 = vunpack.c.h.b16 %v3674
    %v5147 = vunpack.c.l.b16 %v3675
    %v5148 = vunpack.c.h.b16 %v3675
    %v5149 = vunpack.c.l.b16 %v3676
    %v5150 = vunpack.c.h.b16 %v3676
    %v5151 = vunpack.c.l.b16 %v3677
    %v5152 = vunpack.c.h.b16 %v3677
    %v5153 = vunpack.c.l.b16 %v3678
    %v5154 = vunpack.c.h.b16 %v3678
    %v5155 = vunpack.c.l.b16 %v3679
    %v5156 = vunpack.c.h.b16 %v3679
    %v5157 = vunpack.c.l.b16 %v3680
    %v5158 = vunpack.c.h.b16 %v3680
    %v5159 = vunpack.c.l.b16 %v3681
    %v5160 = vunpack.c.h.b16 %v3681
    %v5161 = vunpack.c.l.b16 %v3682
    %v5162 = vunpack.c.h.b16 %v3682
    %v5163 = vunpack.c.l.b16 %v3683
    %v5164 = vunpack.c.h.b16 %v3683
    %v5165 = vunpack.c.l.b16 %v3684
    %v5166 = vunpack.c.h.b16 %v3684
    %v5167 = vunpack.c.l.b16 %v3685
    %v5168 = vunpack.c.h.b16 %v3685
    %v5169 = vunpack.c.l.b16 %v3686
    %v5170 = vunpack.c.h.b16 %v3686
    %v5171 = vunpack.c.l.b16 %v3687
    %v5172 = vunpack.c.h.b16 %v3687
    %v5173 = vunpack.c.l.b16 %v3688
    %v5174 = vunpack.c.h.b16 %v3688
    %v5175 = vunpack.c.l.b16 %v3689
    %v5176 = vunpack.c.h.b16 %v3689
    %v5177 = vunpack.c.l.b16 %v3690
    %v5178 = vunpack.c.h.b16 %v3690
    %v5179 = vunpack.c.l.b16 %v3691
    %v5180 = vunpack.c.h.b16 %v3691
    %v5181 = vunpack.c.l.b16 %v3692
    %v5182 = vunpack.c.h.b16 %v3692
    %v5183 = vunpack.c.l.b16 %v3693
    %v5184 = vunpack.c.h.b16 %v3693
    %v5185 = vunpack.c.l.b16 %v3694
    %v5186 = vunpack.c.h.b16 %v3694
    %v5187 = vunpack.c.l.b16 %v3695
    %v5188 = vunpack.c.h.b16 %v3695
    %v5189 = vunpack.c.l.b16 %v3696
    %v5190 = vunpack.c.h.b16 %v3696
    %v5191 = vunpack.c.l.b16 %v3697
    %v5192 = vunpack.c.h.b16 %v3697
    %v5193 = vunpack.c.l.b16 %v3698
    %v5194 = vunpack.c.h.b16 %v3698
    %v5195 = vunpack.c.l.b16 %v3699
    %v5196 = vunpack.c.h.b16 %v3699
    %v5197 = vunpack.c.l.b16 %v3700
    %v5198 = vunpack.c.h.b16 %v3700
    %v5199 = vunpack.c.l.b16 %v3701
    %v5200 = vunpack.c.h.b16 %v3701
    %v5201 = vunpack.c.l.b16 %v3702
    %v5202 = vunpack.c.h.b16 %v3702
    %v5203 = vunpack.c.l.b16 %v3703
    %v5204 = vunpack.c.h.b16 %v3703
    %v5205 = vunpack.c.l.b16 %v3704
    %v5206 = vunpack.c.h.b16 %v3704
    %v5207 = vunpack.c.l.b16 %v3705
    %v5208 = vunpack.c.h.b16 %v3705
    %v5209 = vunpack.c.l.b16 %v3706
    %v5210 = vunpack.c.h.b16 %v3706
    %v5211 = vunpack.c.l.b16 %v3707
    %v5212 = vunpack.c.h.b16 %v3707
    %v5213 = vunpack.c.l.b16 %v3708
    %v5214 = vunpack.c.h.b16 %v3708
    %v5215 = vunpack.c.l.b16 %v3709
    %v5216 = vunpack.c.h.b16 %v3709
    %v5217 = vunpack.c.l.b16 %v3710
    %v5218 = vunpack.c.h.b16 %v3710
    %v5219 = vunpack.c.l.b16 %v3711
    %v5220 = vunpack.c.h.b16 %v3711
    %v5221 = vunpack.c.l.b16 %v3712
    %v5222 = vunpack.c.h.b16 %v3712
    %v5223 = vunpack.c.l.b16 %v3713
    %v5224 = vunpack.c.h.b16 %v3713
    %v5225 = vunpack.c.l.b16 %v3714
    %v5226 = vunpack.c.h.b16 %v3714
    %v5227 = vunpack.c.l.b16 %v3715
    %v5228 = vunpack.c.h.b16 %v3715
    %v5229 = vunpack.c.l.b16 %v3716
    %v5230 = vunpack.c.h.b16 %v3716
    %v5231 = vunpack.c.l.b16 %v3717
    %v5232 = vunpack.c.h.b16 %v3717
    %v5233 = vunpack.c.l.b16 %v3718
    %v5234 = vunpack.c.h.b16 %v3718
    %v5235 = vunpack.c.l.b16 %v3719
    %v5236 = vunpack.c.h.b16 %v3719
    %v5237 = vunpack.c.l.b16 %v3720
    %v5238 = vunpack.c.h.b16 %v3720
    %v5239 = vunpack.c.l.b16 %v3721
    %v5240 = vunpack.c.h.b16 %v3721
    %v5241 = vunpack.c.l.b16 %v3722
    %v5242 = vunpack.c.h.b16 %v3722
    %v5243 = vunpack.c.l.b16 %v3723
    %v5244 = vunpack.c.h.b16 %v3723
    %v5245 = vpack.c.b16 %v4993, %v4989
    %v5246 = vpack.c.b16 %v4994, %v4990
    %v5247 = vpack.c.b16 %v4995, %v4991
    %v5248 = vpack.c.b16 %v4996, %v4992
    %v5249 = vpack.c.b16 %v5001, %v4997
    %v5250 = vpack.c.b16 %v5002, %v4998
    %v5251 = vpack.c.b16 %v5003, %v4999
    %v5252 = vpack.c.b16 %v5004, %v5000
    %v5253 = vpack.c.b16 %v5009, %v5005
    %v5254 = vpack.c.b16 %v5010, %v5006
    %v5255 = vpack.c.b16 %v5011, %v5007
    %v5256 = vpack.c.b16 %v5012, %v5008
    %v5257 = vpack.c.b16 %v5017, %v5013
    %v5258 = vpack.c.b16 %v5018, %v5014
    %v5259 = vpack.c.b16 %v5019, %v5015
    %v5260 = vpack.c.b16 %v5020, %v5016
    %v5261 = vpack.c.b16 %v5025, %v5021
    %v5262 = vpack.c.b16 %v5026, %v5022
    %v5263 = vpack.c.b16 %v5027, %v5023
    %v5264 = vpack.c.b16 %v5028, %v5024
    %v5265 = vpack.c.b16 %v5033, %v5029
    %v5266 = vpack.c.b16 %v5034, %v5030
    %v5267 = vpack.c.b16 %v5035, %v5031
    %v5268 = vpack.c.b16 %v5036, %v5032
    %v5269 = vpack.c.b16 %v5041, %v5037
    %v5270 = vpack.c.b16 %v5042, %v5038
    %v5271 = vpack.c.b16 %v5043, %v5039
    %v5272 = vpack.c.b16 %v5044, %v5040
    %v5273 = vpack.c.b16 %v5049, %v5045
    %v5274 = vpack.c.b16 %v5050, %v5046
    %v5275 = vpack.c.b16 %v5051, %v5047
    %v5276 = vpack.c.b16 %v5052, %v5048
    %v5277 = vpack.c.b16 %v5057, %v5053
    %v5278 = vpack.c.b16 %v5058, %v5054
    %v5279 = vpack.c.b16 %v5059, %v5055
    %v5280 = vpack.c.b16 %v5060, %v5056
    %v5281 = vpack.c.b16 %v5065, %v5061
    %v5282 = vpack.c.b16 %v5066, %v5062
    %v5283 = vpack.c.b16 %v5067, %v5063
    %v5284 = vpack.c.b16 %v5068, %v5064
    %v5285 = vpack.c.b16 %v5073, %v5069
    %v5286 = vpack.c.b16 %v5074, %v5070
    %v5287 = vpack.c.b16 %v5075, %v5071
    %v5288 = vpack.c.b16 %v5076, %v5072
    %v5289 = vpack.c.b16 %v5081, %v5077
    %v5290 = vpack.c.b16 %v5082, %v5078
    %v5291 = vpack.c.b16 %v5083, %v5079
    %v5292 = vpack.c.b16 %v5084, %v5080
    %v5293 = vpack.c.b16 %v5089, %v5085
    %v5294 = vpack.c.b16 %v5090, %v5086
    %v5295 = vpack.c.b16 %v5091, %v5087
    %v5296 = vpack.c.b16 %v5092, %v5088
    %v5297 = vpack.c.b16 %v5097, %v5093
    %v5298 = vpack.c.b16 %v5098, %v5094
    %v5299 = vpack.c.b16 %v5099, %v5095
    %v5300 = vpack.c.b16 %v5100, %v5096
    %v5301 = vpack.c.b16 %v5105, %v5101
    %v5302 = vpack.c.b16 %v5106, %v5102
    %v5303 = vpack.c.b16 %v5107, %v5103
    %v5304 = vpack.c.b16 %v5108, %v5104
    %v5305 = vpack.c.b16 %v5113, %v5109
    %v5306 = vpack.c.b16 %v5114, %v5110
    %v5307 = vpack.c.b16 %v5115, %v5111
    %v5308 = vpack.c.b16 %v5116, %v5112
    %v5309 = vpack.c.b16 %v5121, %v5117
    %v5310 = vpack.c.b16 %v5122, %v5118
    %v5311 = vpack.c.b16 %v5123, %v5119
    %v5312 = vpack.c.b16 %v5124, %v5120
    %v5313 = vpack.c.b16 %v5129, %v5125
    %v5314 = vpack.c.b16 %v5130, %v5126
    %v5315 = vpack.c.b16 %v5131, %v5127
    %v5316 = vpack.c.b16 %v5132, %v5128
    %v5317 = vpack.c.b16 %v5137, %v5133
    %v5318 = vpack.c.b16 %v5138, %v5134
    %v5319 = vpack.c.b16 %v5139, %v5135
    %v5320 = vpack.c.b16 %v5140, %v5136
    %v5321 = vpack.c.b16 %v5145, %v5141
    %v5322 = vpack.c.b16 %v5146, %v5142
    %v5323 = vpack.c.b16 %v5147, %v5143
    %v5324 = vpack.c.b16 %v5148, %v5144
    %v5325 = vpack.c.b16 %v5153, %v5149
    %v5326 = vpack.c.b16 %v5154, %v5150
    %v5327 = vpack.c.b16 %v5155, %v5151
    %v5328 = vpack.c.b16 %v5156, %v5152
    %v5329 = vpack.c.b16 %v5161, %v5157
    %v5330 = vpack.c.b16 %v5162, %v5158
    %v5331 = vpack.c.b16 %v5163, %v5159
    %v5332 = vpack.c.b16 %v5164, %v5160
    %v5333 = vpack.c.b16 %v5169, %v5165
    %v5334 = vpack.c.b16 %v5170, %v5166
    %v5335 = vpack.c.b16 %v5171, %v5167
    %v5336 = vpack.c.b16 %v5172, %v5168
    %v5337 = vpack.c.b16 %v5177, %v5173
    %v5338 = vpack.c.b16 %v5178, %v5174
    %v5339 = vpack.c.b16 %v5179, %v5175
    %v5340 = vpack.c.b16 %v5180, %v5176
    %v5341 = vpack.c.b16 %v5185, %v5181
    %v5342 = vpack.c.b16 %v5186, %v5182
    %v5343 = vpack.c.b16 %v5187, %v5183
    %v5344 = vpack.c.b16 %v5188, %v5184
    %v5345 = vpack.c.b16 %v5193, %v5189
    %v5346 = vpack.c.b16 %v5194, %v5190
    %v5347 = vpack.c.b16 %v5195, %v5191
    %v5348 = vpack.c.b16 %v5196, %v5192
    %v5349 = vpack.c.b16 %v5201, %v5197
    %v5350 = vpack.c.b16 %v5202, %v5198
    %v5351 = vpack.c.b16 %v5203, %v5199
    %v5352 = vpack.c.b16 %v5204, %v5200
    %v5353 = vpack.c.b16 %v5209, %v5205
    %v5354 = vpack.c.b16 %v5210, %v5206
    %v5355 = vpack.c.b16 %v5211, %v5207
    %v5356 = vpack.c.b16 %v5212, %v5208
    %v5357 = vpack.c.b16 %v5217, %v5213
    %v5358 = vpack.c.b16 %v5218, %v5214
    %v5359 = vpack.c.b16 %v5219, %v5215
    %v5360 = vpack.c.b16 %v5220, %v5216
    %v5361 = vpack.c.b16 %v5225, %v5221
    %v5362 = vpack.c.b16 %v5226, %v5222
    %v5363 = vpack.c.b16 %v5227, %v5223
    %v5364 = vpack.c.b16 %v5228, %v5224
    %v5365 = vpack.c.b16 %v5233, %v5229
    %v5366 = vpack.c.b16 %v5234, %v5230
    %v5367 = vpack.c.b16 %v5235, %v5231
    %v5368 = vpack.c.b16 %v5236, %v5232
    %v5369 = vpack.c.b16 %v5241, %v5237
    %v5370 = vpack.c.b16 %v5242, %v5238
    %v5371 = vpack.c.b16 %v5243, %v5239
    %v5372 = vpack.c.b16 %v5244, %v5240
    %5501 = vmatprep.subr.bf16.mxu0 %v5246
    %5502 = vmatpush1.bf16.msra.mxu0 %v5245
    %5503 = vmatprep.subr.bf16.mxu0 %v5250
    %5504 = vmatpush1.bf16.msra.mxu0 %v5249
    %5505 = vmatprep.subr.bf16.mxu0 %v5254
    %5506 = vmatpush1.bf16.msra.mxu0 %v5253
    %5507 = vmatprep.subr.bf16.mxu0 %v5258
    %5508 = vmatpush1.bf16.msra.mxu0 %v5257
    %5509 = vmatprep.subr.bf16.mxu0 %v5262
    %5510 = vmatpush1.bf16.msra.mxu0 %v5261
    %5511 = vmatprep.subr.bf16.mxu0 %v5266
    %5512 = vmatpush1.bf16.msra.mxu0 %v5265
    %5513 = vmatprep.subr.bf16.mxu0 %v5270
    %5514 = vmatpush1.bf16.msra.mxu0 %v5269
    %5515 = vmatprep.subr.bf16.mxu0 %v5274
    %5516 = vmatpush1.bf16.msra.mxu0 %v5273
    %5517 = vmatprep.subr.bf16.mxu0 %v5278
    %5518 = vmatpush1.bf16.msra.mxu0 %v5277
    %5519 = vmatprep.subr.bf16.mxu0 %v5282
    %5520 = vmatpush1.bf16.msra.mxu0 %v5281
    %5521 = vmatprep.subr.bf16.mxu0 %v5286
    %5522 = vmatpush1.bf16.msra.mxu0 %v5285
    %5523 = vmatprep.subr.bf16.mxu0 %v5290
    %5524 = vmatpush1.bf16.msra.mxu0 %v5289
    %5525 = vmatprep.subr.bf16.mxu0 %v5294
    %5526 = vmatpush1.bf16.msra.mxu0 %v5293
    %5527 = vmatprep.subr.bf16.mxu0 %v5298
    %5528 = vmatpush1.bf16.msra.mxu0 %v5297
    %5529 = vmatprep.subr.bf16.mxu0 %v5302
    %5530 = vmatpush1.bf16.msra.mxu0 %v5301
    %5531 = vmatprep.subr.bf16.mxu0 %v5306
    %5532 = vmatpush1.bf16.msra.mxu0 %v5305
    %5533 = vmatprep.mubr.bf16.mxu0 %v4778
    %5534 = vmatmul.mubr.bf16.gmra.mrb[0].mxu0 %v4761
    %v5535 = vpop.f32.mrb[0].mxu0
    %v5536 = vadd.f32 %v4603, %v5535
    %v5537 = vpop.f32.mrb[0].mxu0
    %v5538 = vadd.f32 %v4605, %v5537
    %v5539 = vpop.f32.mrb[0].mxu0
    %v5540 = vadd.f32 %v4607, %v5539
    %v5541 = vpop.f32.mrb[0].mxu0
    %v5542 = vadd.f32 %v4609, %v5541
    %5543 = vmatprep.mubr.bf16.mxu0 %v4830
    %5544 = vmatmul.mubr.bf16.gmra.mrb[0].mxu0 %v4821
    %v5545 = vpop.f32.mrb[0].mxu0
    %v5546 = vpop.f32.mrb[0].mxu0
    %v5547 = vpop.f32.mrb[0].mxu0
    %v5548 = vadd.f32 %v4615, %v5547
    %v5549 = vpop.f32.mrb[0].mxu0
    %v5550 = vadd.f32 %v4617, %v5549
    %5551 = vmatprep.mubr.bf16.mxu0 %v4829
    %5552 = vmatmul.mubr.bf16.gmra.mrb[0].mxu0 %v4820
    %v5553 = vpop.f32.mrb[0].mxu0
    %v5554 = vadd.f32 %v4621, %v5553
    %v5555 = vpop.f32.mrb[0].mxu0
    %v5556 = vadd.f32 %v4623, %v5555
    %v5557 = vpop.f32.mrb[0].mxu0
    %v5558 = vpop.f32.mrb[0].mxu0
    %5559 = vdwg.mxu0
    %5560 = vmatprep.subr.bf16.mxu0 %v5310
    %5561 = vmatpush1.bf16.msra.mxu0 %v5309
    %5562 = vmatprep.subr.bf16.mxu0 %v5314
    %5563 = vmatpush1.bf16.msra.mxu0 %v5313
    %5564 = vmatprep.subr.bf16.mxu0 %v5318
    %5565 = vmatpush1.bf16.msra.mxu0 %v5317
    %5566 = vmatprep.subr.bf16.mxu0 %v5322
    %5567 = vmatpush1.bf16.msra.mxu0 %v5321
    %5568 = vmatprep.subr.bf16.mxu0 %v5326
    %5569 = vmatpush1.bf16.msra.mxu0 %v5325
    %5570 = vmatprep.subr.bf16.mxu0 %v5330
    %5571 = vmatpush1.bf16.msra.mxu0 %v5329
    %5572 = vmatprep.subr.bf16.mxu0 %v5334
    %5573 = vmatpush1.bf16.msra.mxu0 %v5333
    %5574 = vmatprep.subr.bf16.mxu0 %v5338
    %5575 = vmatpush1.bf16.msra.mxu0 %v5337
    %5576 = vmatprep.subr.bf16.mxu0 %v5342
    %5577 = vmatpush1.bf16.msra.mxu0 %v5341
    %5578 = vmatprep.subr.bf16.mxu0 %v5346
    %5579 = vmatpush1.bf16.msra.mxu0 %v5345
    %5580 = vmatprep.subr.bf16.mxu0 %v5350
    %5581 = vmatpush1.bf16.msra.mxu0 %v5349
    %5582 = vmatprep.subr.bf16.mxu0 %v5354
    %5583 = vmatpush1.bf16.msra.mxu0 %v5353
    %5584 = vmatprep.subr.bf16.mxu0 %v5358
    %5585 = vmatpush1.bf16.msra.mxu0 %v5357
    %5586 = vmatprep.subr.bf16.mxu0 %v5362
    %5587 = vmatpush1.bf16.msra.mxu0 %v5361
    %5588 = vmatprep.subr.bf16.mxu0 %v5366
    %5589 = vmatpush1.bf16.msra.mxu0 %v5365
    %5590 = vmatprep.subr.bf16.mxu0 %v5370
    %5591 = vmatpush1.bf16.msra.mxu0 %v5369
    %5592 = vmatprep.mubr.bf16.mxu0 %v4812
    %5593 = vmatmul.mubr.bf16.gmra.mrb[0].mxu0 %v4795
    %v5594 = vpop.f32.mrb[0].mxu0
    %v5595 = vadd.f32 %v5536, %v5594
    %v5596 = vpop.f32.mrb[0].mxu0
    %v5597 = vadd.f32 %v5538, %v5596
    %v5598 = vpop.f32.mrb[0].mxu0
    %v5599 = vadd.f32 %v5540, %v5598
    %v5600 = vpop.f32.mrb[0].mxu0
    %v5601 = vadd.f32 %v5542, %v5600
    %5602 = vmatprep.mubr.bf16.mxu0 %v4848
    %5603 = vmatmul.mubr.bf16.gmra.mrb[0].mxu0 %v4839
    %v5604 = vpop.f32.mrb[0].mxu0
    %v5605 = vpop.f32.mrb[0].mxu0
    %v5606 = vpop.f32.mrb[0].mxu0
    %v5607 = vadd.f32 %v5548, %v5606
    %v5608 = vpop.f32.mrb[0].mxu0
    %v5609 = vadd.f32 %v5550, %v5608
    %5610 = vmatprep.mubr.bf16.mxu0 %v4847
    %5611 = vmatmul.mubr.bf16.gmra.mrb[0].mxu0 %v4838
    %v5612 = vpop.f32.mrb[0].mxu0
    %v5613 = vadd.f32 %v5554, %v5612
    %v5614 = vpop.f32.mrb[0].mxu0
    %v5615 = vadd.f32 %v5556, %v5614
    %v5616 = vpop.f32.mrb[0].mxu0
    %v5617 = vpop.f32.mrb[0].mxu0
    %5618 = vdwg.mxu0
    %5619 = vmatprep.subr.bf16.mxu0 %v5248
    %5620 = vmatpush1.bf16.msra.mxu0 %v5247
    %5621 = vmatprep.subr.bf16.mxu0 %v5252
    %5622 = vmatpush1.bf16.msra.mxu0 %v5251
    %5623 = vmatprep.subr.bf16.mxu0 %v5256
    %5624 = vmatpush1.bf16.msra.mxu0 %v5255
    %5625 = vmatprep.subr.bf16.mxu0 %v5260
    %5626 = vmatpush1.bf16.msra.mxu0 %v5259
    %5627 = vmatprep.subr.bf16.mxu0 %v5264
    %5628 = vmatpush1.bf16.msra.mxu0 %v5263
    %5629 = vmatprep.subr.bf16.mxu0 %v5268
    %5630 = vmatpush1.bf16.msra.mxu0 %v5267
    %5631 = vmatprep.subr.bf16.mxu0 %v5272
    %5632 = vmatpush1.bf16.msra.mxu0 %v5271
    %5633 = vmatprep.subr.bf16.mxu0 %v5276
    %5634 = vmatpush1.bf16.msra.mxu0 %v5275
    %5635 = vmatprep.subr.bf16.mxu0 %v5280
    %5636 = vmatpush1.bf16.msra.mxu0 %v5279
    %5637 = vmatprep.subr.bf16.mxu0 %v5284
    %5638 = vmatpush1.bf16.msra.mxu0 %v5283
    %5639 = vmatprep.subr.bf16.mxu0 %v5288
    %5640 = vmatpush1.bf16.msra.mxu0 %v5287
    %5641 = vmatprep.subr.bf16.mxu0 %v5292
    %5642 = vmatpush1.bf16.msra.mxu0 %v5291
    %5643 = vmatprep.subr.bf16.mxu0 %v5296
    %5644 = vmatpush1.bf16.msra.mxu0 %v5295
    %5645 = vmatprep.subr.bf16.mxu0 %v5300
    %5646 = vmatpush1.bf16.msra.mxu0 %v5299
    %5647 = vmatprep.subr.bf16.mxu0 %v5304
    %5648 = vmatpush1.bf16.msra.mxu0 %v5303
    %5649 = vmatprep.subr.bf16.mxu0 %v5308
    %5650 = vmatpush1.bf16.msra.mxu0 %v5307
    %5651 = vmatprep.mubr.bf16.mxu0 %v4778
    %5652 = vmatmul.mubr.bf16.gmra.mrb[0].mxu0 %v4761
    %v5653 = vpop.f32.mrb[0].mxu0
    %v5654 = vadd.f32 %v4721, %v5653
    %v5655 = vpop.f32.mrb[0].mxu0
    %v5656 = vadd.f32 %v4723, %v5655
    %v5657 = vpop.f32.mrb[0].mxu0
    %v5658 = vadd.f32 %v4725, %v5657
    %v5659 = vpop.f32.mrb[0].mxu0
    %v5660 = vadd.f32 %v4727, %v5659
    %5661 = vmatprep.mubr.bf16.mxu0 %v4830
    %5662 = vmatmul.mubr.bf16.gmra.mrb[0].mxu0 %v4821
    %v5663 = vpop.f32.mrb[0].mxu0
    %v5664 = vpop.f32.mrb[0].mxu0
    %v5665 = vpop.f32.mrb[0].mxu0
    %v5666 = vadd.f32 %v4733, %v5665
    %v5667 = vpop.f32.mrb[0].mxu0
    %v5668 = vadd.f32 %v4735, %v5667
    %5669 = vmatprep.mubr.bf16.mxu0 %v4829
    %5670 = vmatmul.mubr.bf16.gmra.mrb[0].mxu0 %v4820
    %v5671 = vpop.f32.mrb[0].mxu0
    %v5672 = vadd.f32 %v4739, %v5671
    %v5673 = vpop.f32.mrb[0].mxu0
    %v5674 = vadd.f32 %v4741, %v5673
    %v5675 = vpop.f32.mrb[0].mxu0
    %v5676 = vpop.f32.mrb[0].mxu0
    %5677 = vdwg.mxu0
    %5678 = vmatprep.subr.bf16.mxu0 %v5312
    %5679 = vmatpush1.bf16.msra.mxu0 %v5311
    %5680 = vmatprep.subr.bf16.mxu0 %v5316
    %5681 = vmatpush1.bf16.msra.mxu0 %v5315
    %5682 = vmatprep.subr.bf16.mxu0 %v5320
    %5683 = vmatpush1.bf16.msra.mxu0 %v5319
    %5684 = vmatprep.subr.bf16.mxu0 %v5324
    %5685 = vmatpush1.bf16.msra.mxu0 %v5323
    %5686 = vmatprep.subr.bf16.mxu0 %v5328
    %5687 = vmatpush1.bf16.msra.mxu0 %v5327
    %5688 = vmatprep.subr.bf16.mxu0 %v5332
    %5689 = vmatpush1.bf16.msra.mxu0 %v5331
    %5690 = vmatprep.subr.bf16.mxu0 %v5336
    %5691 = vmatpush1.bf16.msra.mxu0 %v5335
    %5692 = vmatprep.subr.bf16.mxu0 %v5340
    %5693 = vmatpush1.bf16.msra.mxu0 %v5339
    %5694 = vmatprep.subr.bf16.mxu0 %v5344
    %5695 = vmatpush1.bf16.msra.mxu0 %v5343
    %5696 = vmatprep.subr.bf16.mxu0 %v5348
    %5697 = vmatpush1.bf16.msra.mxu0 %v5347
    %5698 = vmatprep.subr.bf16.mxu0 %v5352
    %5699 = vmatpush1.bf16.msra.mxu0 %v5351
    %5700 = vmatprep.subr.bf16.mxu0 %v5356
    %5701 = vmatpush1.bf16.msra.mxu0 %v5355
    %5702 = vmatprep.subr.bf16.mxu0 %v5360
    %5703 = vmatpush1.bf16.msra.mxu0 %v5359
    %5704 = vmatprep.subr.bf16.mxu0 %v5364
    %5705 = vmatpush1.bf16.msra.mxu0 %v5363
    %5706 = vmatprep.subr.bf16.mxu0 %v5368
    %5707 = vmatpush1.bf16.msra.mxu0 %v5367
    %5708 = vmatprep.subr.bf16.mxu0 %v5372
    %5709 = vmatpush1.bf16.msra.mxu0 %v5371
    %5710 = vmatprep.mubr.bf16.mxu0 %v4812
    %5711 = vmatmul.mubr.bf16.gmra.mrb[0].mxu0 %v4795
    %v5712 = vpop.f32.mrb[0].mxu0
    %v5713 = vadd.f32 %v5654, %v5712
    %v5714 = vpop.f32.mrb[0].mxu0
    %v5715 = vadd.f32 %v5656, %v5714
    %v5716 = vpop.f32.mrb[0].mxu0
    %v5717 = vadd.f32 %v5658, %v5716
    %v5718 = vpop.f32.mrb[0].mxu0
    %v5719 = vadd.f32 %v5660, %v5718
    %5720 = vmatprep.mubr.bf16.mxu0 %v4848
    %5721 = vmatmul.mubr.bf16.gmra.mrb[0].mxu0 %v4839
    %v5722 = vpop.f32.mrb[0].mxu0
    %v5723 = vpop.f32.mrb[0].mxu0
    %v5724 = vpop.f32.mrb[0].mxu0
    %v5725 = vadd.f32 %v5666, %v5724
    %v5726 = vpop.f32.mrb[0].mxu0
    %v5727 = vadd.f32 %v5668, %v5726
    %5728 = vmatprep.mubr.bf16.mxu0 %v4847
    %5729 = vmatmul.mubr.bf16.gmra.mrb[0].mxu0 %v4838
    %v5730 = vpop.f32.mrb[0].mxu0
    %v5731 = vadd.f32 %v5672, %v5730
    %v5732 = vpop.f32.mrb[0].mxu0
    %v5733 = vadd.f32 %v5674, %v5732
    %v5734 = vpop.f32.mrb[0].mxu0
    %v5735 = vpop.f32.mrb[0].mxu0
    %5736 = vdwg.mxu0
    %v5737 = vld [vmem:[#allocation2 + $0x20] sm:$0xfe]
    %v5738 = vld [vmem:[#allocation2 + $0x28] sm:$0xfe]
    %v5739 = vld [vmem:[#allocation2 + $0x30] sm:$0xfe]
    %v5740 = vld [vmem:[#allocation2 + $0x38] sm:$0xfe]
    %v5741 = vld [vmem:[#allocation2 + $0x40] sm:$0xff]
    %v5742 = vld [vmem:[#allocation2 + $0x48] sm:$0xff]
    %v5743 = vld [vmem:[#allocation2 + $0x50] sm:$0xff]
    %v5744 = vld [vmem:[#allocation2 + $0x58] sm:$0xff]
    %v5745 = vld [vmem:[#allocation2 + $0x60] sm:$0xff]
    %v5746 = vld [vmem:[#allocation2 + $0x68] sm:$0xff]
    %v5747 = vld [vmem:[#allocation2 + $0x70] sm:$0xff]
    %v5748 = vld [vmem:[#allocation2 + $0x78] sm:$0xff]
    %v5749 = vld [vmem:[#allocation2 + $0x80] sm:$0xff]
    %v5750 = vld [vmem:[#allocation2 + $0x88] sm:$0xff]
    %v5751 = vld [vmem:[#allocation2 + $0x90] sm:$0xff]
    %v5752 = vld [vmem:[#allocation2 + $0x98] sm:$0xff]
    %v5753 = vld [vmem:[#allocation2 + $0xa0] sm:$0xff]
    %v5754 = vld [vmem:[#allocation2 + $0xa8] sm:$0xff]
    %v5755 = vld [vmem:[#allocation2 + $0xb0] sm:$0xff]
    %v5756 = vld [vmem:[#allocation2 + $0xb8] sm:$0xff]
    %v5757 = vld [vmem:[#allocation2 + $0xc0] sm:$0x1]
    %v5758 = vld [vmem:[#allocation2 + $0xc8] sm:$0x1]
    %v5759 = vld [vmem:[#allocation2 + $0xd0] sm:$0x1]
    %v5760 = vld [vmem:[#allocation2 + $0xd8] sm:$0x1]
    %v5761 = vpack.c.bf16 %v5741, %v5737
    %v5762 = vpack.c.bf16 %v5742, %v5738
    %v5763 = vpack.c.bf16 %v5743, %v5739
    %v5764 = vpack.c.bf16 %v5744, %v5740
    %v5765 = vpack.c.bf16 %v5749, %v5745
    %v5766 = vpack.c.bf16 %v5750, %v5746
    %v5767 = vpack.c.bf16 %v5751, %v5747
    %v5768 = vpack.c.bf16 %v5752, %v5748
    %v5769 = vpack.c.bf16 %v5757, %v5753
    %v5770 = vpack.c.bf16 %v5758, %v5754
    %v5771 = vpack.c.bf16 %v5759, %v5755
    %v5772 = vpack.c.bf16 %v5760, %v5756
    %s5773 = scalar_lea.vmem [#allocation8], 2048
    %v5774 = vld [vmem:[%s5773] sm:$0xff]
    %v5775 = vld [vmem:[%s5773 + $0x8] sm:$0xff]
    %v5776 = vld [vmem:[%s5773 + $0x10] sm:$0xff]
    %v5777 = vld [vmem:[%s5773 + $0x18] sm:$0xff]
    %v5778 = vld [vmem:[%s5773 + $0x20] sm:$0xff]
    %v5779 = vld [vmem:[%s5773 + $0x28] sm:$0xff]
    %v5780 = vld [vmem:[%s5773 + $0x30] sm:$0xff]
    %v5781 = vld [vmem:[%s5773 + $0x38] sm:$0xff]
    %v5782 = vld [vmem:[%s5773 + $0x40] sm:$0xff]
    %v5783 = vld [vmem:[%s5773 + $0x48] sm:$0xff]
    %v5784 = vld [vmem:[%s5773 + $0x50] sm:$0xff]
    %v5785 = vld [vmem:[%s5773 + $0x58] sm:$0xff]
    %v5786 = vld [vmem:[%s5773 + $0x60] sm:$0xff]
    %v5787 = vld [vmem:[%s5773 + $0x68] sm:$0xff]
    %v5788 = vld [vmem:[%s5773 + $0x70] sm:$0xff]
    %v5789 = vld [vmem:[%s5773 + $0x78] sm:$0xff]
    %v5790 = vld [vmem:[%s5773 + $0x80] sm:$0xff]
    %v5791 = vld [vmem:[%s5773 + $0x88] sm:$0xff]
    %v5792 = vld [vmem:[%s5773 + $0x90] sm:$0xff]
    %v5793 = vld [vmem:[%s5773 + $0x98] sm:$0xff]
    %v5794 = vld [vmem:[%s5773 + $0xa0] sm:$0xff]
    %v5795 = vld [vmem:[%s5773 + $0xa8] sm:$0xff]
    %v5796 = vld [vmem:[%s5773 + $0xb0] sm:$0xff]
    %v5797 = vld [vmem:[%s5773 + $0xb8] sm:$0xff]
    %v5798 = vld [vmem:[%s5773 + $0xc0] sm:$0xff]
    %v5799 = vld [vmem:[%s5773 + $0xc8] sm:$0xff]
    %v5800 = vld [vmem:[%s5773 + $0xd0] sm:$0xff]
    %v5801 = vld [vmem:[%s5773 + $0xd8] sm:$0xff]
    %v5802 = vld [vmem:[%s5773 + $0xe0] sm:$0xff]
    %v5803 = vld [vmem:[%s5773 + $0xe8] sm:$0xff]
    %v5804 = vld [vmem:[%s5773 + $0xf0] sm:$0xff]
    %v5805 = vld [vmem:[%s5773 + $0xf8] sm:$0xff]
    %v5806 = vld [vmem:[%s5773 + $0x100] sm:$0xff]
    %v5807 = vld [vmem:[%s5773 + $0x108] sm:$0xff]
    %v5808 = vld [vmem:[%s5773 + $0x110] sm:$0xff]
    %v5809 = vld [vmem:[%s5773 + $0x118] sm:$0xff]
    %v5810 = vld [vmem:[%s5773 + $0x120] sm:$0xff]
    %v5811 = vld [vmem:[%s5773 + $0x128] sm:$0xff]
    %v5812 = vld [vmem:[%s5773 + $0x130] sm:$0xff]
    %v5813 = vld [vmem:[%s5773 + $0x138] sm:$0xff]
    %v5814 = vld [vmem:[%s5773 + $0x140] sm:$0xff]
    %v5815 = vld [vmem:[%s5773 + $0x148] sm:$0xff]
    %v5816 = vld [vmem:[%s5773 + $0x150] sm:$0xff]
    %v5817 = vld [vmem:[%s5773 + $0x158] sm:$0xff]
    %v5818 = vld [vmem:[%s5773 + $0x160] sm:$0xff]
    %v5819 = vld [vmem:[%s5773 + $0x168] sm:$0xff]
    %v5820 = vld [vmem:[%s5773 + $0x170] sm:$0xff]
    %v5821 = vld [vmem:[%s5773 + $0x178] sm:$0xff]
    %v5822 = vld [vmem:[%s5773 + $0x180] sm:$0xff]
    %v5823 = vld [vmem:[%s5773 + $0x188] sm:$0xff]
    %v5824 = vld [vmem:[%s5773 + $0x190] sm:$0xff]
    %v5825 = vld [vmem:[%s5773 + $0x198] sm:$0xff]
    %v5826 = vld [vmem:[%s5773 + $0x1a0] sm:$0xff]
    %v5827 = vld [vmem:[%s5773 + $0x1a8] sm:$0xff]
    %v5828 = vld [vmem:[%s5773 + $0x1b0] sm:$0xff]
    %v5829 = vld [vmem:[%s5773 + $0x1b8] sm:$0xff]
    %v5830 = vld [vmem:[%s5773 + $0x1c0] sm:$0xff]
    %v5831 = vld [vmem:[%s5773 + $0x1c8] sm:$0xff]
    %v5832 = vld [vmem:[%s5773 + $0x1d0] sm:$0xff]
    %v5833 = vld [vmem:[%s5773 + $0x1d8] sm:$0xff]
    %v5834 = vld [vmem:[%s5773 + $0x1e0] sm:$0xff]
    %v5835 = vld [vmem:[%s5773 + $0x1e8] sm:$0xff]
    %v5836 = vld [vmem:[%s5773 + $0x1f0] sm:$0xff]
    %v5837 = vld [vmem:[%s5773 + $0x1f8] sm:$0xff]
    %v5838 = vld [vmem:[%s5773 + $0x200] sm:$0xff]
    %v5839 = vld [vmem:[%s5773 + $0x208] sm:$0xff]
    %v5840 = vld [vmem:[%s5773 + $0x210] sm:$0xff]
    %v5841 = vld [vmem:[%s5773 + $0x218] sm:$0xff]
    %v5842 = vld [vmem:[%s5773 + $0x220] sm:$0xff]
    %v5843 = vld [vmem:[%s5773 + $0x228] sm:$0xff]
    %v5844 = vld [vmem:[%s5773 + $0x230] sm:$0xff]
    %v5845 = vld [vmem:[%s5773 + $0x238] sm:$0xff]
    %v5846 = vld [vmem:[%s5773 + $0x240] sm:$0xff]
    %v5847 = vld [vmem:[%s5773 + $0x248] sm:$0xff]
    %v5848 = vld [vmem:[%s5773 + $0x250] sm:$0xff]
    %v5849 = vld [vmem:[%s5773 + $0x258] sm:$0xff]
    %v5850 = vld [vmem:[%s5773 + $0x260] sm:$0xff]
    %v5851 = vld [vmem:[%s5773 + $0x268] sm:$0xff]
    %v5852 = vld [vmem:[%s5773 + $0x270] sm:$0xff]
    %v5853 = vld [vmem:[%s5773 + $0x278] sm:$0xff]
    %v5854 = vld [vmem:[%s5773 + $0x280] sm:$0xff]
    %v5855 = vld [vmem:[%s5773 + $0x288] sm:$0xff]
    %v5856 = vld [vmem:[%s5773 + $0x290] sm:$0xff]
    %v5857 = vld [vmem:[%s5773 + $0x298] sm:$0xff]
    %v5858 = vld [vmem:[%s5773 + $0x2a0] sm:$0xff]
    %v5859 = vld [vmem:[%s5773 + $0x2a8] sm:$0xff]
    %v5860 = vld [vmem:[%s5773 + $0x2b0] sm:$0xff]
    %v5861 = vld [vmem:[%s5773 + $0x2b8] sm:$0xff]
    %v5862 = vld [vmem:[%s5773 + $0x2c0] sm:$0xff]
    %v5863 = vld [vmem:[%s5773 + $0x2c8] sm:$0xff]
    %v5864 = vld [vmem:[%s5773 + $0x2d0] sm:$0xff]
    %v5865 = vld [vmem:[%s5773 + $0x2d8] sm:$0xff]
    %v5866 = vld [vmem:[%s5773 + $0x2e0] sm:$0xff]
    %v5867 = vld [vmem:[%s5773 + $0x2e8] sm:$0xff]
    %v5868 = vld [vmem:[%s5773 + $0x2f0] sm:$0xff]
    %v5869 = vld [vmem:[%s5773 + $0x2f8] sm:$0xff]
    %v5870 = vld [vmem:[%s5773 + $0x300] sm:$0xff]
    %v5871 = vld [vmem:[%s5773 + $0x308] sm:$0xff]
    %v5872 = vld [vmem:[%s5773 + $0x310] sm:$0xff]
    %v5873 = vld [vmem:[%s5773 + $0x318] sm:$0xff]
    %v5874 = vld [vmem:[%s5773 + $0x320] sm:$0xff]
    %v5875 = vld [vmem:[%s5773 + $0x328] sm:$0xff]
    %v5876 = vld [vmem:[%s5773 + $0x330] sm:$0xff]
    %v5877 = vld [vmem:[%s5773 + $0x338] sm:$0xff]
    %v5878 = vld [vmem:[%s5773 + $0x340] sm:$0xff]
    %v5879 = vld [vmem:[%s5773 + $0x348] sm:$0xff]
    %v5880 = vld [vmem:[%s5773 + $0x350] sm:$0xff]
    %v5881 = vld [vmem:[%s5773 + $0x358] sm:$0xff]
    %v5882 = vld [vmem:[%s5773 + $0x360] sm:$0xff]
    %v5883 = vld [vmem:[%s5773 + $0x368] sm:$0xff]
    %v5884 = vld [vmem:[%s5773 + $0x370] sm:$0xff]
    %v5885 = vld [vmem:[%s5773 + $0x378] sm:$0xff]
    %v5886 = vld [vmem:[%s5773 + $0x380] sm:$0xff]
    %v5887 = vld [vmem:[%s5773 + $0x388] sm:$0xff]
    %v5888 = vld [vmem:[%s5773 + $0x390] sm:$0xff]
    %v5889 = vld [vmem:[%s5773 + $0x398] sm:$0xff]
    %v5890 = vld [vmem:[%s5773 + $0x3a0] sm:$0xff]
    %v5891 = vld [vmem:[%s5773 + $0x3a8] sm:$0xff]
    %v5892 = vld [vmem:[%s5773 + $0x3b0] sm:$0xff]
    %v5893 = vld [vmem:[%s5773 + $0x3b8] sm:$0xff]
    %v5894 = vld [vmem:[%s5773 + $0x3c0] sm:$0xff]
    %v5895 = vld [vmem:[%s5773 + $0x3c8] sm:$0xff]
    %v5896 = vld [vmem:[%s5773 + $0x3d0] sm:$0xff]
    %v5897 = vld [vmem:[%s5773 + $0x3d8] sm:$0xff]
    %v5898 = vld [vmem:[%s5773 + $0x3e0] sm:$0xff]
    %v5899 = vld [vmem:[%s5773 + $0x3e8] sm:$0xff]
    %v5900 = vld [vmem:[%s5773 + $0x3f0] sm:$0xff]
    %v5901 = vld [vmem:[%s5773 + $0x3f8] sm:$0xff]
    %v5903 = vshrl.u32 %v5761, 16
    %v5905 = vshll.u32 %v5761, 16
    %v5907 = vrot.slane %v5905, 1
    %v5908 = vor.u32 %v5903, %v5907
    %v5910 = vshll.u32 %v5765, 16
    %v5912 = vrot.slane %v5910, 1
    %v5913 = vsel %vm2493, %v5908, %v5912
    %v5915 = vshrl.u32 %v5762, 16
    %v5917 = vshll.u32 %v5762, 16
    %v5919 = vrot.slane %v5917, 1
    %v5920 = vor.u32 %v5915, %v5919
    %v5922 = vshll.u32 %v5766, 16
    %v5924 = vrot.slane %v5922, 1
    %v5925 = vsel %vm2493, %v5920, %v5924
    %v5927 = vshrl.u32 %v5763, 16
    %v5929 = vshll.u32 %v5763, 16
    %v5931 = vrot.slane %v5929, 1
    %v5932 = vor.u32 %v5927, %v5931
    %v5934 = vshll.u32 %v5767, 16
    %v5936 = vrot.slane %v5934, 1
    %v5937 = vsel %vm2493, %v5932, %v5936
    %v5939 = vshrl.u32 %v5764, 16
    %v5941 = vshll.u32 %v5764, 16
    %v5943 = vrot.slane %v5941, 1
    %v5944 = vor.u32 %v5939, %v5943
    %v5946 = vshll.u32 %v5768, 16
    %v5948 = vrot.slane %v5946, 1
    %v5949 = vsel %vm2493, %v5944, %v5948
    %v5950 = vshrl.u32 %v5765, 16
    %v5952 = vor.u32 %v5950, %v5912
    %v5954 = vshll.u32 %v5769, 16
    %v5956 = vrot.slane %v5954, 1
    %v5957 = vsel %vm2493, %v5952, %v5956
    %v5958 = vshrl.u32 %v5766, 16
    %v5960 = vor.u32 %v5958, %v5924
    %v5962 = vshll.u32 %v5770, 16
    %v5964 = vrot.slane %v5962, 1
    %v5965 = vsel %vm2493, %v5960, %v5964
    %v5966 = vshrl.u32 %v5767, 16
    %v5968 = vor.u32 %v5966, %v5936
    %v5970 = vshll.u32 %v5771, 16
    %v5972 = vrot.slane %v5970, 1
    %v5973 = vsel %vm2493, %v5968, %v5972
    %v5974 = vshrl.u32 %v5768, 16
    %v5976 = vor.u32 %v5974, %v5948
    %v5978 = vshll.u32 %v5772, 16
    %v5980 = vrot.slane %v5978, 1
    %v5981 = vsel %vm2493, %v5976, %v5980
    %v5982 = vshrl.u32 %v5769, 16
    %v5984 = vor.u32 %v5982, %v5956
    %v5985 = vshrl.u32 %v5770, 16
    %v5987 = vor.u32 %v5985, %v5964
    %v5988 = vshrl.u32 %v5771, 16
    %v5990 = vor.u32 %v5988, %v5972
    %v5991 = vshrl.u32 %v5772, 16
    %v5993 = vor.u32 %v5991, %v5980
    %v6134 = vunpack.c.l.b16 %v5774
    %v6135 = vunpack.c.h.b16 %v5774
    %v6136 = vunpack.c.l.b16 %v5775
    %v6137 = vunpack.c.h.b16 %v5775
    %v6138 = vunpack.c.l.b16 %v5776
    %v6139 = vunpack.c.h.b16 %v5776
    %v6140 = vunpack.c.l.b16 %v5777
    %v6141 = vunpack.c.h.b16 %v5777
    %v6142 = vunpack.c.l.b16 %v5778
    %v6143 = vunpack.c.h.b16 %v5778
    %v6144 = vunpack.c.l.b16 %v5779
    %v6145 = vunpack.c.h.b16 %v5779
    %v6146 = vunpack.c.l.b16 %v5780
    %v6147 = vunpack.c.h.b16 %v5780
    %v6148 = vunpack.c.l.b16 %v5781
    %v6149 = vunpack.c.h.b16 %v5781
    %v6150 = vunpack.c.l.b16 %v5782
    %v6151 = vunpack.c.h.b16 %v5782
    %v6152 = vunpack.c.l.b16 %v5783
    %v6153 = vunpack.c.h.b16 %v5783
    %v6154 = vunpack.c.l.b16 %v5784
    %v6155 = vunpack.c.h.b16 %v5784
    %v6156 = vunpack.c.l.b16 %v5785
    %v6157 = vunpack.c.h.b16 %v5785
    %v6158 = vunpack.c.l.b16 %v5786
    %v6159 = vunpack.c.h.b16 %v5786
    %v6160 = vunpack.c.l.b16 %v5787
    %v6161 = vunpack.c.h.b16 %v5787
    %v6162 = vunpack.c.l.b16 %v5788
    %v6163 = vunpack.c.h.b16 %v5788
    %v6164 = vunpack.c.l.b16 %v5789
    %v6165 = vunpack.c.h.b16 %v5789
    %v6166 = vunpack.c.l.b16 %v5790
    %v6167 = vunpack.c.h.b16 %v5790
    %v6168 = vunpack.c.l.b16 %v5791
    %v6169 = vunpack.c.h.b16 %v5791
    %v6170 = vunpack.c.l.b16 %v5792
    %v6171 = vunpack.c.h.b16 %v5792
    %v6172 = vunpack.c.l.b16 %v5793
    %v6173 = vunpack.c.h.b16 %v5793
    %v6174 = vunpack.c.l.b16 %v5794
    %v6175 = vunpack.c.h.b16 %v5794
    %v6176 = vunpack.c.l.b16 %v5795
    %v6177 = vunpack.c.h.b16 %v5795
    %v6178 = vunpack.c.l.b16 %v5796
    %v6179 = vunpack.c.h.b16 %v5796
    %v6180 = vunpack.c.l.b16 %v5797
    %v6181 = vunpack.c.h.b16 %v5797
    %v6182 = vunpack.c.l.b16 %v5798
    %v6183 = vunpack.c.h.b16 %v5798
    %v6184 = vunpack.c.l.b16 %v5799
    %v6185 = vunpack.c.h.b16 %v5799
    %v6186 = vunpack.c.l.b16 %v5800
    %v6187 = vunpack.c.h.b16 %v5800
    %v6188 = vunpack.c.l.b16 %v5801
    %v6189 = vunpack.c.h.b16 %v5801
    %v6190 = vunpack.c.l.b16 %v5802
    %v6191 = vunpack.c.h.b16 %v5802
    %v6192 = vunpack.c.l.b16 %v5803
    %v6193 = vunpack.c.h.b16 %v5803
    %v6194 = vunpack.c.l.b16 %v5804
    %v6195 = vunpack.c.h.b16 %v5804
    %v6196 = vunpack.c.l.b16 %v5805
    %v6197 = vunpack.c.h.b16 %v5805
    %v6198 = vunpack.c.l.b16 %v5806
    %v6199 = vunpack.c.h.b16 %v5806
    %v6200 = vunpack.c.l.b16 %v5807
    %v6201 = vunpack.c.h.b16 %v5807
    %v6202 = vunpack.c.l.b16 %v5808
    %v6203 = vunpack.c.h.b16 %v5808
    %v6204 = vunpack.c.l.b16 %v5809
    %v6205 = vunpack.c.h.b16 %v5809
    %v6206 = vunpack.c.l.b16 %v5810
    %v6207 = vunpack.c.h.b16 %v5810
    %v6208 = vunpack.c.l.b16 %v5811
    %v6209 = vunpack.c.h.b16 %v5811
    %v6210 = vunpack.c.l.b16 %v5812
    %v6211 = vunpack.c.h.b16 %v5812
    %v6212 = vunpack.c.l.b16 %v5813
    %v6213 = vunpack.c.h.b16 %v5813
    %v6214 = vunpack.c.l.b16 %v5814
    %v6215 = vunpack.c.h.b16 %v5814
    %v6216 = vunpack.c.l.b16 %v5815
    %v6217 = vunpack.c.h.b16 %v5815
    %v6218 = vunpack.c.l.b16 %v5816
    %v6219 = vunpack.c.h.b16 %v5816
    %v6220 = vunpack.c.l.b16 %v5817
    %v6221 = vunpack.c.h.b16 %v5817
    %v6222 = vunpack.c.l.b16 %v5818
    %v6223 = vunpack.c.h.b16 %v5818
    %v6224 = vunpack.c.l.b16 %v5819
    %v6225 = vunpack.c.h.b16 %v5819
    %v6226 = vunpack.c.l.b16 %v5820
    %v6227 = vunpack.c.h.b16 %v5820
    %v6228 = vunpack.c.l.b16 %v5821
    %v6229 = vunpack.c.h.b16 %v5821
    %v6230 = vunpack.c.l.b16 %v5822
    %v6231 = vunpack.c.h.b16 %v5822
    %v6232 = vunpack.c.l.b16 %v5823
    %v6233 = vunpack.c.h.b16 %v5823
    %v6234 = vunpack.c.l.b16 %v5824
    %v6235 = vunpack.c.h.b16 %v5824
    %v6236 = vunpack.c.l.b16 %v5825
    %v6237 = vunpack.c.h.b16 %v5825
    %v6238 = vunpack.c.l.b16 %v5826
    %v6239 = vunpack.c.h.b16 %v5826
    %v6240 = vunpack.c.l.b16 %v5827
    %v6241 = vunpack.c.h.b16 %v5827
    %v6242 = vunpack.c.l.b16 %v5828
    %v6243 = vunpack.c.h.b16 %v5828
    %v6244 = vunpack.c.l.b16 %v5829
    %v6245 = vunpack.c.h.b16 %v5829
    %v6246 = vunpack.c.l.b16 %v5830
    %v6247 = vunpack.c.h.b16 %v5830
    %v6248 = vunpack.c.l.b16 %v5831
    %v6249 = vunpack.c.h.b16 %v5831
    %v6250 = vunpack.c.l.b16 %v5832
    %v6251 = vunpack.c.h.b16 %v5832
    %v6252 = vunpack.c.l.b16 %v5833
    %v6253 = vunpack.c.h.b16 %v5833
    %v6254 = vunpack.c.l.b16 %v5834
    %v6255 = vunpack.c.h.b16 %v5834
    %v6256 = vunpack.c.l.b16 %v5835
    %v6257 = vunpack.c.h.b16 %v5835
    %v6258 = vunpack.c.l.b16 %v5836
    %v6259 = vunpack.c.h.b16 %v5836
    %v6260 = vunpack.c.l.b16 %v5837
    %v6261 = vunpack.c.h.b16 %v5837
    %v6262 = vunpack.c.l.b16 %v5838
    %v6263 = vunpack.c.h.b16 %v5838
    %v6264 = vunpack.c.l.b16 %v5839
    %v6265 = vunpack.c.h.b16 %v5839
    %v6266 = vunpack.c.l.b16 %v5840
    %v6267 = vunpack.c.h.b16 %v5840
    %v6268 = vunpack.c.l.b16 %v5841
    %v6269 = vunpack.c.h.b16 %v5841
    %v6270 = vunpack.c.l.b16 %v5842
    %v6271 = vunpack.c.h.b16 %v5842
    %v6272 = vunpack.c.l.b16 %v5843
    %v6273 = vunpack.c.h.b16 %v5843
    %v6274 = vunpack.c.l.b16 %v5844
    %v6275 = vunpack.c.h.b16 %v5844
    %v6276 = vunpack.c.l.b16 %v5845
    %v6277 = vunpack.c.h.b16 %v5845
    %v6278 = vunpack.c.l.b16 %v5846
    %v6279 = vunpack.c.h.b16 %v5846
    %v6280 = vunpack.c.l.b16 %v5847
    %v6281 = vunpack.c.h.b16 %v5847
    %v6282 = vunpack.c.l.b16 %v5848
    %v6283 = vunpack.c.h.b16 %v5848
    %v6284 = vunpack.c.l.b16 %v5849
    %v6285 = vunpack.c.h.b16 %v5849
    %v6286 = vunpack.c.l.b16 %v5850
    %v6287 = vunpack.c.h.b16 %v5850
    %v6288 = vunpack.c.l.b16 %v5851
    %v6289 = vunpack.c.h.b16 %v5851
    %v6290 = vunpack.c.l.b16 %v5852
    %v6291 = vunpack.c.h.b16 %v5852
    %v6292 = vunpack.c.l.b16 %v5853
    %v6293 = vunpack.c.h.b16 %v5853
    %v6294 = vunpack.c.l.b16 %v5854
    %v6295 = vunpack.c.h.b16 %v5854
    %v6296 = vunpack.c.l.b16 %v5855
    %v6297 = vunpack.c.h.b16 %v5855
    %v6298 = vunpack.c.l.b16 %v5856
    %v6299 = vunpack.c.h.b16 %v5856
    %v6300 = vunpack.c.l.b16 %v5857
    %v6301 = vunpack.c.h.b16 %v5857
    %v6302 = vunpack.c.l.b16 %v5858
    %v6303 = vunpack.c.h.b16 %v5858
    %v6304 = vunpack.c.l.b16 %v5859
    %v6305 = vunpack.c.h.b16 %v5859
    %v6306 = vunpack.c.l.b16 %v5860
    %v6307 = vunpack.c.h.b16 %v5860
    %v6308 = vunpack.c.l.b16 %v5861
    %v6309 = vunpack.c.h.b16 %v5861
    %v6310 = vunpack.c.l.b16 %v5862
    %v6311 = vunpack.c.h.b16 %v5862
    %v6312 = vunpack.c.l.b16 %v5863
    %v6313 = vunpack.c.h.b16 %v5863
    %v6314 = vunpack.c.l.b16 %v5864
    %v6315 = vunpack.c.h.b16 %v5864
    %v6316 = vunpack.c.l.b16 %v5865
    %v6317 = vunpack.c.h.b16 %v5865
    %v6318 = vunpack.c.l.b16 %v5866
    %v6319 = vunpack.c.h.b16 %v5866
    %v6320 = vunpack.c.l.b16 %v5867
    %v6321 = vunpack.c.h.b16 %v5867
    %v6322 = vunpack.c.l.b16 %v5868
    %v6323 = vunpack.c.h.b16 %v5868
    %v6324 = vunpack.c.l.b16 %v5869
    %v6325 = vunpack.c.h.b16 %v5869
    %v6326 = vunpack.c.l.b16 %v5870
    %v6327 = vunpack.c.h.b16 %v5870
    %v6328 = vunpack.c.l.b16 %v5871
    %v6329 = vunpack.c.h.b16 %v5871
    %v6330 = vunpack.c.l.b16 %v5872
    %v6331 = vunpack.c.h.b16 %v5872
    %v6332 = vunpack.c.l.b16 %v5873
    %v6333 = vunpack.c.h.b16 %v5873
    %v6334 = vunpack.c.l.b16 %v5874
    %v6335 = vunpack.c.h.b16 %v5874
    %v6336 = vunpack.c.l.b16 %v5875
    %v6337 = vunpack.c.h.b16 %v5875
    %v6338 = vunpack.c.l.b16 %v5876
    %v6339 = vunpack.c.h.b16 %v5876
    %v6340 = vunpack.c.l.b16 %v5877
    %v6341 = vunpack.c.h.b16 %v5877
    %v6342 = vunpack.c.l.b16 %v5878
    %v6343 = vunpack.c.h.b16 %v5878
    %v6344 = vunpack.c.l.b16 %v5879
    %v6345 = vunpack.c.h.b16 %v5879
    %v6346 = vunpack.c.l.b16 %v5880
    %v6347 = vunpack.c.h.b16 %v5880
    %v6348 = vunpack.c.l.b16 %v5881
    %v6349 = vunpack.c.h.b16 %v5881
    %v6350 = vunpack.c.l.b16 %v5882
    %v6351 = vunpack.c.h.b16 %v5882
    %v6352 = vunpack.c.l.b16 %v5883
    %v6353 = vunpack.c.h.b16 %v5883
    %v6354 = vunpack.c.l.b16 %v5884
    %v6355 = vunpack.c.h.b16 %v5884
    %v6356 = vunpack.c.l.b16 %v5885
    %v6357 = vunpack.c.h.b16 %v5885
    %v6358 = vunpack.c.l.b16 %v5886
    %v6359 = vunpack.c.h.b16 %v5886
    %v6360 = vunpack.c.l.b16 %v5887
    %v6361 = vunpack.c.h.b16 %v5887
    %v6362 = vunpack.c.l.b16 %v5888
    %v6363 = vunpack.c.h.b16 %v5888
    %v6364 = vunpack.c.l.b16 %v5889
    %v6365 = vunpack.c.h.b16 %v5889
    %v6366 = vunpack.c.l.b16 %v5890
    %v6367 = vunpack.c.h.b16 %v5890
    %v6368 = vunpack.c.l.b16 %v5891
    %v6369 = vunpack.c.h.b16 %v5891
    %v6370 = vunpack.c.l.b16 %v5892
    %v6371 = vunpack.c.h.b16 %v5892
    %v6372 = vunpack.c.l.b16 %v5893
    %v6373 = vunpack.c.h.b16 %v5893
    %v6374 = vunpack.c.l.b16 %v5894
    %v6375 = vunpack.c.h.b16 %v5894
    %v6376 = vunpack.c.l.b16 %v5895
    %v6377 = vunpack.c.h.b16 %v5895
    %v6378 = vunpack.c.l.b16 %v5896
    %v6379 = vunpack.c.h.b16 %v5896
    %v6380 = vunpack.c.l.b16 %v5897
    %v6381 = vunpack.c.h.b16 %v5897
    %v6382 = vunpack.c.l.b16 %v5898
    %v6383 = vunpack.c.h.b16 %v5898
    %v6384 = vunpack.c.l.b16 %v5899
    %v6385 = vunpack.c.h.b16 %v5899
    %v6386 = vunpack.c.l.b16 %v5900
    %v6387 = vunpack.c.h.b16 %v5900
    %v6388 = vunpack.c.l.b16 %v5901
    %v6389 = vunpack.c.h.b16 %v5901
    %v6390 = vpack.c.b16 %v6138, %v6134
    %v6391 = vpack.c.b16 %v6139, %v6135
    %v6392 = vpack.c.b16 %v6140, %v6136
    %v6393 = vpack.c.b16 %v6141, %v6137
    %v6394 = vpack.c.b16 %v6146, %v6142
    %v6395 = vpack.c.b16 %v6147, %v6143
    %v6396 = vpack.c.b16 %v6148, %v6144
    %v6397 = vpack.c.b16 %v6149, %v6145
    %v6398 = vpack.c.b16 %v6154, %v6150
    %v6399 = vpack.c.b16 %v6155, %v6151
    %v6400 = vpack.c.b16 %v6156, %v6152
    %v6401 = vpack.c.b16 %v6157, %v6153
    %v6402 = vpack.c.b16 %v6162, %v6158
    %v6403 = vpack.c.b16 %v6163, %v6159
    %v6404 = vpack.c.b16 %v6164, %v6160
    %v6405 = vpack.c.b16 %v6165, %v6161
    %v6406 = vpack.c.b16 %v6170, %v6166
    %v6407 = vpack.c.b16 %v6171, %v6167
    %v6408 = vpack.c.b16 %v6172, %v6168
    %v6409 = vpack.c.b16 %v6173, %v6169
    %v6410 = vpack.c.b16 %v6178, %v6174
    %v6411 = vpack.c.b16 %v6179, %v6175
    %v6412 = vpack.c.b16 %v6180, %v6176
    %v6413 = vpack.c.b16 %v6181, %v6177
    %v6414 = vpack.c.b16 %v6186, %v6182
    %v6415 = vpack.c.b16 %v6187, %v6183
    %v6416 = vpack.c.b16 %v6188, %v6184
    %v6417 = vpack.c.b16 %v6189, %v6185
    %v6418 = vpack.c.b16 %v6194, %v6190
    %v6419 = vpack.c.b16 %v6195, %v6191
    %v6420 = vpack.c.b16 %v6196, %v6192
    %v6421 = vpack.c.b16 %v6197, %v6193
    %v6422 = vpack.c.b16 %v6202, %v6198
    %v6423 = vpack.c.b16 %v6203, %v6199
    %v6424 = vpack.c.b16 %v6204, %v6200
    %v6425 = vpack.c.b16 %v6205, %v6201
    %v6426 = vpack.c.b16 %v6210, %v6206
    %v6427 = vpack.c.b16 %v6211, %v6207
    %v6428 = vpack.c.b16 %v6212, %v6208
    %v6429 = vpack.c.b16 %v6213, %v6209
    %v6430 = vpack.c.b16 %v6218, %v6214
    %v6431 = vpack.c.b16 %v6219, %v6215
    %v6432 = vpack.c.b16 %v6220, %v6216
    %v6433 = vpack.c.b16 %v6221, %v6217
    %v6434 = vpack.c.b16 %v6226, %v6222
    %v6435 = vpack.c.b16 %v6227, %v6223
    %v6436 = vpack.c.b16 %v6228, %v6224
    %v6437 = vpack.c.b16 %v6229, %v6225
    %v6438 = vpack.c.b16 %v6234, %v6230
    %v6439 = vpack.c.b16 %v6235, %v6231
    %v6440 = vpack.c.b16 %v6236, %v6232
    %v6441 = vpack.c.b16 %v6237, %v6233
    %v6442 = vpack.c.b16 %v6242, %v6238
    %v6443 = vpack.c.b16 %v6243, %v6239
    %v6444 = vpack.c.b16 %v6244, %v6240
    %v6445 = vpack.c.b16 %v6245, %v6241
    %v6446 = vpack.c.b16 %v6250, %v6246
    %v6447 = vpack.c.b16 %v6251, %v6247
    %v6448 = vpack.c.b16 %v6252, %v6248
    %v6449 = vpack.c.b16 %v6253, %v6249
    %v6450 = vpack.c.b16 %v6258, %v6254
    %v6451 = vpack.c.b16 %v6259, %v6255
    %v6452 = vpack.c.b16 %v6260, %v6256
    %v6453 = vpack.c.b16 %v6261, %v6257
    %v6454 = vpack.c.b16 %v6266, %v6262
    %v6455 = vpack.c.b16 %v6267, %v6263
    %v6456 = vpack.c.b16 %v6268, %v6264
    %v6457 = vpack.c.b16 %v6269, %v6265
    %v6458 = vpack.c.b16 %v6274, %v6270
    %v6459 = vpack.c.b16 %v6275, %v6271
    %v6460 = vpack.c.b16 %v6276, %v6272
    %v6461 = vpack.c.b16 %v6277, %v6273
    %v6462 = vpack.c.b16 %v6282, %v6278
    %v6463 = vpack.c.b16 %v6283, %v6279
    %v6464 = vpack.c.b16 %v6284, %v6280
    %v6465 = vpack.c.b16 %v6285, %v6281
    %v6466 = vpack.c.b16 %v6290, %v6286
    %v6467 = vpack.c.b16 %v6291, %v6287
    %v6468 = vpack.c.b16 %v6292, %v6288
    %v6469 = vpack.c.b16 %v6293, %v6289
    %v6470 = vpack.c.b16 %v6298, %v6294
    %v6471 = vpack.c.b16 %v6299, %v6295
    %v6472 = vpack.c.b16 %v6300, %v6296
    %v6473 = vpack.c.b16 %v6301, %v6297
    %v6474 = vpack.c.b16 %v6306, %v6302
    %v6475 = vpack.c.b16 %v6307, %v6303
    %v6476 = vpack.c.b16 %v6308, %v6304
    %v6477 = vpack.c.b16 %v6309, %v6305
    %v6478 = vpack.c.b16 %v6314, %v6310
    %v6479 = vpack.c.b16 %v6315, %v6311
    %v6480 = vpack.c.b16 %v6316, %v6312
    %v6481 = vpack.c.b16 %v6317, %v6313
    %v6482 = vpack.c.b16 %v6322, %v6318
    %v6483 = vpack.c.b16 %v6323, %v6319
    %v6484 = vpack.c.b16 %v6324, %v6320
    %v6485 = vpack.c.b16 %v6325, %v6321
    %v6486 = vpack.c.b16 %v6330, %v6326
    %v6487 = vpack.c.b16 %v6331, %v6327
    %v6488 = vpack.c.b16 %v6332, %v6328
    %v6489 = vpack.c.b16 %v6333, %v6329
    %v6490 = vpack.c.b16 %v6338, %v6334
    %v6491 = vpack.c.b16 %v6339, %v6335
    %v6492 = vpack.c.b16 %v6340, %v6336
    %v6493 = vpack.c.b16 %v6341, %v6337
    %v6494 = vpack.c.b16 %v6346, %v6342
    %v6495 = vpack.c.b16 %v6347, %v6343
    %v6496 = vpack.c.b16 %v6348, %v6344
    %v6497 = vpack.c.b16 %v6349, %v6345
    %v6498 = vpack.c.b16 %v6354, %v6350
    %v6499 = vpack.c.b16 %v6355, %v6351
    %v6500 = vpack.c.b16 %v6356, %v6352
    %v6501 = vpack.c.b16 %v6357, %v6353
    %v6502 = vpack.c.b16 %v6362, %v6358
    %v6503 = vpack.c.b16 %v6363, %v6359
    %v6504 = vpack.c.b16 %v6364, %v6360
    %v6505 = vpack.c.b16 %v6365, %v6361
    %v6506 = vpack.c.b16 %v6370, %v6366
    %v6507 = vpack.c.b16 %v6371, %v6367
    %v6508 = vpack.c.b16 %v6372, %v6368
    %v6509 = vpack.c.b16 %v6373, %v6369
    %v6510 = vpack.c.b16 %v6378, %v6374
    %v6511 = vpack.c.b16 %v6379, %v6375
    %v6512 = vpack.c.b16 %v6380, %v6376
    %v6513 = vpack.c.b16 %v6381, %v6377
    %v6514 = vpack.c.b16 %v6386, %v6382
    %v6515 = vpack.c.b16 %v6387, %v6383
    %v6516 = vpack.c.b16 %v6388, %v6384
    %v6517 = vpack.c.b16 %v6389, %v6385
    %6646 = vmatprep.subr.bf16.mxu0 %v6391
    %6647 = vmatpush1.bf16.msra.mxu0 %v6390
    %6648 = vmatprep.subr.bf16.mxu0 %v6395
    %6649 = vmatpush1.bf16.msra.mxu0 %v6394
    %6650 = vmatprep.subr.bf16.mxu0 %v6399
    %6651 = vmatpush1.bf16.msra.mxu0 %v6398
    %6652 = vmatprep.subr.bf16.mxu0 %v6403
    %6653 = vmatpush1.bf16.msra.mxu0 %v6402
    %6654 = vmatprep.subr.bf16.mxu0 %v6407
    %6655 = vmatpush1.bf16.msra.mxu0 %v6406
    %6656 = vmatprep.subr.bf16.mxu0 %v6411
    %6657 = vmatpush1.bf16.msra.mxu0 %v6410
    %6658 = vmatprep.subr.bf16.mxu0 %v6415
    %6659 = vmatpush1.bf16.msra.mxu0 %v6414
    %6660 = vmatprep.subr.bf16.mxu0 %v6419
    %6661 = vmatpush1.bf16.msra.mxu0 %v6418
    %6662 = vmatprep.subr.bf16.mxu0 %v6423
    %6663 = vmatpush1.bf16.msra.mxu0 %v6422
    %6664 = vmatprep.subr.bf16.mxu0 %v6427
    %6665 = vmatpush1.bf16.msra.mxu0 %v6426
    %6666 = vmatprep.subr.bf16.mxu0 %v6431
    %6667 = vmatpush1.bf16.msra.mxu0 %v6430
    %6668 = vmatprep.subr.bf16.mxu0 %v6435
    %6669 = vmatpush1.bf16.msra.mxu0 %v6434
    %6670 = vmatprep.subr.bf16.mxu0 %v6439
    %6671 = vmatpush1.bf16.msra.mxu0 %v6438
    %6672 = vmatprep.subr.bf16.mxu0 %v6443
    %6673 = vmatpush1.bf16.msra.mxu0 %v6442
    %6674 = vmatprep.subr.bf16.mxu0 %v6447
    %6675 = vmatpush1.bf16.msra.mxu0 %v6446
    %6676 = vmatprep.subr.bf16.mxu0 %v6451
    %6677 = vmatpush1.bf16.msra.mxu0 %v6450
    %6678 = vmatprep.mubr.bf16.mxu0 %v5925
    %6679 = vmatmul.mubr.bf16.gmra.mrb[0].mxu0 %v5913
    %v6680 = vpop.f32.mrb[0].mxu0
    %v6681 = vadd.f32 0.0, %v6680
    %v6682 = vpop.f32.mrb[0].mxu0
    %v6683 = vadd.f32 0.0, %v6682
    %v6684 = vpop.f32.mrb[0].mxu0
    %v6685 = vadd.f32 0.0, %v6684
    %v6686 = vpop.f32.mrb[0].mxu0
    %v6687 = vadd.f32 0.0, %v6686
    %6688 = vmatprep.mubr.bf16.mxu0 %v5965
    %6689 = vmatmul.mubr.bf16.gmra.mrb[0].mxu0 %v5957
    %v6690 = vpop.f32.mrb[0].mxu0
    %v6691 = vpop.f32.mrb[0].mxu0
    %v6692 = vpop.f32.mrb[0].mxu0
    %v6693 = vadd.f32 0.0, %v6692
    %v6694 = vpop.f32.mrb[0].mxu0
    %v6695 = vadd.f32 0.0, %v6694
    %6696 = vmatprep.mubr.bf16.mxu0 %v5987
    %6697 = vmatmul.mubr.bf16.gmra.mrb[0].mxu0 %v5984
    %v6698 = vpop.f32.mrb[0].mxu0
    %v6699 = vadd.f32 0.0, %v6698
    %v6700 = vpop.f32.mrb[0].mxu0
    %v6701 = vadd.f32 0.0, %v6700
    %v6702 = vpop.f32.mrb[0].mxu0
    %v6703 = vpop.f32.mrb[0].mxu0
    %6704 = vdwg.mxu0
    %6705 = vmatprep.subr.bf16.mxu0 %v6455
    %6706 = vmatpush1.bf16.msra.mxu0 %v6454
    %6707 = vmatprep.subr.bf16.mxu0 %v6459
    %6708 = vmatpush1.bf16.msra.mxu0 %v6458
    %6709 = vmatprep.subr.bf16.mxu0 %v6463
    %6710 = vmatpush1.bf16.msra.mxu0 %v6462
    %6711 = vmatprep.subr.bf16.mxu0 %v6467
    %6712 = vmatpush1.bf16.msra.mxu0 %v6466
    %6713 = vmatprep.subr.bf16.mxu0 %v6471
    %6714 = vmatpush1.bf16.msra.mxu0 %v6470
    %6715 = vmatprep.subr.bf16.mxu0 %v6475
    %6716 = vmatpush1.bf16.msra.mxu0 %v6474
    %6717 = vmatprep.subr.bf16.mxu0 %v6479
    %6718 = vmatpush1.bf16.msra.mxu0 %v6478
    %6719 = vmatprep.subr.bf16.mxu0 %v6483
    %6720 = vmatpush1.bf16.msra.mxu0 %v6482
    %6721 = vmatprep.subr.bf16.mxu0 %v6487
    %6722 = vmatpush1.bf16.msra.mxu0 %v6486
    %6723 = vmatprep.subr.bf16.mxu0 %v6491
    %6724 = vmatpush1.bf16.msra.mxu0 %v6490
    %6725 = vmatprep.subr.bf16.mxu0 %v6495
    %6726 = vmatpush1.bf16.msra.mxu0 %v6494
    %6727 = vmatprep.subr.bf16.mxu0 %v6499
    %6728 = vmatpush1.bf16.msra.mxu0 %v6498
    %6729 = vmatprep.subr.bf16.mxu0 %v6503
    %6730 = vmatpush1.bf16.msra.mxu0 %v6502
    %6731 = vmatprep.subr.bf16.mxu0 %v6507
    %6732 = vmatpush1.bf16.msra.mxu0 %v6506
    %6733 = vmatprep.subr.bf16.mxu0 %v6511
    %6734 = vmatpush1.bf16.msra.mxu0 %v6510
    %6735 = vmatprep.subr.bf16.mxu0 %v6515
    %6736 = vmatpush1.bf16.msra.mxu0 %v6514
    %6737 = vmatprep.mubr.bf16.mxu0 %v5949
    %6738 = vmatmul.mubr.bf16.gmra.mrb[0].mxu0 %v5937
    %v6739 = vpop.f32.mrb[0].mxu0
    %v6740 = vadd.f32 %v6681, %v6739
    %v6741 = vpop.f32.mrb[0].mxu0
    %v6742 = vadd.f32 %v6683, %v6741
    %v6743 = vpop.f32.mrb[0].mxu0
    %v6744 = vadd.f32 %v6685, %v6743
    %v6745 = vpop.f32.mrb[0].mxu0
    %v6746 = vadd.f32 %v6687, %v6745
    %6747 = vmatprep.mubr.bf16.mxu0 %v5981
    %6748 = vmatmul.mubr.bf16.gmra.mrb[0].mxu0 %v5973
    %v6749 = vpop.f32.mrb[0].mxu0
    %v6750 = vpop.f32.mrb[0].mxu0
    %v6751 = vpop.f32.mrb[0].mxu0
    %v6752 = vadd.f32 %v6693, %v6751
    %v6753 = vpop.f32.mrb[0].mxu0
    %v6754 = vadd.f32 %v6695, %v6753
    %6755 = vmatprep.mubr.bf16.mxu0 %v5993
    %6756 = vmatmul.mubr.bf16.gmra.mrb[0].mxu0 %v5990
    %v6757 = vpop.f32.mrb[0].mxu0
    %v6758 = vadd.f32 %v6699, %v6757
    %v6759 = vpop.f32.mrb[0].mxu0
    %v6760 = vadd.f32 %v6701, %v6759
    %v6761 = vpop.f32.mrb[0].mxu0
    %v6762 = vpop.f32.mrb[0].mxu0
    %6763 = vdwg.mxu0
    %6764 = vmatprep.subr.bf16.mxu0 %v6393
    %6765 = vmatpush1.bf16.msra.mxu0 %v6392
    %6766 = vmatprep.subr.bf16.mxu0 %v6397
    %6767 = vmatpush1.bf16.msra.mxu0 %v6396
    %6768 = vmatprep.subr.bf16.mxu0 %v6401
    %6769 = vmatpush1.bf16.msra.mxu0 %v6400
    %6770 = vmatprep.subr.bf16.mxu0 %v6405
    %6771 = vmatpush1.bf16.msra.mxu0 %v6404
    %6772 = vmatprep.subr.bf16.mxu0 %v6409
    %6773 = vmatpush1.bf16.msra.mxu0 %v6408
    %6774 = vmatprep.subr.bf16.mxu0 %v6413
    %6775 = vmatpush1.bf16.msra.mxu0 %v6412
    %6776 = vmatprep.subr.bf16.mxu0 %v6417
    %6777 = vmatpush1.bf16.msra.mxu0 %v6416
    %6778 = vmatprep.subr.bf16.mxu0 %v6421
    %6779 = vmatpush1.bf16.msra.mxu0 %v6420
    %6780 = vmatprep.subr.bf16.mxu0 %v6425
    %6781 = vmatpush1.bf16.msra.mxu0 %v6424
    %6782 = vmatprep.subr.bf16.mxu0 %v6429
    %6783 = vmatpush1.bf16.msra.mxu0 %v6428
    %6784 = vmatprep.subr.bf16.mxu0 %v6433
    %6785 = vmatpush1.bf16.msra.mxu0 %v6432
    %6786 = vmatprep.subr.bf16.mxu0 %v6437
    %6787 = vmatpush1.bf16.msra.mxu0 %v6436
    %6788 = vmatprep.subr.bf16.mxu0 %v6441
    %6789 = vmatpush1.bf16.msra.mxu0 %v6440
    %6790 = vmatprep.subr.bf16.mxu0 %v6445
    %6791 = vmatpush1.bf16.msra.mxu0 %v6444
    %6792 = vmatprep.subr.bf16.mxu0 %v6449
    %6793 = vmatpush1.bf16.msra.mxu0 %v6448
    %6794 = vmatprep.subr.bf16.mxu0 %v6453
    %6795 = vmatpush1.bf16.msra.mxu0 %v6452
    %6796 = vmatprep.mubr.bf16.mxu0 %v5925
    %6797 = vmatmul.mubr.bf16.gmra.mrb[0].mxu0 %v5913
    %v6798 = vpop.f32.mrb[0].mxu0
    %v6799 = vadd.f32 0.0, %v6798
    %v6800 = vpop.f32.mrb[0].mxu0
    %v6801 = vadd.f32 0.0, %v6800
    %v6802 = vpop.f32.mrb[0].mxu0
    %v6803 = vadd.f32 0.0, %v6802
    %v6804 = vpop.f32.mrb[0].mxu0
    %v6805 = vadd.f32 0.0, %v6804
    %6806 = vmatprep.mubr.bf16.mxu0 %v5965
    %6807 = vmatmul.mubr.bf16.gmra.mrb[0].mxu0 %v5957
    %v6808 = vpop.f32.mrb[0].mxu0
    %v6809 = vpop.f32.mrb[0].mxu0
    %v6810 = vpop.f32.mrb[0].mxu0
    %v6811 = vadd.f32 0.0, %v6810
    %v6812 = vpop.f32.mrb[0].mxu0
    %v6813 = vadd.f32 0.0, %v6812
    %6814 = vmatprep.mubr.bf16.mxu0 %v5987
    %6815 = vmatmul.mubr.bf16.gmra.mrb[0].mxu0 %v5984
    %v6816 = vpop.f32.mrb[0].mxu0
    %v6817 = vadd.f32 0.0, %v6816
    %v6818 = vpop.f32.mrb[0].mxu0
    %v6819 = vadd.f32 0.0, %v6818
    %v6820 = vpop.f32.mrb[0].mxu0
    %v6821 = vpop.f32.mrb[0].mxu0
    %6822 = vdwg.mxu0
    %6823 = vmatprep.subr.bf16.mxu0 %v6457
    %6824 = vmatpush1.bf16.msra.mxu0 %v6456
    %6825 = vmatprep.subr.bf16.mxu0 %v6461
    %6826 = vmatpush1.bf16.msra.mxu0 %v6460
    %6827 = vmatprep.subr.bf16.mxu0 %v6465
    %6828 = vmatpush1.bf16.msra.mxu0 %v6464
    %6829 = vmatprep.subr.bf16.mxu0 %v6469
    %6830 = vmatpush1.bf16.msra.mxu0 %v6468
    %6831 = vmatprep.subr.bf16.mxu0 %v6473
    %6832 = vmatpush1.bf16.msra.mxu0 %v6472
    %6833 = vmatprep.subr.bf16.mxu0 %v6477
    %6834 = vmatpush1.bf16.msra.mxu0 %v6476
    %6835 = vmatprep.subr.bf16.mxu0 %v6481
    %6836 = vmatpush1.bf16.msra.mxu0 %v6480
    %6837 = vmatprep.subr.bf16.mxu0 %v6485
    %6838 = vmatpush1.bf16.msra.mxu0 %v6484
    %6839 = vmatprep.subr.bf16.mxu0 %v6489
    %6840 = vmatpush1.bf16.msra.mxu0 %v6488
    %6841 = vmatprep.subr.bf16.mxu0 %v6493
    %6842 = vmatpush1.bf16.msra.mxu0 %v6492
    %6843 = vmatprep.subr.bf16.mxu0 %v6497
    %6844 = vmatpush1.bf16.msra.mxu0 %v6496
    %6845 = vmatprep.subr.bf16.mxu0 %v6501
    %6846 = vmatpush1.bf16.msra.mxu0 %v6500
    %6847 = vmatprep.subr.bf16.mxu0 %v6505
    %6848 = vmatpush1.bf16.msra.mxu0 %v6504
    %6849 = vmatprep.subr.bf16.mxu0 %v6509
    %6850 = vmatpush1.bf16.msra.mxu0 %v6508
    %6851 = vmatprep.subr.bf16.mxu0 %v6513
    %6852 = vmatpush1.bf16.msra.mxu0 %v6512
    %6853 = vmatprep.subr.bf16.mxu0 %v6517
    %6854 = vmatpush1.bf16.msra.mxu0 %v6516
    %6855 = vmatprep.mubr.bf16.mxu0 %v5949
    %6856 = vmatmul.mubr.bf16.gmra.mrb[0].mxu0 %v5937
    %v6857 = vpop.f32.mrb[0].mxu0
    %v6858 = vadd.f32 %v6799, %v6857
    %v6859 = vpop.f32.mrb[0].mxu0
    %v6860 = vadd.f32 %v6801, %v6859
    %v6861 = vpop.f32.mrb[0].mxu0
    %v6862 = vadd.f32 %v6803, %v6861
    %v6863 = vpop.f32.mrb[0].mxu0
    %v6864 = vadd.f32 %v6805, %v6863
    %6865 = vmatprep.mubr.bf16.mxu0 %v5981
    %6866 = vmatmul.mubr.bf16.gmra.mrb[0].mxu0 %v5973
    %v6867 = vpop.f32.mrb[0].mxu0
    %v6868 = vpop.f32.mrb[0].mxu0
    %v6869 = vpop.f32.mrb[0].mxu0
    %v6870 = vadd.f32 %v6811, %v6869
    %v6871 = vpop.f32.mrb[0].mxu0
    %v6872 = vadd.f32 %v6813, %v6871
    %6873 = vmatprep.mubr.bf16.mxu0 %v5993
    %6874 = vmatmul.mubr.bf16.gmra.mrb[0].mxu0 %v5990
    %v6875 = vpop.f32.mrb[0].mxu0
    %v6876 = vadd.f32 %v6817, %v6875
    %v6877 = vpop.f32.mrb[0].mxu0
    %v6878 = vadd.f32 %v6819, %v6877
    %v6879 = vpop.f32.mrb[0].mxu0
    %v6880 = vpop.f32.mrb[0].mxu0
    %6881 = vdwg.mxu0
    %v6882 = vadd.f32 %v5595, %v6740
    %v6883 = vadd.f32 %v5597, %v6742
    %v6884 = vadd.f32 %v5713, %v6858
    %v6885 = vadd.f32 %v5715, %v6860
    %v6886 = vadd.f32 %v5599, %v6744
    %v6887 = vadd.f32 %v5601, %v6746
    %v6888 = vadd.f32 %v5717, %v6862
    %v6889 = vadd.f32 %v5719, %v6864
    %v6890 = vadd.f32 %v5607, %v6752
    %v6891 = vadd.f32 %v5609, %v6754
    %v6892 = vadd.f32 %v5725, %v6870
    %v6893 = vadd.f32 %v5727, %v6872
    %v6894 = vadd.f32 %v5613, %v6758
    %v6895 = vadd.f32 %v5615, %v6760
    %v6896 = vadd.f32 %v5731, %v6876
    %v6897 = vadd.f32 %v5733, %v6878
    %v6898 = vld [vmem:[#allocation11] sm:$0xf]
    %v6900 = vlaneseq
    %v6901 = vshrl.u32 %v6900, 7
    %v6902 = vsub.s32 0, %v6901
    %v6903 = vrot.slane %v6898, %v6902
    %v6904 = vlaneseq
    %v6905 = vshrl.u32 %v6904, 7
    %v6906 = vsub.s32 1, %v6905
    %v6907 = vrot.slane %v6898, %v6906
    %v6908 = vlaneseq
    %v6909 = vshrl.u32 %v6908, 7
    %v6910 = vsub.s32 2, %v6909
    %v6911 = vrot.slane %v6898, %v6910
    %v6912 = vlaneseq
    %v6913 = vshrl.u32 %v6912, 7
    %v6914 = vsub.s32 3, %v6913
    %v6915 = vrot.slane %v6898, %v6914
    %v6920 = vadd.f32 %v6882, %v6903
    %v6921 = vadd.f32 %v6883, %v6907
    %v6922 = vadd.f32 %v6884, %v6911
    %v6923 = vadd.f32 %v6885, %v6915
    %v6924 = vadd.f32 %v6886, %v6903
    %v6925 = vadd.f32 %v6887, %v6907
    %v6926 = vadd.f32 %v6888, %v6911
    %v6927 = vadd.f32 %v6889, %v6915
    %v6928 = vld [vmem:[#allocation3] sm:$0xff]
    %v6929 = vld [vmem:[#allocation3 + $0x8] sm:$0xff]
    %v6930 = vld [vmem:[#allocation3 + $0x10] sm:$0xff]
    %v6931 = vld [vmem:[#allocation3 + $0x18] sm:$0xff]
    %v6932 = vld [vmem:[#allocation3 + $0x20] sm:$0xff]
    %v6933 = vld [vmem:[#allocation3 + $0x28] sm:$0xff]
    %v6934 = vld [vmem:[#allocation3 + $0x30] sm:$0xff]
    %v6935 = vld [vmem:[#allocation3 + $0x38] sm:$0xff]
    %v6936 = vadd.f32 %v6920, %v6928
    %v6937 = vadd.f32 %v6921, %v6929
    %v6938 = vadd.f32 %v6922, %v6930
    %v6939 = vadd.f32 %v6923, %v6931
    %v6940 = vadd.f32 %v6924, %v6932
    %v6941 = vadd.f32 %v6925, %v6933
    %v6942 = vadd.f32 %v6926, %v6934
    %v6943 = vadd.f32 %v6927, %v6935
    %v6944 = vmax.f32 %v6936, 0.0
    %v6945 = vmax.f32 %v6937, 0.0
    %v6946 = vmax.f32 %v6938, 0.0
    %v6947 = vmax.f32 %v6939, 0.0
    %v6948 = vmax.f32 %v6940, 0.0
    %v6949 = vmax.f32 %v6941, 0.0
    %v6950 = vmax.f32 %v6942, 0.0
    %v6951 = vmax.f32 %v6943, 0.0
    %6952 = vst [vmem:[#allocation12] sm:$0xff] %v6944
    %6953 = vst [vmem:[#allocation12 + $0x8] sm:$0xff] %v6945
    %6954 = vst [vmem:[#allocation12 + $0x10] sm:$0xff] %v6946
    %6955 = vst [vmem:[#allocation12 + $0x18] sm:$0xff] %v6947
    %6956 = vst [vmem:[#allocation12 + $0x20] sm:$0xff] %v6948
    %6957 = vst [vmem:[#allocation12 + $0x28] sm:$0xff] %v6949
    %6958 = vst [vmem:[#allocation12 + $0x30] sm:$0xff] %v6950
    %6959 = vst [vmem:[#allocation12 + $0x38] sm:$0xff] %v6951
    %v6960 = vld [vmem:[#allocation11] sm:$0xf]
    %v6962 = vlaneseq
    %v6963 = vshrl.u32 %v6962, 7
    %v6964 = vsub.s32 0, %v6963
    %v6965 = vrot.slane %v6960, %v6964
    %v6966 = vlaneseq
    %v6967 = vshrl.u32 %v6966, 7
    %v6968 = vsub.s32 1, %v6967
    %v6969 = vrot.slane %v6960, %v6968
    %v6970 = vlaneseq
    %v6971 = vshrl.u32 %v6970, 7
    %v6972 = vsub.s32 2, %v6971
    %v6973 = vrot.slane %v6960, %v6972
    %v6974 = vlaneseq
    %v6975 = vshrl.u32 %v6974, 7
    %v6976 = vsub.s32 3, %v6975
    %v6977 = vrot.slane %v6960, %v6976
    %v6982 = vadd.f32 %v6890, %v6965
    %v6983 = vadd.f32 %v6891, %v6969
    %v6984 = vadd.f32 %v6892, %v6973
    %v6985 = vadd.f32 %v6893, %v6977
    %v6986 = vadd.f32 %v6894, %v6965
    %v6987 = vadd.f32 %v6895, %v6969
    %v6988 = vadd.f32 %v6896, %v6973
    %v6989 = vadd.f32 %v6897, %v6977
    %v6990 = vld [vmem:[%s133] sm:$0xff]
    %v6991 = vld [vmem:[%s133 + $0x8] sm:$0xff]
    %v6992 = vld [vmem:[%s133 + $0x10] sm:$0xff]
    %v6993 = vld [vmem:[%s133 + $0x18] sm:$0xff]
    %v6994 = vld [vmem:[%s133 + $0x20] sm:$0xff]
    %v6995 = vld [vmem:[%s133 + $0x28] sm:$0xff]
    %v6996 = vld [vmem:[%s133 + $0x30] sm:$0xff]
    %v6997 = vld [vmem:[%s133 + $0x38] sm:$0xff]
    %v6998 = vadd.f32 %v6982, %v6990
    %v6999 = vadd.f32 %v6983, %v6991
    %v7000 = vadd.f32 %v6984, %v6992
    %v7001 = vadd.f32 %v6985, %v6993
    %v7002 = vadd.f32 %v6986, %v6994
    %v7003 = vadd.f32 %v6987, %v6995
    %v7004 = vadd.f32 %v6988, %v6996
    %v7005 = vadd.f32 %v6989, %v6997
    %v7006 = vmax.f32 %v6998, 0.0
    %v7007 = vmax.f32 %v6999, 0.0
    %v7008 = vmax.f32 %v7000, 0.0
    %v7009 = vmax.f32 %v7001, 0.0
    %v7010 = vmax.f32 %v7002, 0.0
    %v7011 = vmax.f32 %v7003, 0.0
    %v7012 = vmax.f32 %v7004, 0.0
    %v7013 = vmax.f32 %v7005, 0.0
    %s7014 = scalar_lea.vmem [#allocation12], 64
    %7015 = vst [vmem:[%s7014] sm:$0xff] %v7006
    %7016 = vst [vmem:[%s7014 + $0x8] sm:$0xff] %v7007
    %7017 = vst [vmem:[%s7014 + $0x10] sm:$0xff] %v7008
    %7018 = vst [vmem:[%s7014 + $0x18] sm:$0xff] %v7009
    %7019 = vst [vmem:[%s7014 + $0x20] sm:$0xff] %v7010
    %7020 = vst [vmem:[%s7014 + $0x28] sm:$0xff] %v7011
    %7021 = vst [vmem:[%s7014 + $0x30] sm:$0xff] %v7012
    %7022 = vst [vmem:[%s7014 + $0x38] sm:$0xff] %v7013
    // Predicated region
    $region42: #{tpu_custom_call.1} parent=1 // pred_check
      _
    $region43: #{tpu_custom_call.1} parent=1 // pred_check_branch
      %7024 = sbr.rel (0) target = $region45
    $region44: #{tpu_custom_call.1} parent=1 // pred_region
      %s7026 = ssub.s32 2048, 2048
      %7027 = vsyncadd [#allocation5], %s7026
      %s7028 = sshll.u32 [#allocation12], 4
      %s7029 = int_to_ptr.vmem [resolvable:$true] %s7028
      %7034 = dma.vmem_to_hbm [thread:$0]  %s7029, 2048, %s5, [#allocation5], 512, 512, 32
    $region45: #{tpu_custom_call.1} parent=1 // pred_fallthru
      _
    // Predicated region
    $region46: #{tpu_custom_call.1} parent=1 // pred_check
      _
    $region47: #{tpu_custom_call.1} parent=1 // pred_check_branch
      %7036 = sbr.rel (0) target = $region49
    $region48: #{tpu_custom_call.1} parent=1 // pred_region
      %7037 = dma.done [#allocation5], 2048
    $region49: #{tpu_custom_call.1} parent=1 // pred_fallthru
      _
    %7038 = vsyncpa [#allocation4], 1
    %7039 = vsyncpa [#allocation7], 1
    %7040 = vsyncpa [#allocation10], 1
    %7041 = vsyncpa [#allocation5], 1

</llo_original>
